<compile_context>
chip_gen: v6e
topology: v6e:2x2x1
jax: 0.10.0
libtpu: 0.0.40
codegen_flags: <defaults>
</compile_context>

<pallas_src>
import jax
import jax.numpy as jnp
from jax import lax
from jax.experimental import pallas as pl
from jax.experimental.pallas import tpu as pltpu


# ----------------------------- model configuration --------------------------
EMBED_SIZE = 100          # vocab size
EMBED_DIM = 32            # d_model
TRANS_HEAD = 4
TRANS_FWD = 64
TRANS_LAYER = 2
LSTM_SIZE = 32
LSTM_LAYER = 1            # TODO(synk): only a single bidirectional LSTM layer is implemented.
LSTM_BIDIR = True
FC_OUT = 4
B, S = 2, 8               # batch, sequence length of token ids

HEAD_DIM = EMBED_DIM // TRANS_HEAD
BS = B * S                # 16 rows, row order (b, s)
VOCAB_PAD = 128           # pad vocab so the one-hot matmul is lane-dense
H2 = 2 * LSTM_SIZE        # 64: fused [fwd | bwd] hidden width
GATE_LANES = 8 * LSTM_SIZE  # 256: gate lane order [i | f | o | g], each [fwd | bwd]
OUT_ROWS, OUT_LANES = 8, 128   # padded, lane-dense fc output slab

# ---- misc slab ((MISC_ROWS, 128) f32) row offsets ----
_EMB_R0 = 0          # (128, 32)  embedding table (vocab padded to 128 rows)
_WFC_R0 = 128        # (64, 128)  fc1 weight (lanes 0:FC_OUT used)
_BFC_R0 = 192        # (1, 128)   fc1 bias
_G_R0 = 200          # (32, 4)    head segment-sum indicator
_GT_R0 = 232         # (4, 32)    head broadcast indicator
_PF_R0 = 240         # (16, 16)   LSTM fwd step-major row permutation
_PB_R0 = 256         # (16, 16)   LSTM bwd (time-reversed) step-major permutation
MISC_ROWS = 272

# ---- lstm slab ((LSTM_ROWS, 256) f32) row offsets ----
_WIH_R0 = 0          # (64, 256)  block input projection for [x_fwd | x_bwd]
_WHH_R0 = 64         # (64, 256)  block recurrent projection for [h_fwd | h_bwd]
_BL_R0 = 128         # (1, 256)   b_ih + b_hh (both directions)
LSTM_ROWS = 136

# ---- encoder slabs: enc_w (L, 160, 128) matrices, enc_v (L, 8, 128) vectors ----


def _vmem():
    return pl.BlockSpec(memory_space=pltpu.MemorySpace.VMEM)


# ------------------------------ fused kernel --------------------------------
def fused_forward_kernel(ids_ref, encw_ref, encv_ref, lstm_ref, misc_ref, out_ref):
    f32 = jnp.float32
    E = EMBED_DIM

    # constants packed once in pack_params (no per-call iota/compare chains)
    emb = misc_ref[_EMB_R0:_EMB_R0 + VOCAB_PAD, 0:E]            # (128, 32)
    G = misc_ref[_G_R0:_G_R0 + E, 0:TRANS_HEAD]                 # (32, 4)
    Gt = misc_ref[_GT_R0:_GT_R0 + TRANS_HEAD, 0:E]              # (4, 32)
    Pf = misc_ref[_PF_R0:_PF_R0 + BS, 0:BS]                     # (16, 16)
    Pb = misc_ref[_PB_R0:_PB_R0 + BS, 0:BS]                     # (16, 16)

    # ---------------- embedding: gather-free one-hot matmul -----------------
    ids = ids_ref[...]                                          # (16, 1) int32
    vocab_iota = lax.broadcasted_iota(jnp.int32, (BS, VOCAB_PAD), 1)
    onehot = (vocab_iota == ids).astype(f32)                    # (16, 128)
    x = jnp.dot(onehot, emb, preferred_element_type=f32)        # (16, 32)

    scale = 1.0 / (HEAD_DIM ** 0.5)

    def layer_norm(v, w, b):
        mu = jnp.mean(v, axis=-1, keepdims=True)
        var = jnp.mean((v - mu) ** 2, axis=-1, keepdims=True)
        return (v - mu) * lax.rsqrt(var + 1e-5) * w + b

    # ---------------- transformer encoder stack (unrolled) ------------------
    # x rows are ordered (l=b, n=s): the (B,S,E) tensor is consumed as
    # (seq=B, batch=S, E), reproducing batch_first=False behaviour exactly.
    for li in range(TRANS_LAYER):
        wqkv = encw_ref[li, 0:32, :]             # (32, 128) cols [q|k|v|pad]
        wo = encw_ref[li, 32:64, 0:E]            # (32, 32)
        w1 = encw_ref[li, 64:96, 0:TRANS_FWD]    # (32, 64)
        w2 = encw_ref[li, 96:160, 0:E]           # (64, 32)
        bqkv = encv_ref[li, 0:1, :]              # (1, 128)
        bo = encv_ref[li, 1:2, 0:E]
        ln1w = encv_ref[li, 2:3, 0:E]
        ln1b = encv_ref[li, 3:4, 0:E]
        b1 = encv_ref[li, 4:5, 0:TRANS_FWD]
        b2 = encv_ref[li, 5:6, 0:E]
        ln2w = encv_ref[li, 6:7, 0:E]
        ln2b = encv_ref[li, 7:8, 0:E]

        # fused, lane-padded QKV projection: (16,32)@(32,128) -> full vreg
        qkv = jnp.dot(x, wqkv, preferred_element_type=f32) + bqkv     # (16, 128)
        # swap the two L-blocks (rows 0:8 <-> 8:16) with one XLU half-rotation
        qkv_sw = pltpu.roll(qkv, shift=S, axis=0)
        q = qkv[:, 0:E]
        k = qkv[:, E:2 * E]
        v = qkv[:, 2 * E:3 * E]
        k_sw = qkv_sw[:, E:2 * E]
        v_sw = qkv_sw[:, 2 * E:3 * E]

        # merged per-head score segment-sums: ONE (32,32)@(32,4) matmul
        qk2 = jnp.concatenate([q * k, q * k_sw], axis=0)              # (32, 32)
        s2 = jnp.dot(qk2, G, preferred_element_type=f32) * scale      # (32, 4)
        s_a = s2[0:BS]
        s_b = s2[BS:2 * BS]
        # softmax over the 2-wide L axis, explicit pairwise (no cross-lane reduce)
        m = jnp.maximum(s_a, s_b)
        e_a = jnp.exp(s_a - m)
        e_b = jnp.exp(s_b - m)
        inv = pl.reciprocal(e_a + e_b, approx=True)                   # EUP vrcp
        # merged per-head prob broadcast: ONE (32,4)@(4,32) matmul
        p2 = jnp.dot(jnp.concatenate([e_a * inv, e_b * inv], axis=0),
                     Gt, preferred_element_type=f32)                  # (32, 32)
        ctx = p2[0:BS] * v + p2[BS:2 * BS] * v_sw                     # (16, 32)
        attn = jnp.dot(ctx, wo, preferred_element_type=f32) + bo
        # post-norm (norm_first=False); dropout = identity at inference
        x = layer_norm(x + attn, ln1w, ln1b)
        h1 = jnp.maximum(
            jnp.dot(x, w1, preferred_element_type=f32) + b1, 0.0)
        h2 = jnp.dot(h1, w2, preferred_element_type=f32) + b2
        x = layer_norm(x + h2, ln2w, ln2b)

    # -------- fused bidirectional LSTM: ONE 8-step recurrence ----------------
    wih = lstm_ref[_WIH_R0:_WIH_R0 + 2 * E, :]       # (64, 256)
    whh = lstm_ref[_WHH_R0:_WHH_R0 + H2, :]          # (64, 256) block-diagonal
    bl = lstm_ref[_BL_R0:_BL_R0 + 1, :]              # (1, 256)

    # step-major (t-major, b-minor) row reorder, time-reversed for bwd half,
    # done ONCE via constant permutation matmuls (off the serial recurrence).
    x2 = jnp.concatenate(
        [jnp.dot(Pf, x, preferred_element_type=f32),
         jnp.dot(Pb, x, preferred_element_type=f32)], axis=1)         # (16, 64)
    # single fused input projection for both directions, all timesteps
    gi = jnp.dot(x2, wih, preferred_element_type=f32) + bl            # (16, 256)

    h = jnp.zeros((B, H2), jnp.float32)              # lanes [h_fwd | h_bwd]
    c = jnp.zeros((B, H2), jnp.float32)
    for t in range(S):                               # static, fully unrolled
        g = gi[2 * t:2 * t + 2, :] + jnp.dot(h, whh, preferred_element_type=f32)
        sig = jax.nn.sigmoid(g[:, 0:3 * H2])         # one 192-lane push: i|f|o
        i_g = sig[:, 0:H2]
        f_g = sig[:, H2:2 * H2]
        o_g = sig[:, 2 * H2:3 * H2]
        g_g = jnp.tanh(g[:, 3 * H2:4 * H2])
        c = f_g * c + i_g * g_g
        h = o_g * jnp.tanh(c)

    # ---------------- fc1 epilogue (dropout = identity) ---------------------
    # h already equals torch.cat((hidden[-2], hidden[-1]), dim=1): lanes [fwd|bwd].
    wfc = misc_ref[_WFC_R0:_WFC_R0 + H2, :]          # (64, 128) zero-padded
    bfc = misc_ref[_BFC_R0:_BFC_R0 + 1, :]           # (1, 128)
    hpad = jnp.concatenate(
        [h, jnp.zeros((OUT_ROWS - B, H2), jnp.float32)], axis=0)      # (8, 64)
    out_ref[...] = jnp.dot(hpad, wfc, preferred_element_type=f32) + bfc


# ------------------------- parameter initialization -------------------------
def init_params(key):
    keys = iter(jax.random.split(key, 128))

    def nrm(shape, scale=0.05):
        return scale * jax.random.normal(next(keys), shape, jnp.float32)

    params = {'embed': nrm((EMBED_SIZE, EMBED_DIM), 0.1)}

    layers = []
    for _ in range(TRANS_LAYER):
        layers.append(dict(
            in_proj_w=nrm((3 * EMBED_DIM, EMBED_DIM)),
            in_proj_b=nrm((3 * EMBED_DIM,)),
            out_w=nrm((EMBED_DIM, EMBED_DIM)),
            out_b=nrm((EMBED_DIM,)),
            ln1_w=jnp.ones((EMBED_DIM,), jnp.float32),
            ln1_b=jnp.zeros((EMBED_DIM,), jnp.float32),
            ff1_w=nrm((TRANS_FWD, EMBED_DIM)),
            ff1_b=nrm((TRANS_FWD,)),
            ff2_w=nrm((EMBED_DIM, TRANS_FWD)),
            ff2_b=nrm((EMBED_DIM,)),
            ln2_w=jnp.ones((EMBED_DIM,), jnp.float32),
            ln2_b=jnp.zeros((EMBED_DIM,), jnp.float32),
        ))
    params['layers'] = layers

    H = LSTM_SIZE
    lstm = {}
    for d in ('fwd', 'bwd'):
        lstm[d] = dict(
            w_ih=nrm((4 * H, EMBED_DIM)),
            w_hh=nrm((4 * H, H)),
            b_ih=nrm((4 * H,)),
            b_hh=nrm((4 * H,)),
        )
    params['lstm'] = lstm
    params['fc_w'] = nrm((FC_OUT, 2 * H if LSTM_BIDIR else H))
    params['fc_b'] = nrm((FC_OUT,))
    return params


# ----------------- one-time weight packing (OUTSIDE the jit) ----------------
def pack_params(params):
    E, H, L, F = EMBED_DIM, LSTM_SIZE, TRANS_LAYER, TRANS_FWD
    f32 = jnp.float32

    # --- encoder matrices slab (L, 160, 128) and vectors slab (L, 8, 128) ---
    enc_w = jnp.zeros((L, 160, 128), f32)
    enc_v = jnp.zeros((L, 8, 128), f32)
    for li, lyr in enumerate(params['layers']):
        enc_w = enc_w.at[li, 0:32, 0:3 * E].set(lyr['in_proj_w'].T)   # [q|k|v]
        enc_w = enc_w.at[li, 32:64, 0:E].set(lyr['out_w'].T)
        enc_w = enc_w.at[li, 64:96, 0:F].set(lyr['ff1_w'].T)
        enc_w = enc_w.at[li, 96:160, 0:E].set(lyr['ff2_w'].T)
        enc_v = enc_v.at[li, 0, 0:3 * E].set(lyr['in_proj_b'])
        enc_v = enc_v.at[li, 1, 0:E].set(lyr['out_b'])
        enc_v = enc_v.at[li, 2, 0:E].set(lyr['ln1_w'])
        enc_v = enc_v.at[li, 3, 0:E].set(lyr['ln1_b'])
        enc_v = enc_v.at[li, 4, 0:F].set(lyr['ff1_b'])
        enc_v = enc_v.at[li, 5, 0:E].set(lyr['ff2_b'])
        enc_v = enc_v.at[li, 6, 0:E].set(lyr['ln2_w'])
        enc_v = enc_v.at[li, 7, 0:E].set(lyr['ln2_b'])

    # --- fused bidirectional LSTM slab (136, 256) ---------------------------
    # gate lane order: [i | f | o | g], each 64-wide group is [fwd(0:32)|bwd(32:64)]
    # (PyTorch packed-row order is [i, f, g, o] -> source gate indices below)
    lstm_w = jnp.zeros((LSTM_ROWS, GATE_LANES), f32)
    for d, name in enumerate(('fwd', 'bwd')):
        p = params['lstm'][name]
        for gpos, gsrc in enumerate((0, 1, 3, 2)):          # -> [i, f, o, g]
            rs, re = gsrc * H, (gsrc + 1) * H
            c0 = gpos * 2 * H + d * H
            lstm_w = lstm_w.at[_WIH_R0 + d * E:_WIH_R0 + (d + 1) * E,
                               c0:c0 + H].set(p['w_ih'][rs:re, :].T)
            lstm_w = lstm_w.at[_WHH_R0 + d * H:_WHH_R0 + (d + 1) * H,
                               c0:c0 + H].set(p['w_hh'][rs:re, :].T)
            lstm_w = lstm_w.at[_BL_R0, c0:c0 + H].set(
                p['b_ih'][rs:re] + p['b_hh'][rs:re])

    # --- misc slab (272, 128): embedding, fc, constant indicator matrices ---
    misc = jnp.zeros((MISC_ROWS, 128), f32)
    misc = misc.at[_EMB_R0:_EMB_R0 + EMBED_SIZE, 0:E].set(params['embed'])
    misc = misc.at[_WFC_R0:_WFC_R0 + 2 * H, 0:FC_OUT].set(params['fc_w'].T)
    misc = misc.at[_BFC_R0, 0:FC_OUT].set(params['fc_b'])
    G = (jnp.arange(E)[:, None] // HEAD_DIM ==
         jnp.arange(TRANS_HEAD)[None, :]).astype(f32)                  # (32, 4)
    misc = misc.at[_G_R0:_G_R0 + E, 0:TRANS_HEAD].set(G)
    misc = misc.at[_GT_R0:_GT_R0 + TRANS_HEAD, 0:E].set(G.T)
    rows = jnp.arange(BS)
    t, b = rows // B, rows % B
    Pf = jnp.zeros((BS, BS), f32).at[rows, b * S + t].set(1.0)
    Pb = jnp.zeros((BS, BS), f32).at[rows, b * S + (S - 1 - t)].set(1.0)
    misc = misc.at[_PF_R0:_PF_R0 + BS, 0:BS].set(Pf)
    misc = misc.at[_PB_R0:_PB_R0 + BS, 0:BS].set(Pb)

    return enc_w, enc_v, lstm_w, misc


# --------------------------------- forward ----------------------------------
@jax.jit
def transformer_forward(token_ids, packed):
    ids2 = token_ids.reshape(BS, 1).astype(jnp.int32)        # row order (b, s)
    out_pad = pl.pallas_call(
        fused_forward_kernel,
        out_shape=jax.ShapeDtypeStruct((OUT_ROWS, OUT_LANES), jnp.float32),
        in_specs=[_vmem()] * (1 + len(packed)),
        out_specs=_vmem(),
    )(ids2, *packed)
    return out_pad[:B, :FC_OUT]


if __name__ == "__main__":
    key = jax.random.PRNGKey(0)
    pkey, xkey = jax.random.split(key)
    params = init_params(pkey)
    packed = pack_params(params)       # one-time kernel-friendly weight re-layout
    token_ids = jax.random.randint(xkey, (B, S), 0, EMBED_SIZE, dtype=jnp.int32)
    out = transformer_forward(token_ids, packed)
    jax.block_until_ready(out)
    assert out.shape == (B, FC_OUT) and out.dtype == jnp.float32
    print("KERNEL_OK")
</pallas_src>

<mosaic_0001>
module attributes {stable_mosaic.version = 11 : i64} {
  func.func @fused_forward_kernel(%arg0: memref<16x1xi32, #tpu.memory_space<vmem>>, %arg1: memref<2x160x128xf32, #tpu.memory_space<vmem>>, %arg2: memref<2x8x128xf32, #tpu.memory_space<vmem>>, %arg3: memref<136x256xf32, #tpu.memory_space<vmem>>, %arg4: memref<272x128xf32, #tpu.memory_space<vmem>>, %arg5: memref<8x128xf32, #tpu.memory_space<vmem>>) attributes {dimension_semantics = [], scalar_prefetch = 0 : i64, scratch_operands = 0 : i64, tpu.core_type = #tpu.core_type<tc>} {
    %c0 = arith.constant 0 : index
    %c0_0 = arith.constant 0 : index
    %0 = vector.load %arg4[%c0, %c0_0] : memref<272x128xf32, #tpu.memory_space<vmem>>, vector<128x32xf32>
    %c200 = arith.constant 200 : index
    %c0_1 = arith.constant 0 : index
    %1 = vector.load %arg4[%c200, %c0_1] : memref<272x128xf32, #tpu.memory_space<vmem>>, vector<32x4xf32>
    %c232 = arith.constant 232 : index
    %c0_2 = arith.constant 0 : index
    %2 = vector.load %arg4[%c232, %c0_2] : memref<272x128xf32, #tpu.memory_space<vmem>>, vector<4x32xf32>
    %c240 = arith.constant 240 : index
    %c0_3 = arith.constant 0 : index
    %3 = vector.load %arg4[%c240, %c0_3] : memref<272x128xf32, #tpu.memory_space<vmem>>, vector<16x16xf32>
    %c256 = arith.constant 256 : index
    %c0_4 = arith.constant 0 : index
    %4 = vector.load %arg4[%c256, %c0_4] : memref<272x128xf32, #tpu.memory_space<vmem>>, vector<16x16xf32>
    %c0_5 = arith.constant 0 : index
    %c0_6 = arith.constant 0 : index
    %5 = vector.load %arg0[%c0_5, %c0_6] : memref<16x1xi32, #tpu.memory_space<vmem>>, vector<16x1xi32>
    %6 = tpu.iota {dimensions = array<i32: 1>} : vector<16x128xi32>
    %7 = vector.broadcast %5 : vector<16x1xi32> to vector<16x128xi32>
    %8 = arith.cmpi eq, %6, %7 : vector<16x128xi32>
    %9 = arith.extui %8 : vector<16x128xi1> to vector<16x128xi32>
    %10 = arith.sitofp %9 : vector<16x128xi32> to vector<16x128xf32>
    %cst = arith.constant dense<0.000000e+00> : vector<16x32xf32>
    %11 = tpu.matmul %10, %0, %cst {dimension_numbers = #tpu.dot_dimension_numbers<[1], [0], [0], [1], [0, 0, 1, 1], [], []>} : vector<16x128xf32>, vector<128x32xf32>, vector<16x32xf32> -> vector<16x32xf32>
    %c0_7 = arith.constant 0 : index
    %c0_8 = arith.constant 0 : index
    %c0_9 = arith.constant 0 : index
    %12 = vector.load %arg1[%c0_7, %c0_8, %c0_9] : memref<2x160x128xf32, #tpu.memory_space<vmem>>, vector<1x32x128xf32>
    %13 = vector.shape_cast %12 : vector<1x32x128xf32> to vector<32x128xf32>
    %c0_10 = arith.constant 0 : index
    %c32 = arith.constant 32 : index
    %c0_11 = arith.constant 0 : index
    %14 = vector.load %arg1[%c0_10, %c32, %c0_11] : memref<2x160x128xf32, #tpu.memory_space<vmem>>, vector<1x32x32xf32>
    %15 = vector.shape_cast %14 : vector<1x32x32xf32> to vector<32x32xf32>
    %c0_12 = arith.constant 0 : index
    %c64 = arith.constant 64 : index
    %c0_13 = arith.constant 0 : index
    %16 = vector.load %arg1[%c0_12, %c64, %c0_13] : memref<2x160x128xf32, #tpu.memory_space<vmem>>, vector<1x32x64xf32>
    %17 = vector.shape_cast %16 : vector<1x32x64xf32> to vector<32x64xf32>
    %c0_14 = arith.constant 0 : index
    %c96 = arith.constant 96 : index
    %c0_15 = arith.constant 0 : index
    %18 = vector.load %arg1[%c0_14, %c96, %c0_15] : memref<2x160x128xf32, #tpu.memory_space<vmem>>, vector<1x64x32xf32>
    %19 = vector.shape_cast %18 : vector<1x64x32xf32> to vector<64x32xf32>
    %c0_16 = arith.constant 0 : index
    %c0_17 = arith.constant 0 : index
    %c0_18 = arith.constant 0 : index
    %20 = vector.load %arg2[%c0_16, %c0_17, %c0_18] : memref<2x8x128xf32, #tpu.memory_space<vmem>>, vector<1x1x128xf32>
    %21 = vector.shape_cast %20 : vector<1x1x128xf32> to vector<1x128xf32>
    %c0_19 = arith.constant 0 : index
    %c1 = arith.constant 1 : index
    %c0_20 = arith.constant 0 : index
    %22 = vector.load %arg2[%c0_19, %c1, %c0_20] : memref<2x8x128xf32, #tpu.memory_space<vmem>>, vector<1x1x32xf32>
    %23 = vector.shape_cast %22 : vector<1x1x32xf32> to vector<1x32xf32>
    %c0_21 = arith.constant 0 : index
    %c2 = arith.constant 2 : index
    %c0_22 = arith.constant 0 : index
    %24 = vector.load %arg2[%c0_21, %c2, %c0_22] : memref<2x8x128xf32, #tpu.memory_space<vmem>>, vector<1x1x32xf32>
    %25 = vector.shape_cast %24 : vector<1x1x32xf32> to vector<1x32xf32>
    %c0_23 = arith.constant 0 : index
    %c3 = arith.constant 3 : index
    %c0_24 = arith.constant 0 : index
    %26 = vector.load %arg2[%c0_23, %c3, %c0_24] : memref<2x8x128xf32, #tpu.memory_space<vmem>>, vector<1x1x32xf32>
    %27 = vector.shape_cast %26 : vector<1x1x32xf32> to vector<1x32xf32>
    %c0_25 = arith.constant 0 : index
    %c4 = arith.constant 4 : index
    %c0_26 = arith.constant 0 : index
    %28 = vector.load %arg2[%c0_25, %c4, %c0_26] : memref<2x8x128xf32, #tpu.memory_space<vmem>>, vector<1x1x64xf32>
    %29 = vector.shape_cast %28 : vector<1x1x64xf32> to vector<1x64xf32>
    %c0_27 = arith.constant 0 : index
    %c5 = arith.constant 5 : index
    %c0_28 = arith.constant 0 : index
    %30 = vector.load %arg2[%c0_27, %c5, %c0_28] : memref<2x8x128xf32, #tpu.memory_space<vmem>>, vector<1x1x32xf32>
    %31 = vector.shape_cast %30 : vector<1x1x32xf32> to vector<1x32xf32>
    %c0_29 = arith.constant 0 : index
    %c6 = arith.constant 6 : index
    %c0_30 = arith.constant 0 : index
    %32 = vector.load %arg2[%c0_29, %c6, %c0_30] : memref<2x8x128xf32, #tpu.memory_space<vmem>>, vector<1x1x32xf32>
    %33 = vector.shape_cast %32 : vector<1x1x32xf32> to vector<1x32xf32>
    %c0_31 = arith.constant 0 : index
    %c7 = arith.constant 7 : index
    %c0_32 = arith.constant 0 : index
    %34 = vector.load %arg2[%c0_31, %c7, %c0_32] : memref<2x8x128xf32, #tpu.memory_space<vmem>>, vector<1x1x32xf32>
    %35 = vector.shape_cast %34 : vector<1x1x32xf32> to vector<1x32xf32>
    %cst_33 = arith.constant dense<0.000000e+00> : vector<16x128xf32>
    %36 = tpu.matmul %11, %13, %cst_33 {dimension_numbers = #tpu.dot_dimension_numbers<[1], [0], [0], [1], [0, 0, 1, 1], [], []>} : vector<16x32xf32>, vector<32x128xf32>, vector<16x128xf32> -> vector<16x128xf32>
    %37 = vector.broadcast %21 : vector<1x128xf32> to vector<16x128xf32>
    %38 = arith.addf %36, %37 : vector<16x128xf32>
    %c8_i32 = arith.constant 8 : i32
    %39 = tpu.dynamic_rotate %38 by %c8_i32 dim 0 : vector<16x128xf32>, i32 -> vector<16x128xf32>
    %40 = vector.extract_strided_slice %38 {offsets = [0, 0], sizes = [16, 32], strides = [1, 1]} : vector<16x128xf32> to vector<16x32xf32>
    %41 = vector.extract_strided_slice %38 {offsets = [0, 32], sizes = [16, 32], strides = [1, 1]} : vector<16x128xf32> to vector<16x32xf32>
    %42 = vector.extract_strided_slice %38 {offsets = [0, 64], sizes = [16, 32], strides = [1, 1]} : vector<16x128xf32> to vector<16x32xf32>
    %43 = vector.extract_strided_slice %39 {offsets = [0, 32], sizes = [16, 32], strides = [1, 1]} : vector<16x128xf32> to vector<16x32xf32>
    %44 = vector.extract_strided_slice %39 {offsets = [0, 64], sizes = [16, 32], strides = [1, 1]} : vector<16x128xf32> to vector<16x32xf32>
    %45 = arith.mulf %40, %41 : vector<16x32xf32>
    %46 = arith.mulf %40, %43 : vector<16x32xf32>
    %47 = tpu.concatenate %45, %46 in 0 : vector<16x32xf32>, vector<16x32xf32> -> vector<32x32xf32>
    %cst_34 = arith.constant dense<0.000000e+00> : vector<32x4xf32>
    %48 = tpu.matmul %47, %1, %cst_34 {dimension_numbers = #tpu.dot_dimension_numbers<[1], [0], [0], [1], [0, 0, 1, 1], [], []>} : vector<32x32xf32>, vector<32x4xf32>, vector<32x4xf32> -> vector<32x4xf32>
    %cst_35 = arith.constant 0.353553385 : f32
    %49 = vector.broadcast %cst_35 : f32 to vector<32x4xf32>
    %50 = arith.mulf %48, %49 : vector<32x4xf32>
    %51 = vector.extract_strided_slice %50 {offsets = [0, 0], sizes = [16, 4], strides = [1, 1]} : vector<32x4xf32> to vector<16x4xf32>
    %52 = vector.extract_strided_slice %50 {offsets = [16, 0], sizes = [16, 4], strides = [1, 1]} : vector<32x4xf32> to vector<16x4xf32>
    %53 = arith.maximumf %51, %52 : vector<16x4xf32>
    %54 = arith.subf %51, %53 : vector<16x4xf32>
    %55 = math.exp %54 : vector<16x4xf32>
    %56 = arith.subf %52, %53 : vector<16x4xf32>
    %57 = math.exp %56 : vector<16x4xf32>
    %58 = arith.addf %55, %57 : vector<16x4xf32>
    %59 = tpu.reciprocal %58 {approx = true} : vector<16x4xf32> -> vector<16x4xf32>
    %60 = arith.mulf %55, %59 : vector<16x4xf32>
    %61 = arith.mulf %57, %59 : vector<16x4xf32>
    %62 = tpu.concatenate %60, %61 in 0 : vector<16x4xf32>, vector<16x4xf32> -> vector<32x4xf32>
    %cst_36 = arith.constant dense<0.000000e+00> : vector<32x32xf32>
    %63 = tpu.matmul %62, %2, %cst_36 {dimension_numbers = #tpu.dot_dimension_numbers<[1], [0], [0], [1], [0, 0, 1, 1], [], []>} : vector<32x4xf32>, vector<4x32xf32>, vector<32x32xf32> -> vector<32x32xf32>
    %64 = vector.extract_strided_slice %63 {offsets = [0, 0], sizes = [16, 32], strides = [1, 1]} : vector<32x32xf32> to vector<16x32xf32>
    %65 = arith.mulf %64, %42 : vector<16x32xf32>
    %66 = vector.extract_strided_slice %63 {offsets = [16, 0], sizes = [16, 32], strides = [1, 1]} : vector<32x32xf32> to vector<16x32xf32>
    %67 = arith.mulf %66, %44 : vector<16x32xf32>
    %68 = arith.addf %65, %67 : vector<16x32xf32>
    %cst_37 = arith.constant dense<0.000000e+00> : vector<16x32xf32>
    %69 = tpu.matmul %68, %15, %cst_37 {dimension_numbers = #tpu.dot_dimension_numbers<[1], [0], [0], [1], [0, 0, 1, 1], [], []>} : vector<16x32xf32>, vector<32x32xf32>, vector<16x32xf32> -> vector<16x32xf32>
    %70 = vector.broadcast %23 : vector<1x32xf32> to vector<16x32xf32>
    %71 = arith.addf %69, %70 : vector<16x32xf32>
    %72 = arith.addf %11, %71 : vector<16x32xf32>
    %cst_38 = arith.constant dense<0.000000e+00> : vector<16xf32>
    %73 = vector.multi_reduction <add>, %72, %cst_38 [1] : vector<16x32xf32> to vector<16xf32>
    %74 = vector.shape_cast %73 : vector<16xf32> to vector<16x1xf32>
    %cst_39 = arith.constant 3.200000e+01 : f32
    %75 = vector.broadcast %cst_39 : f32 to vector<16x1xf32>
    %76 = arith.divf %74, %75 : vector<16x1xf32>
    %77 = vector.broadcast %76 : vector<16x1xf32> to vector<16x32xf32>
    %78 = arith.subf %72, %77 : vector<16x32xf32>
    %79 = arith.mulf %78, %78 : vector<16x32xf32>
    %cst_40 = arith.constant dense<0.000000e+00> : vector<16xf32>
    %80 = vector.multi_reduction <add>, %79, %cst_40 [1] : vector<16x32xf32> to vector<16xf32>
    %81 = vector.shape_cast %80 : vector<16xf32> to vector<16x1xf32>
    %cst_41 = arith.constant 3.200000e+01 : f32
    %82 = vector.broadcast %cst_41 : f32 to vector<16x1xf32>
    %83 = arith.divf %81, %82 : vector<16x1xf32>
    %84 = vector.broadcast %76 : vector<16x1xf32> to vector<16x32xf32>
    %85 = arith.subf %72, %84 : vector<16x32xf32>
    %cst_42 = arith.constant 9.99999974E-6 : f32
    %86 = vector.broadcast %cst_42 : f32 to vector<16x1xf32>
    %87 = arith.addf %83, %86 : vector<16x1xf32>
    %88 = math.rsqrt %87 : vector<16x1xf32>
    %89 = vector.broadcast %88 : vector<16x1xf32> to vector<16x32xf32>
    %90 = arith.mulf %85, %89 : vector<16x32xf32>
    %91 = vector.broadcast %25 : vector<1x32xf32> to vector<16x32xf32>
    %92 = arith.mulf %90, %91 : vector<16x32xf32>
    %93 = vector.broadcast %27 : vector<1x32xf32> to vector<16x32xf32>
    %94 = arith.addf %92, %93 : vector<16x32xf32>
    %cst_43 = arith.constant dense<0.000000e+00> : vector<16x64xf32>
    %95 = tpu.matmul %94, %17, %cst_43 {dimension_numbers = #tpu.dot_dimension_numbers<[1], [0], [0], [1], [0, 0, 1, 1], [], []>} : vector<16x32xf32>, vector<32x64xf32>, vector<16x64xf32> -> vector<16x64xf32>
    %96 = vector.broadcast %29 : vector<1x64xf32> to vector<16x64xf32>
    %97 = arith.addf %95, %96 : vector<16x64xf32>
    %cst_44 = arith.constant 0.000000e+00 : f32
    %98 = vector.broadcast %cst_44 : f32 to vector<16x64xf32>
    %99 = arith.maximumf %97, %98 : vector<16x64xf32>
    %cst_45 = arith.constant dense<0.000000e+00> : vector<16x32xf32>
    %100 = tpu.matmul %99, %19, %cst_45 {dimension_numbers = #tpu.dot_dimension_numbers<[1], [0], [0], [1], [0, 0, 1, 1], [], []>} : vector<16x64xf32>, vector<64x32xf32>, vector<16x32xf32> -> vector<16x32xf32>
    %101 = vector.broadcast %31 : vector<1x32xf32> to vector<16x32xf32>
    %102 = arith.addf %100, %101 : vector<16x32xf32>
    %103 = arith.addf %94, %102 : vector<16x32xf32>
    %cst_46 = arith.constant dense<0.000000e+00> : vector<16xf32>
    %104 = vector.multi_reduction <add>, %103, %cst_46 [1] : vector<16x32xf32> to vector<16xf32>
    %105 = vector.shape_cast %104 : vector<16xf32> to vector<16x1xf32>
    %cst_47 = arith.constant 3.200000e+01 : f32
    %106 = vector.broadcast %cst_47 : f32 to vector<16x1xf32>
    %107 = arith.divf %105, %106 : vector<16x1xf32>
    %108 = vector.broadcast %107 : vector<16x1xf32> to vector<16x32xf32>
    %109 = arith.subf %103, %108 : vector<16x32xf32>
    %110 = arith.mulf %109, %109 : vector<16x32xf32>
    %cst_48 = arith.constant dense<0.000000e+00> : vector<16xf32>
    %111 = vector.multi_reduction <add>, %110, %cst_48 [1] : vector<16x32xf32> to vector<16xf32>
    %112 = vector.shape_cast %111 : vector<16xf32> to vector<16x1xf32>
    %cst_49 = arith.constant 3.200000e+01 : f32
    %113 = vector.broadcast %cst_49 : f32 to vector<16x1xf32>
    %114 = arith.divf %112, %113 : vector<16x1xf32>
    %115 = vector.broadcast %107 : vector<16x1xf32> to vector<16x32xf32>
    %116 = arith.subf %103, %115 : vector<16x32xf32>
    %cst_50 = arith.constant 9.99999974E-6 : f32
    %117 = vector.broadcast %cst_50 : f32 to vector<16x1xf32>
    %118 = arith.addf %114, %117 : vector<16x1xf32>
    %119 = math.rsqrt %118 : vector<16x1xf32>
    %120 = vector.broadcast %119 : vector<16x1xf32> to vector<16x32xf32>
    %121 = arith.mulf %116, %120 : vector<16x32xf32>
    %122 = vector.broadcast %33 : vector<1x32xf32> to vector<16x32xf32>
    %123 = arith.mulf %121, %122 : vector<16x32xf32>
    %124 = vector.broadcast %35 : vector<1x32xf32> to vector<16x32xf32>
    %125 = arith.addf %123, %124 : vector<16x32xf32>
    %c1_51 = arith.constant 1 : index
    %c0_52 = arith.constant 0 : index
    %c0_53 = arith.constant 0 : index
    %126 = vector.load %arg1[%c1_51, %c0_52, %c0_53] : memref<2x160x128xf32, #tpu.memory_space<vmem>>, vector<1x32x128xf32>
    %127 = vector.shape_cast %126 : vector<1x32x128xf32> to vector<32x128xf32>
    %c1_54 = arith.constant 1 : index
    %c32_55 = arith.constant 32 : index
    %c0_56 = arith.constant 0 : index
    %128 = vector.load %arg1[%c1_54, %c32_55, %c0_56] : memref<2x160x128xf32, #tpu.memory_space<vmem>>, vector<1x32x32xf32>
    %129 = vector.shape_cast %128 : vector<1x32x32xf32> to vector<32x32xf32>
    %c1_57 = arith.constant 1 : index
    %c64_58 = arith.constant 64 : index
    %c0_59 = arith.constant 0 : index
    %130 = vector.load %arg1[%c1_57, %c64_58, %c0_59] : memref<2x160x128xf32, #tpu.memory_space<vmem>>, vector<1x32x64xf32>
    %131 = vector.shape_cast %130 : vector<1x32x64xf32> to vector<32x64xf32>
    %c1_60 = arith.constant 1 : index
    %c96_61 = arith.constant 96 : index
    %c0_62 = arith.constant 0 : index
    %132 = vector.load %arg1[%c1_60, %c96_61, %c0_62] : memref<2x160x128xf32, #tpu.memory_space<vmem>>, vector<1x64x32xf32>
    %133 = vector.shape_cast %132 : vector<1x64x32xf32> to vector<64x32xf32>
    %c1_63 = arith.constant 1 : index
    %c0_64 = arith.constant 0 : index
    %c0_65 = arith.constant 0 : index
    %134 = vector.load %arg2[%c1_63, %c0_64, %c0_65] : memref<2x8x128xf32, #tpu.memory_space<vmem>>, vector<1x1x128xf32>
    %135 = vector.shape_cast %134 : vector<1x1x128xf32> to vector<1x128xf32>
    %c1_66 = arith.constant 1 : index
    %c1_67 = arith.constant 1 : index
    %c0_68 = arith.constant 0 : index
    %136 = vector.load %arg2[%c1_66, %c1_67, %c0_68] : memref<2x8x128xf32, #tpu.memory_space<vmem>>, vector<1x1x32xf32>
    %137 = vector.shape_cast %136 : vector<1x1x32xf32> to vector<1x32xf32>
    %c1_69 = arith.constant 1 : index
    %c2_70 = arith.constant 2 : index
    %c0_71 = arith.constant 0 : index
    %138 = vector.load %arg2[%c1_69, %c2_70, %c0_71] : memref<2x8x128xf32, #tpu.memory_space<vmem>>, vector<1x1x32xf32>
    %139 = vector.shape_cast %138 : vector<1x1x32xf32> to vector<1x32xf32>
    %c1_72 = arith.constant 1 : index
    %c3_73 = arith.constant 3 : index
    %c0_74 = arith.constant 0 : index
    %140 = vector.load %arg2[%c1_72, %c3_73, %c0_74] : memref<2x8x128xf32, #tpu.memory_space<vmem>>, vector<1x1x32xf32>
    %141 = vector.shape_cast %140 : vector<1x1x32xf32> to vector<1x32xf32>
    %c1_75 = arith.constant 1 : index
    %c4_76 = arith.constant 4 : index
    %c0_77 = arith.constant 0 : index
    %142 = vector.load %arg2[%c1_75, %c4_76, %c0_77] : memref<2x8x128xf32, #tpu.memory_space<vmem>>, vector<1x1x64xf32>
    %143 = vector.shape_cast %142 : vector<1x1x64xf32> to vector<1x64xf32>
    %c1_78 = arith.constant 1 : index
    %c5_79 = arith.constant 5 : index
    %c0_80 = arith.constant 0 : index
    %144 = vector.load %arg2[%c1_78, %c5_79, %c0_80] : memref<2x8x128xf32, #tpu.memory_space<vmem>>, vector<1x1x32xf32>
    %145 = vector.shape_cast %144 : vector<1x1x32xf32> to vector<1x32xf32>
    %c1_81 = arith.constant 1 : index
    %c6_82 = arith.constant 6 : index
    %c0_83 = arith.constant 0 : index
    %146 = vector.load %arg2[%c1_81, %c6_82, %c0_83] : memref<2x8x128xf32, #tpu.memory_space<vmem>>, vector<1x1x32xf32>
    %147 = vector.shape_cast %146 : vector<1x1x32xf32> to vector<1x32xf32>
    %c1_84 = arith.constant 1 : index
    %c7_85 = arith.constant 7 : index
    %c0_86 = arith.constant 0 : index
    %148 = vector.load %arg2[%c1_84, %c7_85, %c0_86] : memref<2x8x128xf32, #tpu.memory_space<vmem>>, vector<1x1x32xf32>
    %149 = vector.shape_cast %148 : vector<1x1x32xf32> to vector<1x32xf32>
    %cst_87 = arith.constant dense<0.000000e+00> : vector<16x128xf32>
    %150 = tpu.matmul %125, %127, %cst_87 {dimension_numbers = #tpu.dot_dimension_numbers<[1], [0], [0], [1], [0, 0, 1, 1], [], []>} : vector<16x32xf32>, vector<32x128xf32>, vector<16x128xf32> -> vector<16x128xf32>
    %151 = vector.broadcast %135 : vector<1x128xf32> to vector<16x128xf32>
    %152 = arith.addf %150, %151 : vector<16x128xf32>
    %c8_i32_88 = arith.constant 8 : i32
    %153 = tpu.dynamic_rotate %152 by %c8_i32_88 dim 0 : vector<16x128xf32>, i32 -> vector<16x128xf32>
    %154 = vector.extract_strided_slice %152 {offsets = [0, 0], sizes = [16, 32], strides = [1, 1]} : vector<16x128xf32> to vector<16x32xf32>
    %155 = vector.extract_strided_slice %152 {offsets = [0, 32], sizes = [16, 32], strides = [1, 1]} : vector<16x128xf32> to vector<16x32xf32>
    %156 = vector.extract_strided_slice %152 {offsets = [0, 64], sizes = [16, 32], strides = [1, 1]} : vector<16x128xf32> to vector<16x32xf32>
    %157 = vector.extract_strided_slice %153 {offsets = [0, 32], sizes = [16, 32], strides = [1, 1]} : vector<16x128xf32> to vector<16x32xf32>
    %158 = vector.extract_strided_slice %153 {offsets = [0, 64], sizes = [16, 32], strides = [1, 1]} : vector<16x128xf32> to vector<16x32xf32>
    %159 = arith.mulf %154, %155 : vector<16x32xf32>
    %160 = arith.mulf %154, %157 : vector<16x32xf32>
    %161 = tpu.concatenate %159, %160 in 0 : vector<16x32xf32>, vector<16x32xf32> -> vector<32x32xf32>
    %cst_89 = arith.constant dense<0.000000e+00> : vector<32x4xf32>
    %162 = tpu.matmul %161, %1, %cst_89 {dimension_numbers = #tpu.dot_dimension_numbers<[1], [0], [0], [1], [0, 0, 1, 1], [], []>} : vector<32x32xf32>, vector<32x4xf32>, vector<32x4xf32> -> vector<32x4xf32>
    %cst_90 = arith.constant 0.353553385 : f32
    %163 = vector.broadcast %cst_90 : f32 to vector<32x4xf32>
    %164 = arith.mulf %162, %163 : vector<32x4xf32>
    %165 = vector.extract_strided_slice %164 {offsets = [0, 0], sizes = [16, 4], strides = [1, 1]} : vector<32x4xf32> to vector<16x4xf32>
    %166 = vector.extract_strided_slice %164 {offsets = [16, 0], sizes = [16, 4], strides = [1, 1]} : vector<32x4xf32> to vector<16x4xf32>
    %167 = arith.maximumf %165, %166 : vector<16x4xf32>
    %168 = arith.subf %165, %167 : vector<16x4xf32>
    %169 = math.exp %168 : vector<16x4xf32>
    %170 = arith.subf %166, %167 : vector<16x4xf32>
    %171 = math.exp %170 : vector<16x4xf32>
    %172 = arith.addf %169, %171 : vector<16x4xf32>
    %173 = tpu.reciprocal %172 {approx = true} : vector<16x4xf32> -> vector<16x4xf32>
    %174 = arith.mulf %169, %173 : vector<16x4xf32>
    %175 = arith.mulf %171, %173 : vector<16x4xf32>
    %176 = tpu.concatenate %174, %175 in 0 : vector<16x4xf32>, vector<16x4xf32> -> vector<32x4xf32>
    %cst_91 = arith.constant dense<0.000000e+00> : vector<32x32xf32>
    %177 = tpu.matmul %176, %2, %cst_91 {dimension_numbers = #tpu.dot_dimension_numbers<[1], [0], [0], [1], [0, 0, 1, 1], [], []>} : vector<32x4xf32>, vector<4x32xf32>, vector<32x32xf32> -> vector<32x32xf32>
    %178 = vector.extract_strided_slice %177 {offsets = [0, 0], sizes = [16, 32], strides = [1, 1]} : vector<32x32xf32> to vector<16x32xf32>
    %179 = arith.mulf %178, %156 : vector<16x32xf32>
    %180 = vector.extract_strided_slice %177 {offsets = [16, 0], sizes = [16, 32], strides = [1, 1]} : vector<32x32xf32> to vector<16x32xf32>
    %181 = arith.mulf %180, %158 : vector<16x32xf32>
    %182 = arith.addf %179, %181 : vector<16x32xf32>
    %cst_92 = arith.constant dense<0.000000e+00> : vector<16x32xf32>
    %183 = tpu.matmul %182, %129, %cst_92 {dimension_numbers = #tpu.dot_dimension_numbers<[1], [0], [0], [1], [0, 0, 1, 1], [], []>} : vector<16x32xf32>, vector<32x32xf32>, vector<16x32xf32> -> vector<16x32xf32>
    %184 = vector.broadcast %137 : vector<1x32xf32> to vector<16x32xf32>
    %185 = arith.addf %183, %184 : vector<16x32xf32>
    %186 = arith.addf %125, %185 : vector<16x32xf32>
    %cst_93 = arith.constant dense<0.000000e+00> : vector<16xf32>
    %187 = vector.multi_reduction <add>, %186, %cst_93 [1] : vector<16x32xf32> to vector<16xf32>
    %188 = vector.shape_cast %187 : vector<16xf32> to vector<16x1xf32>
    %cst_94 = arith.constant 3.200000e+01 : f32
    %189 = vector.broadcast %cst_94 : f32 to vector<16x1xf32>
    %190 = arith.divf %188, %189 : vector<16x1xf32>
    %191 = vector.broadcast %190 : vector<16x1xf32> to vector<16x32xf32>
    %192 = arith.subf %186, %191 : vector<16x32xf32>
    %193 = arith.mulf %192, %192 : vector<16x32xf32>
    %cst_95 = arith.constant dense<0.000000e+00> : vector<16xf32>
    %194 = vector.multi_reduction <add>, %193, %cst_95 [1] : vector<16x32xf32> to vector<16xf32>
    %195 = vector.shape_cast %194 : vector<16xf32> to vector<16x1xf32>
    %cst_96 = arith.constant 3.200000e+01 : f32
    %196 = vector.broadcast %cst_96 : f32 to vector<16x1xf32>
    %197 = arith.divf %195, %196 : vector<16x1xf32>
    %198 = vector.broadcast %190 : vector<16x1xf32> to vector<16x32xf32>
    %199 = arith.subf %186, %198 : vector<16x32xf32>
    %cst_97 = arith.constant 9.99999974E-6 : f32
    %200 = vector.broadcast %cst_97 : f32 to vector<16x1xf32>
    %201 = arith.addf %197, %200 : vector<16x1xf32>
    %202 = math.rsqrt %201 : vector<16x1xf32>
    %203 = vector.broadcast %202 : vector<16x1xf32> to vector<16x32xf32>
    %204 = arith.mulf %199, %203 : vector<16x32xf32>
    %205 = vector.broadcast %139 : vector<1x32xf32> to vector<16x32xf32>
    %206 = arith.mulf %204, %205 : vector<16x32xf32>
    %207 = vector.broadcast %141 : vector<1x32xf32> to vector<16x32xf32>
    %208 = arith.addf %206, %207 : vector<16x32xf32>
    %cst_98 = arith.constant dense<0.000000e+00> : vector<16x64xf32>
    %209 = tpu.matmul %208, %131, %cst_98 {dimension_numbers = #tpu.dot_dimension_numbers<[1], [0], [0], [1], [0, 0, 1, 1], [], []>} : vector<16x32xf32>, vector<32x64xf32>, vector<16x64xf32> -> vector<16x64xf32>
    %210 = vector.broadcast %143 : vector<1x64xf32> to vector<16x64xf32>
    %211 = arith.addf %209, %210 : vector<16x64xf32>
    %cst_99 = arith.constant 0.000000e+00 : f32
    %212 = vector.broadcast %cst_99 : f32 to vector<16x64xf32>
    %213 = arith.maximumf %211, %212 : vector<16x64xf32>
    %cst_100 = arith.constant dense<0.000000e+00> : vector<16x32xf32>
    %214 = tpu.matmul %213, %133, %cst_100 {dimension_numbers = #tpu.dot_dimension_numbers<[1], [0], [0], [1], [0, 0, 1, 1], [], []>} : vector<16x64xf32>, vector<64x32xf32>, vector<16x32xf32> -> vector<16x32xf32>
    %215 = vector.broadcast %145 : vector<1x32xf32> to vector<16x32xf32>
    %216 = arith.addf %214, %215 : vector<16x32xf32>
    %217 = arith.addf %208, %216 : vector<16x32xf32>
    %cst_101 = arith.constant dense<0.000000e+00> : vector<16xf32>
    %218 = vector.multi_reduction <add>, %217, %cst_101 [1] : vector<16x32xf32> to vector<16xf32>
    %219 = vector.shape_cast %218 : vector<16xf32> to vector<16x1xf32>
    %cst_102 = arith.constant 3.200000e+01 : f32
    %220 = vector.broadcast %cst_102 : f32 to vector<16x1xf32>
    %221 = arith.divf %219, %220 : vector<16x1xf32>
    %222 = vector.broadcast %221 : vector<16x1xf32> to vector<16x32xf32>
    %223 = arith.subf %217, %222 : vector<16x32xf32>
    %224 = arith.mulf %223, %223 : vector<16x32xf32>
    %cst_103 = arith.constant dense<0.000000e+00> : vector<16xf32>
    %225 = vector.multi_reduction <add>, %224, %cst_103 [1] : vector<16x32xf32> to vector<16xf32>
    %226 = vector.shape_cast %225 : vector<16xf32> to vector<16x1xf32>
    %cst_104 = arith.constant 3.200000e+01 : f32
    %227 = vector.broadcast %cst_104 : f32 to vector<16x1xf32>
    %228 = arith.divf %226, %227 : vector<16x1xf32>
    %229 = vector.broadcast %221 : vector<16x1xf32> to vector<16x32xf32>
    %230 = arith.subf %217, %229 : vector<16x32xf32>
    %cst_105 = arith.constant 9.99999974E-6 : f32
    %231 = vector.broadcast %cst_105 : f32 to vector<16x1xf32>
    %232 = arith.addf %228, %231 : vector<16x1xf32>
    %233 = math.rsqrt %232 : vector<16x1xf32>
    %234 = vector.broadcast %233 : vector<16x1xf32> to vector<16x32xf32>
    %235 = arith.mulf %230, %234 : vector<16x32xf32>
    %236 = vector.broadcast %147 : vector<1x32xf32> to vector<16x32xf32>
    %237 = arith.mulf %235, %236 : vector<16x32xf32>
    %238 = vector.broadcast %149 : vector<1x32xf32> to vector<16x32xf32>
    %239 = arith.addf %237, %238 : vector<16x32xf32>
    %c0_106 = arith.constant 0 : index
    %c0_107 = arith.constant 0 : index
    %240 = vector.load %arg3[%c0_106, %c0_107] : memref<136x256xf32, #tpu.memory_space<vmem>>, vector<64x256xf32>
    %c64_108 = arith.constant 64 : index
    %c0_109 = arith.constant 0 : index
    %241 = vector.load %arg3[%c64_108, %c0_109] : memref<136x256xf32, #tpu.memory_space<vmem>>, vector<64x256xf32>
    %c128 = arith.constant 128 : index
    %c0_110 = arith.constant 0 : index
    %242 = vector.load %arg3[%c128, %c0_110] : memref<136x256xf32, #tpu.memory_space<vmem>>, vector<1x256xf32>
    %cst_111 = arith.constant dense<0.000000e+00> : vector<16x32xf32>
    %243 = tpu.matmul %3, %239, %cst_111 {dimension_numbers = #tpu.dot_dimension_numbers<[1], [0], [0], [1], [0, 0, 1, 1], [], []>} : vector<16x16xf32>, vector<16x32xf32>, vector<16x32xf32> -> vector<16x32xf32>
    %cst_112 = arith.constant dense<0.000000e+00> : vector<16x32xf32>
    %244 = tpu.matmul %4, %239, %cst_112 {dimension_numbers = #tpu.dot_dimension_numbers<[1], [0], [0], [1], [0, 0, 1, 1], [], []>} : vector<16x16xf32>, vector<16x32xf32>, vector<16x32xf32> -> vector<16x32xf32>
    %245 = tpu.concatenate %243, %244 in 1 : vector<16x32xf32>, vector<16x32xf32> -> vector<16x64xf32>
    %cst_113 = arith.constant dense<0.000000e+00> : vector<16x256xf32>
    %246 = tpu.matmul %245, %240, %cst_113 {dimension_numbers = #tpu.dot_dimension_numbers<[1], [0], [0], [1], [0, 0, 1, 1], [], []>} : vector<16x64xf32>, vector<64x256xf32>, vector<16x256xf32> -> vector<16x256xf32>
    %247 = vector.broadcast %242 : vector<1x256xf32> to vector<16x256xf32>
    %248 = arith.addf %246, %247 : vector<16x256xf32>
    %cst_114 = arith.constant 0.000000e+00 : f32
    %249 = vector.broadcast %cst_114 : f32 to vector<2x64xf32>
    %cst_115 = arith.constant 0.000000e+00 : f32
    %250 = vector.broadcast %cst_115 : f32 to vector<2x64xf32>
    %251 = vector.extract_strided_slice %248 {offsets = [0, 0], sizes = [2, 256], strides = [1, 1]} : vector<16x256xf32> to vector<2x256xf32>
    %cst_116 = arith.constant dense<0.000000e+00> : vector<2x256xf32>
    %252 = tpu.matmul %249, %241, %cst_116 {dimension_numbers = #tpu.dot_dimension_numbers<[1], [0], [0], [1], [0, 0, 1, 1], [], []>} : vector<2x64xf32>, vector<64x256xf32>, vector<2x256xf32> -> vector<2x256xf32>
    %253 = arith.addf %251, %252 : vector<2x256xf32>
    %254 = vector.extract_strided_slice %253 {offsets = [0, 0], sizes = [2, 192], strides = [1, 1]} : vector<2x256xf32> to vector<2x192xf32>
    %255 = arith.negf %254 : vector<2x192xf32>
    %256 = math.exp %255 : vector<2x192xf32>
    %cst_117 = arith.constant 1.000000e+00 : f32
    %257 = vector.broadcast %cst_117 : f32 to vector<2x192xf32>
    %258 = arith.addf %257, %256 : vector<2x192xf32>
    %259 = arith.divf %257, %258 : vector<2x192xf32>
    %260 = vector.extract_strided_slice %259 {offsets = [0, 0], sizes = [2, 64], strides = [1, 1]} : vector<2x192xf32> to vector<2x64xf32>
    %261 = vector.extract_strided_slice %259 {offsets = [0, 64], sizes = [2, 64], strides = [1, 1]} : vector<2x192xf32> to vector<2x64xf32>
    %262 = vector.extract_strided_slice %259 {offsets = [0, 128], sizes = [2, 64], strides = [1, 1]} : vector<2x192xf32> to vector<2x64xf32>
    %263 = vector.extract_strided_slice %253 {offsets = [0, 192], sizes = [2, 64], strides = [1, 1]} : vector<2x256xf32> to vector<2x64xf32>
    %264 = math.tanh %263 : vector<2x64xf32>
    %265 = arith.mulf %261, %250 : vector<2x64xf32>
    %266 = arith.mulf %260, %264 : vector<2x64xf32>
    %267 = arith.addf %265, %266 : vector<2x64xf32>
    %268 = math.tanh %267 : vector<2x64xf32>
    %269 = arith.mulf %262, %268 : vector<2x64xf32>
    %270 = vector.extract_strided_slice %248 {offsets = [2, 0], sizes = [2, 256], strides = [1, 1]} : vector<16x256xf32> to vector<2x256xf32>
    %cst_118 = arith.constant dense<0.000000e+00> : vector<2x256xf32>
    %271 = tpu.matmul %269, %241, %cst_118 {dimension_numbers = #tpu.dot_dimension_numbers<[1], [0], [0], [1], [0, 0, 1, 1], [], []>} : vector<2x64xf32>, vector<64x256xf32>, vector<2x256xf32> -> vector<2x256xf32>
    %272 = arith.addf %270, %271 : vector<2x256xf32>
    %273 = vector.extract_strided_slice %272 {offsets = [0, 0], sizes = [2, 192], strides = [1, 1]} : vector<2x256xf32> to vector<2x192xf32>
    %274 = arith.negf %273 : vector<2x192xf32>
    %275 = math.exp %274 : vector<2x192xf32>
    %cst_119 = arith.constant 1.000000e+00 : f32
    %276 = vector.broadcast %cst_119 : f32 to vector<2x192xf32>
    %277 = arith.addf %276, %275 : vector<2x192xf32>
    %278 = arith.divf %276, %277 : vector<2x192xf32>
    %279 = vector.extract_strided_slice %278 {offsets = [0, 0], sizes = [2, 64], strides = [1, 1]} : vector<2x192xf32> to vector<2x64xf32>
    %280 = vector.extract_strided_slice %278 {offsets = [0, 64], sizes = [2, 64], strides = [1, 1]} : vector<2x192xf32> to vector<2x64xf32>
    %281 = vector.extract_strided_slice %278 {offsets = [0, 128], sizes = [2, 64], strides = [1, 1]} : vector<2x192xf32> to vector<2x64xf32>
    %282 = vector.extract_strided_slice %272 {offsets = [0, 192], sizes = [2, 64], strides = [1, 1]} : vector<2x256xf32> to vector<2x64xf32>
    %283 = math.tanh %282 : vector<2x64xf32>
    %284 = arith.mulf %280, %267 : vector<2x64xf32>
    %285 = arith.mulf %279, %283 : vector<2x64xf32>
    %286 = arith.addf %284, %285 : vector<2x64xf32>
    %287 = math.tanh %286 : vector<2x64xf32>
    %288 = arith.mulf %281, %287 : vector<2x64xf32>
    %289 = vector.extract_strided_slice %248 {offsets = [4, 0], sizes = [2, 256], strides = [1, 1]} : vector<16x256xf32> to vector<2x256xf32>
    %cst_120 = arith.constant dense<0.000000e+00> : vector<2x256xf32>
    %290 = tpu.matmul %288, %241, %cst_120 {dimension_numbers = #tpu.dot_dimension_numbers<[1], [0], [0], [1], [0, 0, 1, 1], [], []>} : vector<2x64xf32>, vector<64x256xf32>, vector<2x256xf32> -> vector<2x256xf32>
    %291 = arith.addf %289, %290 : vector<2x256xf32>
    %292 = vector.extract_strided_slice %291 {offsets = [0, 0], sizes = [2, 192], strides = [1, 1]} : vector<2x256xf32> to vector<2x192xf32>
    %293 = arith.negf %292 : vector<2x192xf32>
    %294 = math.exp %293 : vector<2x192xf32>
    %cst_121 = arith.constant 1.000000e+00 : f32
    %295 = vector.broadcast %cst_121 : f32 to vector<2x192xf32>
    %296 = arith.addf %295, %294 : vector<2x192xf32>
    %297 = arith.divf %295, %296 : vector<2x192xf32>
    %298 = vector.extract_strided_slice %297 {offsets = [0, 0], sizes = [2, 64], strides = [1, 1]} : vector<2x192xf32> to vector<2x64xf32>
    %299 = vector.extract_strided_slice %297 {offsets = [0, 64], sizes = [2, 64], strides = [1, 1]} : vector<2x192xf32> to vector<2x64xf32>
    %300 = vector.extract_strided_slice %297 {offsets = [0, 128], sizes = [2, 64], strides = [1, 1]} : vector<2x192xf32> to vector<2x64xf32>
    %301 = vector.extract_strided_slice %291 {offsets = [0, 192], sizes = [2, 64], strides = [1, 1]} : vector<2x256xf32> to vector<2x64xf32>
    %302 = math.tanh %301 : vector<2x64xf32>
    %303 = arith.mulf %299, %286 : vector<2x64xf32>
    %304 = arith.mulf %298, %302 : vector<2x64xf32>
    %305 = arith.addf %303, %304 : vector<2x64xf32>
    %306 = math.tanh %305 : vector<2x64xf32>
    %307 = arith.mulf %300, %306 : vector<2x64xf32>
    %308 = vector.extract_strided_slice %248 {offsets = [6, 0], sizes = [2, 256], strides = [1, 1]} : vector<16x256xf32> to vector<2x256xf32>
    %cst_122 = arith.constant dense<0.000000e+00> : vector<2x256xf32>
    %309 = tpu.matmul %307, %241, %cst_122 {dimension_numbers = #tpu.dot_dimension_numbers<[1], [0], [0], [1], [0, 0, 1, 1], [], []>} : vector<2x64xf32>, vector<64x256xf32>, vector<2x256xf32> -> vector<2x256xf32>
    %310 = arith.addf %308, %309 : vector<2x256xf32>
    %311 = vector.extract_strided_slice %310 {offsets = [0, 0], sizes = [2, 192], strides = [1, 1]} : vector<2x256xf32> to vector<2x192xf32>
    %312 = arith.negf %311 : vector<2x192xf32>
    %313 = math.exp %312 : vector<2x192xf32>
    %cst_123 = arith.constant 1.000000e+00 : f32
    %314 = vector.broadcast %cst_123 : f32 to vector<2x192xf32>
    %315 = arith.addf %314, %313 : vector<2x192xf32>
    %316 = arith.divf %314, %315 : vector<2x192xf32>
    %317 = vector.extract_strided_slice %316 {offsets = [0, 0], sizes = [2, 64], strides = [1, 1]} : vector<2x192xf32> to vector<2x64xf32>
    %318 = vector.extract_strided_slice %316 {offsets = [0, 64], sizes = [2, 64], strides = [1, 1]} : vector<2x192xf32> to vector<2x64xf32>
    %319 = vector.extract_strided_slice %316 {offsets = [0, 128], sizes = [2, 64], strides = [1, 1]} : vector<2x192xf32> to vector<2x64xf32>
    %320 = vector.extract_strided_slice %310 {offsets = [0, 192], sizes = [2, 64], strides = [1, 1]} : vector<2x256xf32> to vector<2x64xf32>
    %321 = math.tanh %320 : vector<2x64xf32>
    %322 = arith.mulf %318, %305 : vector<2x64xf32>
    %323 = arith.mulf %317, %321 : vector<2x64xf32>
    %324 = arith.addf %322, %323 : vector<2x64xf32>
    %325 = math.tanh %324 : vector<2x64xf32>
    %326 = arith.mulf %319, %325 : vector<2x64xf32>
    %327 = vector.extract_strided_slice %248 {offsets = [8, 0], sizes = [2, 256], strides = [1, 1]} : vector<16x256xf32> to vector<2x256xf32>
    %cst_124 = arith.constant dense<0.000000e+00> : vector<2x256xf32>
    %328 = tpu.matmul %326, %241, %cst_124 {dimension_numbers = #tpu.dot_dimension_numbers<[1], [0], [0], [1], [0, 0, 1, 1], [], []>} : vector<2x64xf32>, vector<64x256xf32>, vector<2x256xf32> -> vector<2x256xf32>
    %329 = arith.addf %327, %328 : vector<2x256xf32>
    %330 = vector.extract_strided_slice %329 {offsets = [0, 0], sizes = [2, 192], strides = [1, 1]} : vector<2x256xf32> to vector<2x192xf32>
    %331 = arith.negf %330 : vector<2x192xf32>
    %332 = math.exp %331 : vector<2x192xf32>
    %cst_125 = arith.constant 1.000000e+00 : f32
    %333 = vector.broadcast %cst_125 : f32 to vector<2x192xf32>
    %334 = arith.addf %333, %332 : vector<2x192xf32>
    %335 = arith.divf %333, %334 : vector<2x192xf32>
    %336 = vector.extract_strided_slice %335 {offsets = [0, 0], sizes = [2, 64], strides = [1, 1]} : vector<2x192xf32> to vector<2x64xf32>
    %337 = vector.extract_strided_slice %335 {offsets = [0, 64], sizes = [2, 64], strides = [1, 1]} : vector<2x192xf32> to vector<2x64xf32>
    %338 = vector.extract_strided_slice %335 {offsets = [0, 128], sizes = [2, 64], strides = [1, 1]} : vector<2x192xf32> to vector<2x64xf32>
    %339 = vector.extract_strided_slice %329 {offsets = [0, 192], sizes = [2, 64], strides = [1, 1]} : vector<2x256xf32> to vector<2x64xf32>
    %340 = math.tanh %339 : vector<2x64xf32>
    %341 = arith.mulf %337, %324 : vector<2x64xf32>
    %342 = arith.mulf %336, %340 : vector<2x64xf32>
    %343 = arith.addf %341, %342 : vector<2x64xf32>
    %344 = math.tanh %343 : vector<2x64xf32>
    %345 = arith.mulf %338, %344 : vector<2x64xf32>
    %346 = vector.extract_strided_slice %248 {offsets = [10, 0], sizes = [2, 256], strides = [1, 1]} : vector<16x256xf32> to vector<2x256xf32>
    %cst_126 = arith.constant dense<0.000000e+00> : vector<2x256xf32>
    %347 = tpu.matmul %345, %241, %cst_126 {dimension_numbers = #tpu.dot_dimension_numbers<[1], [0], [0], [1], [0, 0, 1, 1], [], []>} : vector<2x64xf32>, vector<64x256xf32>, vector<2x256xf32> -> vector<2x256xf32>
    %348 = arith.addf %346, %347 : vector<2x256xf32>
    %349 = vector.extract_strided_slice %348 {offsets = [0, 0], sizes = [2, 192], strides = [1, 1]} : vector<2x256xf32> to vector<2x192xf32>
    %350 = arith.negf %349 : vector<2x192xf32>
    %351 = math.exp %350 : vector<2x192xf32>
    %cst_127 = arith.constant 1.000000e+00 : f32
    %352 = vector.broadcast %cst_127 : f32 to vector<2x192xf32>
    %353 = arith.addf %352, %351 : vector<2x192xf32>
    %354 = arith.divf %352, %353 : vector<2x192xf32>
    %355 = vector.extract_strided_slice %354 {offsets = [0, 0], sizes = [2, 64], strides = [1, 1]} : vector<2x192xf32> to vector<2x64xf32>
    %356 = vector.extract_strided_slice %354 {offsets = [0, 64], sizes = [2, 64], strides = [1, 1]} : vector<2x192xf32> to vector<2x64xf32>
    %357 = vector.extract_strided_slice %354 {offsets = [0, 128], sizes = [2, 64], strides = [1, 1]} : vector<2x192xf32> to vector<2x64xf32>
    %358 = vector.extract_strided_slice %348 {offsets = [0, 192], sizes = [2, 64], strides = [1, 1]} : vector<2x256xf32> to vector<2x64xf32>
    %359 = math.tanh %358 : vector<2x64xf32>
    %360 = arith.mulf %356, %343 : vector<2x64xf32>
    %361 = arith.mulf %355, %359 : vector<2x64xf32>
    %362 = arith.addf %360, %361 : vector<2x64xf32>
    %363 = math.tanh %362 : vector<2x64xf32>
    %364 = arith.mulf %357, %363 : vector<2x64xf32>
    %365 = vector.extract_strided_slice %248 {offsets = [12, 0], sizes = [2, 256], strides = [1, 1]} : vector<16x256xf32> to vector<2x256xf32>
    %cst_128 = arith.constant dense<0.000000e+00> : vector<2x256xf32>
    %366 = tpu.matmul %364, %241, %cst_128 {dimension_numbers = #tpu.dot_dimension_numbers<[1], [0], [0], [1], [0, 0, 1, 1], [], []>} : vector<2x64xf32>, vector<64x256xf32>, vector<2x256xf32> -> vector<2x256xf32>
    %367 = arith.addf %365, %366 : vector<2x256xf32>
    %368 = vector.extract_strided_slice %367 {offsets = [0, 0], sizes = [2, 192], strides = [1, 1]} : vector<2x256xf32> to vector<2x192xf32>
    %369 = arith.negf %368 : vector<2x192xf32>
    %370 = math.exp %369 : vector<2x192xf32>
    %cst_129 = arith.constant 1.000000e+00 : f32
    %371 = vector.broadcast %cst_129 : f32 to vector<2x192xf32>
    %372 = arith.addf %371, %370 : vector<2x192xf32>
    %373 = arith.divf %371, %372 : vector<2x192xf32>
    %374 = vector.extract_strided_slice %373 {offsets = [0, 0], sizes = [2, 64], strides = [1, 1]} : vector<2x192xf32> to vector<2x64xf32>
    %375 = vector.extract_strided_slice %373 {offsets = [0, 64], sizes = [2, 64], strides = [1, 1]} : vector<2x192xf32> to vector<2x64xf32>
    %376 = vector.extract_strided_slice %373 {offsets = [0, 128], sizes = [2, 64], strides = [1, 1]} : vector<2x192xf32> to vector<2x64xf32>
    %377 = vector.extract_strided_slice %367 {offsets = [0, 192], sizes = [2, 64], strides = [1, 1]} : vector<2x256xf32> to vector<2x64xf32>
    %378 = math.tanh %377 : vector<2x64xf32>
    %379 = arith.mulf %375, %362 : vector<2x64xf32>
    %380 = arith.mulf %374, %378 : vector<2x64xf32>
    %381 = arith.addf %379, %380 : vector<2x64xf32>
    %382 = math.tanh %381 : vector<2x64xf32>
    %383 = arith.mulf %376, %382 : vector<2x64xf32>
    %384 = vector.extract_strided_slice %248 {offsets = [14, 0], sizes = [2, 256], strides = [1, 1]} : vector<16x256xf32> to vector<2x256xf32>
    %cst_130 = arith.constant dense<0.000000e+00> : vector<2x256xf32>
    %385 = tpu.matmul %383, %241, %cst_130 {dimension_numbers = #tpu.dot_dimension_numbers<[1], [0], [0], [1], [0, 0, 1, 1], [], []>} : vector<2x64xf32>, vector<64x256xf32>, vector<2x256xf32> -> vector<2x256xf32>
    %386 = arith.addf %384, %385 : vector<2x256xf32>
    %387 = vector.extract_strided_slice %386 {offsets = [0, 0], sizes = [2, 192], strides = [1, 1]} : vector<2x256xf32> to vector<2x192xf32>
    %388 = arith.negf %387 : vector<2x192xf32>
    %389 = math.exp %388 : vector<2x192xf32>
    %cst_131 = arith.constant 1.000000e+00 : f32
    %390 = vector.broadcast %cst_131 : f32 to vector<2x192xf32>
    %391 = arith.addf %390, %389 : vector<2x192xf32>
    %392 = arith.divf %390, %391 : vector<2x192xf32>
    %393 = vector.extract_strided_slice %392 {offsets = [0, 0], sizes = [2, 64], strides = [1, 1]} : vector<2x192xf32> to vector<2x64xf32>
    %394 = vector.extract_strided_slice %392 {offsets = [0, 64], sizes = [2, 64], strides = [1, 1]} : vector<2x192xf32> to vector<2x64xf32>
    %395 = vector.extract_strided_slice %392 {offsets = [0, 128], sizes = [2, 64], strides = [1, 1]} : vector<2x192xf32> to vector<2x64xf32>
    %396 = vector.extract_strided_slice %386 {offsets = [0, 192], sizes = [2, 64], strides = [1, 1]} : vector<2x256xf32> to vector<2x64xf32>
    %397 = math.tanh %396 : vector<2x64xf32>
    %398 = arith.mulf %394, %381 : vector<2x64xf32>
    %399 = arith.mulf %393, %397 : vector<2x64xf32>
    %400 = arith.addf %398, %399 : vector<2x64xf32>
    %401 = math.tanh %400 : vector<2x64xf32>
    %402 = arith.mulf %395, %401 : vector<2x64xf32>
    %c128_132 = arith.constant 128 : index
    %c0_133 = arith.constant 0 : index
    %403 = vector.load %arg4[%c128_132, %c0_133] : memref<272x128xf32, #tpu.memory_space<vmem>>, vector<64x128xf32>
    %c192 = arith.constant 192 : index
    %c0_134 = arith.constant 0 : index
    %404 = vector.load %arg4[%c192, %c0_134] : memref<272x128xf32, #tpu.memory_space<vmem>>, vector<1x128xf32>
    %cst_135 = arith.constant 0.000000e+00 : f32
    %405 = vector.broadcast %cst_135 : f32 to vector<6x64xf32>
    %406 = tpu.concatenate %402, %405 in 0 : vector<2x64xf32>, vector<6x64xf32> -> vector<8x64xf32>
    %cst_136 = arith.constant dense<0.000000e+00> : vector<8x128xf32>
    %407 = tpu.matmul %406, %403, %cst_136 {dimension_numbers = #tpu.dot_dimension_numbers<[1], [0], [0], [1], [0, 0, 1, 1], [], []>} : vector<8x64xf32>, vector<64x128xf32>, vector<8x128xf32> -> vector<8x128xf32>
    %408 = vector.broadcast %404 : vector<1x128xf32> to vector<8x128xf32>
    %409 = arith.addf %407, %408 : vector<8x128xf32>
    %c0_137 = arith.constant 0 : index
    %c0_138 = arith.constant 0 : index
    %410 = vector.load %arg5[%c0_137, %c0_138] : memref<8x128xf32, #tpu.memory_space<vmem>>, vector<8x128xf32>
    tpu.vector_store %arg5[%c0_137, %c0_138], %409 {strides = array<i32>} : memref<8x128xf32, #tpu.memory_space<vmem>>, vector<8x128xf32>,
    return
  }
}

</mosaic_0001>

<llo_original>
// kernel: transformer_forward.1
$region0: #{transformer_forward.1}
  #allocation0 [shape = 'u32[]', space=smem, size = 0x4, offset = 0x4, fixed_abs, tag = 'smem constant byte address 0x4 - core index']
  #allocation1 [shape = 'u32[144,128]{1,0:T(1,128)}', space=vmem, size = 0x12000, scoped, tag = 'internal scratch']
  %s0 = inlined_call_operand.vmem [shape: s32[16,1], index: 0, kind: input, shape index: {}]
  %s1 = inlined_call_operand.hbm [shape: f32[2,160,128], index: 1, kind: input, shape index: {}]
  %s2 = inlined_call_operand.vmem [shape: f32[2,8,128], index: 2, kind: input, shape index: {}]
  %s3 = inlined_call_operand.hbm [shape: f32[136,256], index: 3, kind: input, shape index: {}]
  %s4 = inlined_call_operand.hbm [shape: f32[272,128], index: 4, kind: input, shape index: {}]
  %s5 = inlined_call_operand.vmem [shape: f32[8,128], index: 5, kind: output, shape index: {}]
  %s6 = sld [smem:[#allocation0]]
  $region42: #{transformer_forward.1} parent=0
    _
  %s8 = ssub.s32 1, %s6
  %s9 = scalar_select 0, %s8, %s6
  $region1: #{transformer_forward.1} parent=0
    #allocation2 [shape = 'u8[163840]{0}', space=vmem, size = 0x28000, scoped, tag = 'input window, operand 1, single buffered']
    #allocation3 [shape = 's32[1]{0}', space=sflag, size = 0x4, scoped, tag = 'scoped memory for transformer_forward.1']
    #allocation4 [shape = 'u8[139264]{0}', space=vmem, size = 0x22000, scoped, tag = 'input window, operand 3, single buffered']
    #allocation5 [shape = 's32[1]{0}', space=sflag, size = 0x4, scoped, tag = 'scoped memory for transformer_forward.1']
    #allocation6 [shape = 'u8[139264]{0}', space=vmem, size = 0x22000, scoped, tag = 'input window, operand 4, single buffered']
    %10 = vsyncpa [#allocation3], 0
    %11 = vsyncpa [#allocation5], 0
    // Predicated region
    $region2: #{transformer_forward.1} parent=1 // pred_check
      _
    $region3: #{transformer_forward.1} parent=1 // pred_check_branch
      %13 = sbr.rel (0) target = $region5
    $region4: #{transformer_forward.1} parent=1 // pred_region
      _
    $region5: #{transformer_forward.1} parent=1 // pred_fallthru
      _
    // Predicated region
    $region6: #{transformer_forward.1} parent=1 // pred_check
      _
    $region7: #{transformer_forward.1} parent=1 // pred_check_branch
      %15 = sbr.rel (0) target = $region9
    $region8: #{transformer_forward.1} parent=1 // pred_region
      %s17 = ssub.s32 5120, 5120
      %18 = vsyncadd [#allocation3], %s17
      %s19 = sshll.u32 [#allocation2], 4
      %s20 = int_to_ptr.vmem [resolvable:$true] %s19
      %25 = dma.hbm_to_vmem [thread:$0]  %s1, 5120, %s20, [#allocation3], 128, 128, 8
    $region9: #{transformer_forward.1} parent=1 // pred_fallthru
      _
    // Predicated region
    $region10: #{transformer_forward.1} parent=1 // pred_check
      _
    $region11: #{transformer_forward.1} parent=1 // pred_check_branch
      %27 = sbr.rel (0) target = $region13
    $region12: #{transformer_forward.1} parent=1 // pred_region
      _
    $region13: #{transformer_forward.1} parent=1 // pred_fallthru
      _
    // Predicated region
    $region14: #{transformer_forward.1} parent=1 // pred_check
      _
    $region15: #{transformer_forward.1} parent=1 // pred_check_branch
      %29 = sbr.rel (0) target = $region17
    $region16: #{transformer_forward.1} parent=1 // pred_region
      %s31 = ssub.s32 4352, 4352
      %32 = vsyncadd [#allocation5], %s31
      %s33 = sshll.u32 [#allocation4], 4
      %s34 = int_to_ptr.vmem [resolvable:$true] %s33
      %39 = dma.hbm_to_vmem [thread:$0]  %s3, 4352, %s34, [#allocation5], 256, 256, 16
    $region17: #{transformer_forward.1} parent=1 // pred_fallthru
      _
    // Predicated region
    $region18: #{transformer_forward.1} parent=1 // pred_check
      _
    $region19: #{transformer_forward.1} parent=1 // pred_check_branch
      %41 = sbr.rel (0) target = $region21
    $region20: #{transformer_forward.1} parent=1 // pred_region
      %s43 = ssub.s32 4352, 4352
      %44 = vsyncadd [#allocation5], %s43
      %s45 = sshll.u32 [#allocation6], 4
      %s46 = int_to_ptr.vmem [resolvable:$true] %s45
      %51 = dma.hbm_to_vmem [thread:$0]  %s4, 4352, %s46, [#allocation5], 128, 128, 8
    $region21: #{transformer_forward.1} parent=1 // pred_fallthru
      _
    // Predicated region
    $region22: #{transformer_forward.1} parent=1 // pred_check
      _
    $region23: #{transformer_forward.1} parent=1 // pred_check_branch
      %53 = sbr.rel (0) target = $region25
    $region24: #{transformer_forward.1} parent=1 // pred_region
      %54 = dma.done [#allocation3], 5120
    $region25: #{transformer_forward.1} parent=1 // pred_fallthru
      _
    // Predicated region
    $region26: #{transformer_forward.1} parent=1 // pred_check
      _
    $region27: #{transformer_forward.1} parent=1 // pred_check_branch
      %56 = sbr.rel (0) target = $region29
    $region28: #{transformer_forward.1} parent=1 // pred_region
      %57 = dma.done [#allocation5], 4352
    $region29: #{transformer_forward.1} parent=1 // pred_fallthru
      _
    // Predicated region
    $region30: #{transformer_forward.1} parent=1 // pred_check
      _
    $region31: #{transformer_forward.1} parent=1 // pred_check_branch
      %59 = sbr.rel (0) target = $region33
    $region32: #{transformer_forward.1} parent=1 // pred_region
      %60 = dma.done [#allocation5], 4352
    $region33: #{transformer_forward.1} parent=1 // pred_fallthru
      _
    %v61 = vld [vmem:[#allocation6] sm:$0xff]
    %v62 = vld [vmem:[#allocation6 + $0x8] sm:$0xff]
    %v63 = vld [vmem:[#allocation6 + $0x10] sm:$0xff]
    %v64 = vld [vmem:[#allocation6 + $0x18] sm:$0xff]
    %v65 = vld [vmem:[#allocation6 + $0x20] sm:$0xff]
    %v66 = vld [vmem:[#allocation6 + $0x28] sm:$0xff]
    %v67 = vld [vmem:[#allocation6 + $0x30] sm:$0xff]
    %v68 = vld [vmem:[#allocation6 + $0x38] sm:$0xff]
    %v69 = vld [vmem:[#allocation6 + $0x40] sm:$0xff]
    %v70 = vld [vmem:[#allocation6 + $0x48] sm:$0xff]
    %v71 = vld [vmem:[#allocation6 + $0x50] sm:$0xff]
    %v72 = vld [vmem:[#allocation6 + $0x58] sm:$0xff]
    %v73 = vld [vmem:[#allocation6 + $0x60] sm:$0xff]
    %v74 = vld [vmem:[#allocation6 + $0x68] sm:$0xff]
    %v75 = vld [vmem:[#allocation6 + $0x70] sm:$0xff]
    %v76 = vld [vmem:[#allocation6 + $0x78] sm:$0xff]
    %v77 = vld [vmem:[#allocation6 + $0xc8] sm:$0xff]
    %v78 = vld [vmem:[#allocation6 + $0xd0] sm:$0xff]
    %v79 = vld [vmem:[#allocation6 + $0xd8] sm:$0xff]
    %v80 = vld [vmem:[#allocation6 + $0xe0] sm:$0xff]
    %v81 = vld [vmem:[#allocation6 + $0xe8] sm:$0xf]
    %v82 = vld [vmem:[#allocation6 + $0xf0] sm:$0xff]
    %v83 = vld [vmem:[#allocation6 + $0xf8] sm:$0xff]
    %v84 = vld [vmem:[#allocation6 + $0x100] sm:$0xff]
    %v85 = vld [vmem:[#allocation6 + $0x108] sm:$0xff]
    %v86 = vld [vmem:[%s0] sm:$0xff]
    %v87 = vld [vmem:[%s0 + $0x8] sm:$0xff]
    %v88 = vlaneseq
    %v89 = vand.u32 %v88, 127
    %90 = vset.pattern.permute.xlu0 0
    %91 = vperm.xlu0 %90, %v86
    %v92 = vpop.permute.xlu0 %91
    %93 = vset.pattern.permute.xlu0 0
    %94 = vperm.xlu0 %93, %v87
    %v95 = vpop.permute.xlu0 %94
    %vm96 = vcmp.eq.s32.totalorder %v89, %v92
    %vm97 = vcmp.eq.s32.totalorder %v89, %v95
    %v98 = vsel %vm96, 1, 0
    %v99 = vsel %vm97, 1, 0
    %v100 = vcvt.s32.f32 %v98
    %v101 = vcvt.s32.f32 %v99
    %102 = vmatprep.subr.mxu0 0.0
    %103 = vmatpush1.msra.mxu0 %v76
    %104 = vmatprep.subr.mxu0 0.0
    %105 = vmatpush1.msra.mxu0 %v75
    %106 = vmatprep.subr.mxu0 0.0
    %107 = vmatpush1.msra.mxu0 %v74
    %108 = vmatprep.subr.mxu0 0.0
    %109 = vmatpush1.msra.mxu0 %v73
    %110 = vmatprep.subr.mxu0 0.0
    %111 = vmatpush1.msra.mxu0 %v72
    %112 = vmatprep.subr.mxu0 0.0
    %113 = vmatpush1.msra.mxu0 %v71
    %114 = vmatprep.subr.mxu0 0.0
    %115 = vmatpush1.msra.mxu0 %v70
    %116 = vmatprep.subr.mxu0 0.0
    %117 = vmatpush1.msra.mxu0 %v69
    %118 = vmatprep.subr.mxu0 0.0
    %119 = vmatpush1.msra.mxu0 %v68
    %120 = vmatprep.subr.mxu0 0.0
    %121 = vmatpush1.msra.mxu0 %v67
    %122 = vmatprep.subr.mxu0 0.0
    %123 = vmatpush1.msra.mxu0 %v66
    %124 = vmatprep.subr.mxu0 0.0
    %125 = vmatpush1.msra.mxu0 %v65
    %126 = vmatprep.subr.mxu0 0.0
    %127 = vmatpush1.msra.mxu0 %v64
    %128 = vmatprep.subr.mxu0 0.0
    %129 = vmatpush1.msra.mxu0 %v63
    %130 = vmatprep.subr.mxu0 0.0
    %131 = vmatpush1.msra.mxu0 %v62
    %132 = vmatprep.subr.mxu0 0.0
    %133 = vmatpush1.msra.mxu0 %v61
    %134 = vmatprep.subr.mxu0 0.0
    %135 = vmatpush2.msra.mxu0 0.0
    %136 = vmatprep.subr.mxu0 0.0
    %137 = vmatpush2.msra.mxu0 0.0
    %138 = vmatprep.subr.mxu0 0.0
    %139 = vmatpush2.msra.mxu0 0.0
    %140 = vmatprep.subr.mxu0 0.0
    %141 = vmatpush2.msra.mxu0 0.0
    %142 = vmatprep.subr.mxu0 0.0
    %143 = vmatpush2.msra.mxu0 0.0
    %144 = vmatprep.subr.mxu0 0.0
    %145 = vmatpush2.msra.mxu0 0.0
    %146 = vmatprep.subr.mxu0 0.0
    %147 = vmatpush2.msra.mxu0 0.0
    %148 = vmatprep.subr.mxu0 0.0
    %149 = vmatpush2.msra.mxu0 0.0
    %150 = vmatprep.subr.mxu0 0.0
    %151 = vmatpush2.msra.mxu0 0.0
    %152 = vmatprep.subr.mxu0 0.0
    %153 = vmatpush2.msra.mxu0 0.0
    %154 = vmatprep.subr.mxu0 0.0
    %155 = vmatpush2.msra.mxu0 0.0
    %156 = vmatprep.subr.mxu0 0.0
    %157 = vmatpush2.msra.mxu0 0.0
    %158 = vmatprep.subr.mxu0 0.0
    %159 = vmatpush2.msra.mxu0 0.0
    %160 = vmatprep.subr.mxu0 0.0
    %161 = vmatpush2.msra.mxu0 0.0
    %162 = vmatprep.subr.mxu0 0.0
    %163 = vmatpush2.msra.mxu0 0.0
    %164 = vmatprep.subr.mxu0 0.0
    %165 = vmatpush2.msra.mxu0 0.0
    %166 = vmatprep.mubr.f32.mxu0 0.0
    %167 = vmatmul.mubr.f32.gmra.mxu0 %v100
    %v168 = vpop.f32.mrf.mxu0
    %v169 = vadd.f32 0.0, %v168
    %v170 = vpop.f32.mrf.mxu0
    %171 = vmatprep.mubr.f32.mxu0 0.0
    %172 = vmatmul.mubr.f32.gmra.mxu0 %v101
    %v173 = vpop.f32.mrf.mxu0
    %v174 = vadd.f32 0.0, %v173
    %v175 = vpop.f32.mrf.mxu0
    %176 = vdwg.mxu0
    %v177 = vld [vmem:[#allocation2] sm:$0xff]
    %v178 = vld [vmem:[#allocation2 + $0x8] sm:$0xff]
    %v179 = vld [vmem:[#allocation2 + $0x10] sm:$0xff]
    %v180 = vld [vmem:[#allocation2 + $0x18] sm:$0xff]
    %v181 = vld [vmem:[#allocation2 + $0x20] sm:$0xff]
    %v182 = vld [vmem:[#allocation2 + $0x28] sm:$0xff]
    %v183 = vld [vmem:[#allocation2 + $0x30] sm:$0xff]
    %v184 = vld [vmem:[#allocation2 + $0x38] sm:$0xff]
    %v185 = vld [vmem:[#allocation2 + $0x40] sm:$0xff]
    %v186 = vld [vmem:[#allocation2 + $0x48] sm:$0xff]
    %v187 = vld [vmem:[#allocation2 + $0x50] sm:$0xff]
    %v188 = vld [vmem:[#allocation2 + $0x58] sm:$0xff]
    %v189 = vld [vmem:[#allocation2 + $0x60] sm:$0xff]
    %v190 = vld [vmem:[#allocation2 + $0x68] sm:$0xff]
    %v191 = vld [vmem:[#allocation2 + $0x70] sm:$0xff]
    %v192 = vld [vmem:[#allocation2 + $0x78] sm:$0xff]
    %v193 = vld [vmem:[#allocation2 + $0x80] sm:$0xff]
    %v194 = vld [vmem:[#allocation2 + $0x88] sm:$0xff]
    %v195 = vld [vmem:[#allocation2 + $0x90] sm:$0xff]
    %v196 = vld [vmem:[#allocation2 + $0x98] sm:$0xff]
    %v197 = vld [vmem:[%s2] sm:$0x1]
    %v198 = vld [vmem:[%s2 + $0x1] sm:$0x1]
    %v199 = vld [vmem:[%s2 + $0x2] sm:$0x1]
    %v200 = vld [vmem:[%s2 + $0x3] sm:$0x1]
    %v201 = vld [vmem:[%s2 + $0x4] sm:$0x1]
    %v202 = vld [vmem:[%s2 + $0x5] sm:$0x1]
    %v203 = vld [vmem:[%s2 + $0x6] sm:$0x1]
    %v204 = vld [vmem:[%s2 + $0x7] sm:$0x1]
    %v205 = vlaneseq
    %v206 = vshrl.u32 %v205, 7
    %v207 = vsub.s32 0, %v206
    %v208 = vrot.slane %v197, %v207
    %vm209 = vcmask 261120
    %v211 = vsel %vm209, %v169, 0
    %v214 = vsel %vm209, %v174, 0
    %216 = vmatprep.subr.mxu0 0.0
    %217 = vmatpush1.msra.mxu0 0.0
    %218 = vmatprep.subr.mxu0 0.0
    %219 = vmatpush1.msra.mxu0 0.0
    %220 = vmatprep.subr.mxu0 0.0
    %221 = vmatpush1.msra.mxu0 0.0
    %222 = vmatprep.subr.mxu0 0.0
    %223 = vmatpush1.msra.mxu0 0.0
    %224 = vmatprep.subr.mxu0 0.0
    %225 = vmatpush1.msra.mxu0 0.0
    %226 = vmatprep.subr.mxu0 0.0
    %227 = vmatpush1.msra.mxu0 0.0
    %228 = vmatprep.subr.mxu0 0.0
    %229 = vmatpush1.msra.mxu0 0.0
    %230 = vmatprep.subr.mxu0 0.0
    %231 = vmatpush1.msra.mxu0 0.0
    %232 = vmatprep.subr.mxu0 0.0
    %233 = vmatpush1.msra.mxu0 0.0
    %234 = vmatprep.subr.mxu0 0.0
    %235 = vmatpush1.msra.mxu0 0.0
    %236 = vmatprep.subr.mxu0 0.0
    %237 = vmatpush1.msra.mxu0 0.0
    %238 = vmatprep.subr.mxu0 0.0
    %239 = vmatpush1.msra.mxu0 0.0
    %240 = vmatprep.subr.mxu0 0.0
    %241 = vmatpush1.msra.mxu0 %v180
    %242 = vmatprep.subr.mxu0 0.0
    %243 = vmatpush1.msra.mxu0 %v179
    %244 = vmatprep.subr.mxu0 0.0
    %245 = vmatpush1.msra.mxu0 %v178
    %246 = vmatprep.subr.mxu0 0.0
    %247 = vmatpush1.msra.mxu0 %v177
    %248 = vmatprep.subr.mxu0 0.0
    %249 = vmatpush2.msra.mxu0 0.0
    %250 = vmatprep.subr.mxu0 0.0
    %251 = vmatpush2.msra.mxu0 0.0
    %252 = vmatprep.subr.mxu0 0.0
    %253 = vmatpush2.msra.mxu0 0.0
    %254 = vmatprep.subr.mxu0 0.0
    %255 = vmatpush2.msra.mxu0 0.0
    %256 = vmatprep.subr.mxu0 0.0
    %257 = vmatpush2.msra.mxu0 0.0
    %258 = vmatprep.subr.mxu0 0.0
    %259 = vmatpush2.msra.mxu0 0.0
    %260 = vmatprep.subr.mxu0 0.0
    %261 = vmatpush2.msra.mxu0 0.0
    %262 = vmatprep.subr.mxu0 0.0
    %263 = vmatpush2.msra.mxu0 0.0
    %264 = vmatprep.subr.mxu0 0.0
    %265 = vmatpush2.msra.mxu0 0.0
    %266 = vmatprep.subr.mxu0 0.0
    %267 = vmatpush2.msra.mxu0 0.0
    %268 = vmatprep.subr.mxu0 0.0
    %269 = vmatpush2.msra.mxu0 0.0
    %270 = vmatprep.subr.mxu0 0.0
    %271 = vmatpush2.msra.mxu0 0.0
    %272 = vmatprep.subr.mxu0 0.0
    %273 = vmatpush2.msra.mxu0 0.0
    %274 = vmatprep.subr.mxu0 0.0
    %275 = vmatpush2.msra.mxu0 0.0
    %276 = vmatprep.subr.mxu0 0.0
    %277 = vmatpush2.msra.mxu0 0.0
    %278 = vmatprep.subr.mxu0 0.0
    %279 = vmatpush2.msra.mxu0 0.0
    %280 = vmatprep.mubr.f32.mxu0 0.0
    %281 = vmatmul.mubr.f32.gmra.mxu0 %v211
    %v282 = vpop.f32.mrf.mxu0
    %v283 = vadd.f32 %v208, %v282
    %v284 = vpop.f32.mrf.mxu0
    %285 = vmatprep.mubr.f32.mxu0 0.0
    %286 = vmatmul.mubr.f32.gmra.mxu0 %v214
    %v287 = vpop.f32.mrf.mxu0
    %v288 = vadd.f32 %v208, %v287
    %v289 = vpop.f32.mrf.mxu0
    %290 = vdwg.mxu0
    %293 = vrot.lane.b32.xlu0 %v283, 96
    %v294 = vpop.permute.xlu0 %293
    %295 = vrot.lane.b32.xlu0 %v288, 96
    %v296 = vpop.permute.xlu0 %295
    %v299 = vmul.f32 %v283, %v294
    %v300 = vmul.f32 %v288, %v296
    %v301 = vmul.f32 %v283, %v296
    %v302 = vmul.f32 %v288, %v294
    %v304 = vsel %vm209, %v299, 0
    %v307 = vsel %vm209, %v300, 0
    %v310 = vsel %vm209, %v301, 0
    %v313 = vsel %vm209, %v302, 0
    %315 = vmatprep.subr.mxu0 0.0
    %316 = vmatpush1.msra.mxu0 0.0
    %317 = vmatprep.subr.mxu0 0.0
    %318 = vmatpush1.msra.mxu0 0.0
    %319 = vmatprep.subr.mxu0 0.0
    %320 = vmatpush1.msra.mxu0 0.0
    %321 = vmatprep.subr.mxu0 0.0
    %322 = vmatpush1.msra.mxu0 0.0
    %323 = vmatprep.subr.mxu0 0.0
    %324 = vmatpush1.msra.mxu0 0.0
    %325 = vmatprep.subr.mxu0 0.0
    %326 = vmatpush1.msra.mxu0 0.0
    %327 = vmatprep.subr.mxu0 0.0
    %328 = vmatpush1.msra.mxu0 0.0
    %329 = vmatprep.subr.mxu0 0.0
    %330 = vmatpush1.msra.mxu0 0.0
    %331 = vmatprep.subr.mxu0 0.0
    %332 = vmatpush1.msra.mxu0 0.0
    %333 = vmatprep.subr.mxu0 0.0
    %334 = vmatpush1.msra.mxu0 0.0
    %335 = vmatprep.subr.mxu0 0.0
    %336 = vmatpush1.msra.mxu0 0.0
    %337 = vmatprep.subr.mxu0 0.0
    %338 = vmatpush1.msra.mxu0 0.0
    %339 = vmatprep.subr.mxu0 0.0
    %340 = vmatpush1.msra.mxu0 %v80
    %341 = vmatprep.subr.mxu0 0.0
    %342 = vmatpush1.msra.mxu0 %v79
    %343 = vmatprep.subr.mxu0 0.0
    %344 = vmatpush1.msra.mxu0 %v78
    %345 = vmatprep.subr.mxu0 0.0
    %346 = vmatpush1.msra.mxu0 %v77
    %347 = vmatprep.subr.mxu0 0.0
    %348 = vmatpush2.msra.mxu0 0.0
    %349 = vmatprep.subr.mxu0 0.0
    %350 = vmatpush2.msra.mxu0 0.0
    %351 = vmatprep.subr.mxu0 0.0
    %352 = vmatpush2.msra.mxu0 0.0
    %353 = vmatprep.subr.mxu0 0.0
    %354 = vmatpush2.msra.mxu0 0.0
    %355 = vmatprep.subr.mxu0 0.0
    %356 = vmatpush2.msra.mxu0 0.0
    %357 = vmatprep.subr.mxu0 0.0
    %358 = vmatpush2.msra.mxu0 0.0
    %359 = vmatprep.subr.mxu0 0.0
    %360 = vmatpush2.msra.mxu0 0.0
    %361 = vmatprep.subr.mxu0 0.0
    %362 = vmatpush2.msra.mxu0 0.0
    %363 = vmatprep.subr.mxu0 0.0
    %364 = vmatpush2.msra.mxu0 0.0
    %365 = vmatprep.subr.mxu0 0.0
    %366 = vmatpush2.msra.mxu0 0.0
    %367 = vmatprep.subr.mxu0 0.0
    %368 = vmatpush2.msra.mxu0 0.0
    %369 = vmatprep.subr.mxu0 0.0
    %370 = vmatpush2.msra.mxu0 0.0
    %371 = vmatprep.subr.mxu0 0.0
    %372 = vmatpush2.msra.mxu0 0.0
    %373 = vmatprep.subr.mxu0 0.0
    %374 = vmatpush2.msra.mxu0 0.0
    %375 = vmatprep.subr.mxu0 0.0
    %376 = vmatpush2.msra.mxu0 0.0
    %377 = vmatprep.subr.mxu0 0.0
    %378 = vmatpush2.msra.mxu0 0.0
    %379 = vmatprep.mubr.f32.mxu0 0.0
    %380 = vmatmul.mubr.f32.gmra.mxu0 %v304
    %v381 = vpop.f32.mrf.mxu0
    %v382 = vadd.f32 0.0, %v381
    %v383 = vpop.f32.mrf.mxu0
    %384 = vmatprep.mubr.f32.mxu0 0.0
    %385 = vmatmul.mubr.f32.gmra.mxu0 %v307
    %v386 = vpop.f32.mrf.mxu0
    %v387 = vadd.f32 0.0, %v386
    %v388 = vpop.f32.mrf.mxu0
    %389 = vmatprep.mubr.f32.mxu0 0.0
    %390 = vmatmul.mubr.f32.gmra.mxu0 %v310
    %v391 = vpop.f32.mrf.mxu0
    %v392 = vadd.f32 0.0, %v391
    %v393 = vpop.f32.mrf.mxu0
    %394 = vmatprep.mubr.f32.mxu0 0.0
    %395 = vmatmul.mubr.f32.gmra.mxu0 %v313
    %v396 = vpop.f32.mrf.mxu0
    %v397 = vadd.f32 0.0, %v396
    %v398 = vpop.f32.mrf.mxu0
    %399 = vdwg.mxu0
    %v400 = vmul.f32 %v382, 0.35355338
    %v401 = vmul.f32 %v387, 0.35355338
    %v402 = vmul.f32 %v392, 0.35355338
    %v403 = vmul.f32 %v397, 0.35355338
    %v404 = vmax.f32 %v400, %v402
    %v405 = vmax.f32 %v401, %v403
    %v406 = vsub.f32 %v400, %v404
    %v407 = vsub.f32 %v401, %v405
    %v408 = vmul.f32 %v406, 1.442695
    %v409 = vpow.pop %v408
    %v410 = vmul.f32 %v407, 1.442695
    %v411 = vpow.pop %v410
    %v412 = vsub.f32 %v402, %v404
    %v413 = vsub.f32 %v403, %v405
    %v414 = vmul.f32 %v412, 1.442695
    %v415 = vpow.pop %v414
    %v416 = vmul.f32 %v413, 1.442695
    %v417 = vpow.pop %v416
    %v418 = vadd.f32 %v409, %v415
    %v419 = vadd.f32 %v411, %v417
    %v420 = vrcp.pop %v418
    %v421 = vrcp.pop %v419
    %v422 = vmul.f32 %v409, %v420
    %v423 = vmul.f32 %v411, %v421
    %v424 = vmul.f32 %v415, %v420
    %v425 = vmul.f32 %v417, %v421
    %vm426 = vcmask 31744
    %v428 = vsel %vm426, %v422, 0
    %v431 = vsel %vm426, %v423, 0
    %v434 = vsel %vm426, %v424, 0
    %v437 = vsel %vm426, %v425, 0
    %vm439 = vcmask 1043456
    %v441 = vsel %vm439, %v81, 0
    %443 = vmatprep.subr.mxu0 0.0
    %444 = vmatpush1.msra.mxu0 0.0
    %445 = vmatprep.subr.mxu0 0.0
    %446 = vmatpush1.msra.mxu0 0.0
    %447 = vmatprep.subr.mxu0 0.0
    %448 = vmatpush1.msra.mxu0 0.0
    %449 = vmatprep.subr.mxu0 0.0
    %450 = vmatpush1.msra.mxu0 0.0
    %451 = vmatprep.subr.mxu0 0.0
    %452 = vmatpush1.msra.mxu0 0.0
    %453 = vmatprep.subr.mxu0 0.0
    %454 = vmatpush1.msra.mxu0 0.0
    %455 = vmatprep.subr.mxu0 0.0
    %456 = vmatpush1.msra.mxu0 0.0
    %457 = vmatprep.subr.mxu0 0.0
    %458 = vmatpush1.msra.mxu0 0.0
    %459 = vmatprep.subr.mxu0 0.0
    %460 = vmatpush1.msra.mxu0 0.0
    %461 = vmatprep.subr.mxu0 0.0
    %462 = vmatpush1.msra.mxu0 0.0
    %463 = vmatprep.subr.mxu0 0.0
    %464 = vmatpush1.msra.mxu0 0.0
    %465 = vmatprep.subr.mxu0 0.0
    %466 = vmatpush1.msra.mxu0 0.0
    %467 = vmatprep.subr.mxu0 0.0
    %468 = vmatpush1.msra.mxu0 0.0
    %469 = vmatprep.subr.mxu0 0.0
    %470 = vmatpush1.msra.mxu0 0.0
    %471 = vmatprep.subr.mxu0 0.0
    %472 = vmatpush1.msra.mxu0 0.0
    %473 = vmatprep.subr.mxu0 0.0
    %474 = vmatpush1.msra.mxu0 %v441
    %475 = vmatprep.subr.mxu0 0.0
    %476 = vmatpush2.msra.mxu0 0.0
    %477 = vmatprep.subr.mxu0 0.0
    %478 = vmatpush2.msra.mxu0 0.0
    %479 = vmatprep.subr.mxu0 0.0
    %480 = vmatpush2.msra.mxu0 0.0
    %481 = vmatprep.subr.mxu0 0.0
    %482 = vmatpush2.msra.mxu0 0.0
    %483 = vmatprep.subr.mxu0 0.0
    %484 = vmatpush2.msra.mxu0 0.0
    %485 = vmatprep.subr.mxu0 0.0
    %486 = vmatpush2.msra.mxu0 0.0
    %487 = vmatprep.subr.mxu0 0.0
    %488 = vmatpush2.msra.mxu0 0.0
    %489 = vmatprep.subr.mxu0 0.0
    %490 = vmatpush2.msra.mxu0 0.0
    %491 = vmatprep.subr.mxu0 0.0
    %492 = vmatpush2.msra.mxu0 0.0
    %493 = vmatprep.subr.mxu0 0.0
    %494 = vmatpush2.msra.mxu0 0.0
    %495 = vmatprep.subr.mxu0 0.0
    %496 = vmatpush2.msra.mxu0 0.0
    %497 = vmatprep.subr.mxu0 0.0
    %498 = vmatpush2.msra.mxu0 0.0
    %499 = vmatprep.subr.mxu0 0.0
    %500 = vmatpush2.msra.mxu0 0.0
    %501 = vmatprep.subr.mxu0 0.0
    %502 = vmatpush2.msra.mxu0 0.0
    %503 = vmatprep.subr.mxu0 0.0
    %504 = vmatpush2.msra.mxu0 0.0
    %505 = vmatprep.subr.mxu0 0.0
    %506 = vmatpush2.msra.mxu0 0.0
    %507 = vmatprep.mubr.f32.mxu0 0.0
    %508 = vmatmul.mubr.f32.gmra.mxu0 %v428
    %v509 = vpop.f32.mrf.mxu0
    %v510 = vadd.f32 0.0, %v509
    %v511 = vpop.f32.mrf.mxu0
    %512 = vmatprep.mubr.f32.mxu0 0.0
    %513 = vmatmul.mubr.f32.gmra.mxu0 %v431
    %v514 = vpop.f32.mrf.mxu0
    %v515 = vadd.f32 0.0, %v514
    %v516 = vpop.f32.mrf.mxu0
    %517 = vmatprep.mubr.f32.mxu0 0.0
    %518 = vmatmul.mubr.f32.gmra.mxu0 %v434
    %v519 = vpop.f32.mrf.mxu0
    %v520 = vadd.f32 0.0, %v519
    %v521 = vpop.f32.mrf.mxu0
    %522 = vmatprep.mubr.f32.mxu0 0.0
    %523 = vmatmul.mubr.f32.gmra.mxu0 %v437
    %v524 = vpop.f32.mrf.mxu0
    %v525 = vadd.f32 0.0, %v524
    %v526 = vpop.f32.mrf.mxu0
    %527 = vdwg.mxu0
    %528 = vrot.lane.b32.xlu0 %v283, 64
    %v529 = vpop.permute.xlu0 %528
    %530 = vrot.lane.b32.xlu0 %v288, 64
    %v531 = vpop.permute.xlu0 %530
    %v534 = vmul.f32 %v510, %v529
    %v535 = vmul.f32 %v515, %v531
    %v536 = vmul.f32 %v520, %v531
    %v537 = vmul.f32 %v525, %v529
    %v538 = vadd.f32 %v534, %v536
    %v539 = vadd.f32 %v535, %v537
    %v540 = vlaneseq
    %v541 = vshrl.u32 %v540, 7
    %v542 = vsub.s32 0, %v541
    %v543 = vrot.slane %v198, %v542
    %v545 = vsel %vm209, %v538, 0
    %v548 = vsel %vm209, %v539, 0
    %550 = vmatprep.subr.mxu0 0.0
    %551 = vmatpush1.msra.mxu0 0.0
    %552 = vmatprep.subr.mxu0 0.0
    %553 = vmatpush1.msra.mxu0 0.0
    %554 = vmatprep.subr.mxu0 0.0
    %555 = vmatpush1.msra.mxu0 0.0
    %556 = vmatprep.subr.mxu0 0.0
    %557 = vmatpush1.msra.mxu0 0.0
    %558 = vmatprep.subr.mxu0 0.0
    %559 = vmatpush1.msra.mxu0 0.0
    %560 = vmatprep.subr.mxu0 0.0
    %561 = vmatpush1.msra.mxu0 0.0
    %562 = vmatprep.subr.mxu0 0.0
    %563 = vmatpush1.msra.mxu0 0.0
    %564 = vmatprep.subr.mxu0 0.0
    %565 = vmatpush1.msra.mxu0 0.0
    %566 = vmatprep.subr.mxu0 0.0
    %567 = vmatpush1.msra.mxu0 0.0
    %568 = vmatprep.subr.mxu0 0.0
    %569 = vmatpush1.msra.mxu0 0.0
    %570 = vmatprep.subr.mxu0 0.0
    %571 = vmatpush1.msra.mxu0 0.0
    %572 = vmatprep.subr.mxu0 0.0
    %573 = vmatpush1.msra.mxu0 0.0
    %574 = vmatprep.subr.mxu0 0.0
    %575 = vmatpush1.msra.mxu0 %v184
    %576 = vmatprep.subr.mxu0 0.0
    %577 = vmatpush1.msra.mxu0 %v183
    %578 = vmatprep.subr.mxu0 0.0
    %579 = vmatpush1.msra.mxu0 %v182
    %580 = vmatprep.subr.mxu0 0.0
    %581 = vmatpush1.msra.mxu0 %v181
    %582 = vmatprep.subr.mxu0 0.0
    %583 = vmatpush2.msra.mxu0 0.0
    %584 = vmatprep.subr.mxu0 0.0
    %585 = vmatpush2.msra.mxu0 0.0
    %586 = vmatprep.subr.mxu0 0.0
    %587 = vmatpush2.msra.mxu0 0.0
    %588 = vmatprep.subr.mxu0 0.0
    %589 = vmatpush2.msra.mxu0 0.0
    %590 = vmatprep.subr.mxu0 0.0
    %591 = vmatpush2.msra.mxu0 0.0
    %592 = vmatprep.subr.mxu0 0.0
    %593 = vmatpush2.msra.mxu0 0.0
    %594 = vmatprep.subr.mxu0 0.0
    %595 = vmatpush2.msra.mxu0 0.0
    %596 = vmatprep.subr.mxu0 0.0
    %597 = vmatpush2.msra.mxu0 0.0
    %598 = vmatprep.subr.mxu0 0.0
    %599 = vmatpush2.msra.mxu0 0.0
    %600 = vmatprep.subr.mxu0 0.0
    %601 = vmatpush2.msra.mxu0 0.0
    %602 = vmatprep.subr.mxu0 0.0
    %603 = vmatpush2.msra.mxu0 0.0
    %604 = vmatprep.subr.mxu0 0.0
    %605 = vmatpush2.msra.mxu0 0.0
    %606 = vmatprep.subr.mxu0 0.0
    %607 = vmatpush2.msra.mxu0 0.0
    %608 = vmatprep.subr.mxu0 0.0
    %609 = vmatpush2.msra.mxu0 0.0
    %610 = vmatprep.subr.mxu0 0.0
    %611 = vmatpush2.msra.mxu0 0.0
    %612 = vmatprep.subr.mxu0 0.0
    %613 = vmatpush2.msra.mxu0 0.0
    %614 = vmatprep.mubr.f32.mxu0 0.0
    %615 = vmatmul.mubr.f32.gmra.mxu0 %v545
    %v616 = vpop.f32.mrf.mxu0
    %v617 = vadd.f32 %v543, %v616
    %v618 = vpop.f32.mrf.mxu0
    %619 = vmatprep.mubr.f32.mxu0 0.0
    %620 = vmatmul.mubr.f32.gmra.mxu0 %v548
    %v621 = vpop.f32.mrf.mxu0
    %v622 = vadd.f32 %v543, %v621
    %v623 = vpop.f32.mrf.mxu0
    %624 = vdwg.mxu0
    %v625 = vadd.f32 %v169, %v617
    %v626 = vadd.f32 %v174, %v622
    %v627 = vsel %vm209, %v625, 0.0
    %628 = vadd.xlane.f32.xlu0 %v627
    %v629 = vpop.xlane.xlu0 %628
    %v630 = vsel %vm209, %v626, 0.0
    %631 = vadd.xlane.f32.xlu0 %v630
    %v632 = vpop.xlane.xlu0 %631
    %v633 = vrcp.pop 32.0
    %v634 = vmul.f32 %v629, %v633
    %v635 = vmul.f32 %v632, %v633
    %v636 = vsub.f32 %v625, %v634
    %v637 = vsub.f32 %v626, %v635
    %v638 = vmul.f32 %v636, %v636
    %v639 = vmul.f32 %v637, %v637
    %v640 = vsel %vm209, %v638, 0.0
    %641 = vadd.xlane.f32.xlu0 %v640
    %v642 = vpop.xlane.xlu0 %641
    %v643 = vsel %vm209, %v639, 0.0
    %644 = vadd.xlane.f32.xlu0 %v643
    %v645 = vpop.xlane.xlu0 %644
    %v646 = vmul.f32 %v642, %v633
    %v647 = vmul.f32 %v645, %v633
    %v648 = vadd.f32 %v646, 1e-05
    %v649 = vadd.f32 %v647, 1e-05
    %v650 = vrsqrt.pop %v648
    %v651 = vrsqrt.pop %v649
    %v652 = vmul.f32 %v636, %v650
    %v653 = vmul.f32 %v637, %v651
    %v654 = vlaneseq
    %v655 = vshrl.u32 %v654, 7
    %v656 = vsub.s32 0, %v655
    %v657 = vrot.slane %v199, %v656
    %v658 = vmul.f32 %v652, %v657
    %v659 = vmul.f32 %v653, %v657
    %v660 = vlaneseq
    %v661 = vshrl.u32 %v660, 7
    %v662 = vsub.s32 0, %v661
    %v663 = vrot.slane %v200, %v662
    %v664 = vadd.f32 %v658, %v663
    %v665 = vadd.f32 %v659, %v663
    %v666 = vlaneseq
    %v667 = vshrl.u32 %v666, 7
    %v668 = vsub.s32 0, %v667
    %v669 = vrot.slane %v201, %v668
    %v671 = vsel %vm209, %v664, 0
    %v674 = vsel %vm209, %v665, 0
    %676 = vmatprep.subr.mxu0 0.0
    %677 = vmatpush1.msra.mxu0 0.0
    %678 = vmatprep.subr.mxu0 0.0
    %679 = vmatpush1.msra.mxu0 0.0
    %680 = vmatprep.subr.mxu0 0.0
    %681 = vmatpush1.msra.mxu0 0.0
    %682 = vmatprep.subr.mxu0 0.0
    %683 = vmatpush1.msra.mxu0 0.0
    %684 = vmatprep.subr.mxu0 0.0
    %685 = vmatpush1.msra.mxu0 0.0
    %686 = vmatprep.subr.mxu0 0.0
    %687 = vmatpush1.msra.mxu0 0.0
    %688 = vmatprep.subr.mxu0 0.0
    %689 = vmatpush1.msra.mxu0 0.0
    %690 = vmatprep.subr.mxu0 0.0
    %691 = vmatpush1.msra.mxu0 0.0
    %692 = vmatprep.subr.mxu0 0.0
    %693 = vmatpush1.msra.mxu0 0.0
    %694 = vmatprep.subr.mxu0 0.0
    %695 = vmatpush1.msra.mxu0 0.0
    %696 = vmatprep.subr.mxu0 0.0
    %697 = vmatpush1.msra.mxu0 0.0
    %698 = vmatprep.subr.mxu0 0.0
    %699 = vmatpush1.msra.mxu0 0.0
    %700 = vmatprep.subr.mxu0 0.0
    %701 = vmatpush1.msra.mxu0 %v188
    %702 = vmatprep.subr.mxu0 0.0
    %703 = vmatpush1.msra.mxu0 %v187
    %704 = vmatprep.subr.mxu0 0.0
    %705 = vmatpush1.msra.mxu0 %v186
    %706 = vmatprep.subr.mxu0 0.0
    %707 = vmatpush1.msra.mxu0 %v185
    %708 = vmatprep.subr.mxu0 0.0
    %709 = vmatpush2.msra.mxu0 0.0
    %710 = vmatprep.subr.mxu0 0.0
    %711 = vmatpush2.msra.mxu0 0.0
    %712 = vmatprep.subr.mxu0 0.0
    %713 = vmatpush2.msra.mxu0 0.0
    %714 = vmatprep.subr.mxu0 0.0
    %715 = vmatpush2.msra.mxu0 0.0
    %716 = vmatprep.subr.mxu0 0.0
    %717 = vmatpush2.msra.mxu0 0.0
    %718 = vmatprep.subr.mxu0 0.0
    %719 = vmatpush2.msra.mxu0 0.0
    %720 = vmatprep.subr.mxu0 0.0
    %721 = vmatpush2.msra.mxu0 0.0
    %722 = vmatprep.subr.mxu0 0.0
    %723 = vmatpush2.msra.mxu0 0.0
    %724 = vmatprep.subr.mxu0 0.0
    %725 = vmatpush2.msra.mxu0 0.0
    %726 = vmatprep.subr.mxu0 0.0
    %727 = vmatpush2.msra.mxu0 0.0
    %728 = vmatprep.subr.mxu0 0.0
    %729 = vmatpush2.msra.mxu0 0.0
    %730 = vmatprep.subr.mxu0 0.0
    %731 = vmatpush2.msra.mxu0 0.0
    %732 = vmatprep.subr.mxu0 0.0
    %733 = vmatpush2.msra.mxu0 0.0
    %734 = vmatprep.subr.mxu0 0.0
    %735 = vmatpush2.msra.mxu0 0.0
    %736 = vmatprep.subr.mxu0 0.0
    %737 = vmatpush2.msra.mxu0 0.0
    %738 = vmatprep.subr.mxu0 0.0
    %739 = vmatpush2.msra.mxu0 0.0
    %740 = vmatprep.mubr.f32.mxu0 0.0
    %741 = vmatmul.mubr.f32.gmra.mxu0 %v671
    %v742 = vpop.f32.mrf.mxu0
    %v743 = vadd.f32 %v669, %v742
    %v744 = vpop.f32.mrf.mxu0
    %745 = vmatprep.mubr.f32.mxu0 0.0
    %746 = vmatmul.mubr.f32.gmra.mxu0 %v674
    %v747 = vpop.f32.mrf.mxu0
    %v748 = vadd.f32 %v669, %v747
    %v749 = vpop.f32.mrf.mxu0
    %750 = vdwg.mxu0
    %v751 = vmax.f32 %v743, 0.0
    %v752 = vmax.f32 %v748, 0.0
    %v753 = vlaneseq
    %v754 = vshrl.u32 %v753, 7
    %v755 = vsub.s32 0, %v754
    %v756 = vrot.slane %v202, %v755
    %vm757 = vcmask 523264
    %v759 = vsel %vm757, %v751, 0
    %v762 = vsel %vm757, %v752, 0
    %764 = vmatprep.subr.mxu0 0.0
    %765 = vmatpush1.msra.mxu0 0.0
    %766 = vmatprep.subr.mxu0 0.0
    %767 = vmatpush1.msra.mxu0 0.0
    %768 = vmatprep.subr.mxu0 0.0
    %769 = vmatpush1.msra.mxu0 0.0
    %770 = vmatprep.subr.mxu0 0.0
    %771 = vmatpush1.msra.mxu0 0.0
    %772 = vmatprep.subr.mxu0 0.0
    %773 = vmatpush1.msra.mxu0 0.0
    %774 = vmatprep.subr.mxu0 0.0
    %775 = vmatpush1.msra.mxu0 0.0
    %776 = vmatprep.subr.mxu0 0.0
    %777 = vmatpush1.msra.mxu0 0.0
    %778 = vmatprep.subr.mxu0 0.0
    %779 = vmatpush1.msra.mxu0 0.0
    %780 = vmatprep.subr.mxu0 0.0
    %781 = vmatpush1.msra.mxu0 %v196
    %782 = vmatprep.subr.mxu0 0.0
    %783 = vmatpush1.msra.mxu0 %v195
    %784 = vmatprep.subr.mxu0 0.0
    %785 = vmatpush1.msra.mxu0 %v194
    %786 = vmatprep.subr.mxu0 0.0
    %787 = vmatpush1.msra.mxu0 %v193
    %788 = vmatprep.subr.mxu0 0.0
    %789 = vmatpush1.msra.mxu0 %v192
    %790 = vmatprep.subr.mxu0 0.0
    %791 = vmatpush1.msra.mxu0 %v191
    %792 = vmatprep.subr.mxu0 0.0
    %793 = vmatpush1.msra.mxu0 %v190
    %794 = vmatprep.subr.mxu0 0.0
    %795 = vmatpush1.msra.mxu0 %v189
    %796 = vmatprep.subr.mxu0 0.0
    %797 = vmatpush2.msra.mxu0 0.0
    %798 = vmatprep.subr.mxu0 0.0
    %799 = vmatpush2.msra.mxu0 0.0
    %800 = vmatprep.subr.mxu0 0.0
    %801 = vmatpush2.msra.mxu0 0.0
    %802 = vmatprep.subr.mxu0 0.0
    %803 = vmatpush2.msra.mxu0 0.0
    %804 = vmatprep.subr.mxu0 0.0
    %805 = vmatpush2.msra.mxu0 0.0
    %806 = vmatprep.subr.mxu0 0.0
    %807 = vmatpush2.msra.mxu0 0.0
    %808 = vmatprep.subr.mxu0 0.0
    %809 = vmatpush2.msra.mxu0 0.0
    %810 = vmatprep.subr.mxu0 0.0
    %811 = vmatpush2.msra.mxu0 0.0
    %812 = vmatprep.subr.mxu0 0.0
    %813 = vmatpush2.msra.mxu0 0.0
    %814 = vmatprep.subr.mxu0 0.0
    %815 = vmatpush2.msra.mxu0 0.0
    %816 = vmatprep.subr.mxu0 0.0
    %817 = vmatpush2.msra.mxu0 0.0
    %818 = vmatprep.subr.mxu0 0.0
    %819 = vmatpush2.msra.mxu0 0.0
    %820 = vmatprep.subr.mxu0 0.0
    %821 = vmatpush2.msra.mxu0 0.0
    %822 = vmatprep.subr.mxu0 0.0
    %823 = vmatpush2.msra.mxu0 0.0
    %824 = vmatprep.subr.mxu0 0.0
    %825 = vmatpush2.msra.mxu0 0.0
    %826 = vmatprep.subr.mxu0 0.0
    %827 = vmatpush2.msra.mxu0 0.0
    %828 = vmatprep.mubr.f32.mxu0 0.0
    %829 = vmatmul.mubr.f32.gmra.mxu0 %v759
    %v830 = vpop.f32.mrf.mxu0
    %v831 = vadd.f32 %v756, %v830
    %v832 = vpop.f32.mrf.mxu0
    %833 = vmatprep.mubr.f32.mxu0 0.0
    %834 = vmatmul.mubr.f32.gmra.mxu0 %v762
    %v835 = vpop.f32.mrf.mxu0
    %v836 = vadd.f32 %v756, %v835
    %v837 = vpop.f32.mrf.mxu0
    %838 = vdwg.mxu0
    %v839 = vadd.f32 %v664, %v831
    %v840 = vadd.f32 %v665, %v836
    %v841 = vsel %vm209, %v839, 0.0
    %842 = vadd.xlane.f32.xlu0 %v841
    %v843 = vpop.xlane.xlu0 %842
    %v844 = vsel %vm209, %v840, 0.0
    %845 = vadd.xlane.f32.xlu0 %v844
    %v846 = vpop.xlane.xlu0 %845
    %v847 = vmul.f32 %v843, %v633
    %v848 = vmul.f32 %v846, %v633
    %v849 = vsub.f32 %v839, %v847
    %v850 = vsub.f32 %v840, %v848
    %v851 = vmul.f32 %v849, %v849
    %v852 = vmul.f32 %v850, %v850
    %v853 = vsel %vm209, %v851, 0.0
    %854 = vadd.xlane.f32.xlu0 %v853
    %v855 = vpop.xlane.xlu0 %854
    %v856 = vsel %vm209, %v852, 0.0
    %857 = vadd.xlane.f32.xlu0 %v856
    %v858 = vpop.xlane.xlu0 %857
    %v859 = vmul.f32 %v855, %v633
    %v860 = vmul.f32 %v858, %v633
    %v861 = vadd.f32 %v859, 1e-05
    %v862 = vadd.f32 %v860, 1e-05
    %v863 = vrsqrt.pop %v861
    %v864 = vrsqrt.pop %v862
    %v865 = vmul.f32 %v849, %v863
    %v866 = vmul.f32 %v850, %v864
    %v867 = vlaneseq
    %v868 = vshrl.u32 %v867, 7
    %v869 = vsub.s32 0, %v868
    %v870 = vrot.slane %v203, %v869
    %v871 = vmul.f32 %v865, %v870
    %v872 = vmul.f32 %v866, %v870
    %v873 = vlaneseq
    %v874 = vshrl.u32 %v873, 7
    %v875 = vsub.s32 0, %v874
    %v876 = vrot.slane %v204, %v875
    %v877 = vadd.f32 %v871, %v876
    %v878 = vadd.f32 %v872, %v876
    %s879 = scalar_lea.vmem [#allocation2], 160
    %v880 = vld [vmem:[%s879] sm:$0xff]
    %v881 = vld [vmem:[%s879 + $0x8] sm:$0xff]
    %v882 = vld [vmem:[%s879 + $0x10] sm:$0xff]
    %v883 = vld [vmem:[%s879 + $0x18] sm:$0xff]
    %v884 = vld [vmem:[%s879 + $0x20] sm:$0xff]
    %v885 = vld [vmem:[%s879 + $0x28] sm:$0xff]
    %v886 = vld [vmem:[%s879 + $0x30] sm:$0xff]
    %v887 = vld [vmem:[%s879 + $0x38] sm:$0xff]
    %v888 = vld [vmem:[%s879 + $0x40] sm:$0xff]
    %v889 = vld [vmem:[%s879 + $0x48] sm:$0xff]
    %v890 = vld [vmem:[%s879 + $0x50] sm:$0xff]
    %v891 = vld [vmem:[%s879 + $0x58] sm:$0xff]
    %v892 = vld [vmem:[%s879 + $0x60] sm:$0xff]
    %v893 = vld [vmem:[%s879 + $0x68] sm:$0xff]
    %v894 = vld [vmem:[%s879 + $0x70] sm:$0xff]
    %v895 = vld [vmem:[%s879 + $0x78] sm:$0xff]
    %v896 = vld [vmem:[%s879 + $0x80] sm:$0xff]
    %v897 = vld [vmem:[%s879 + $0x88] sm:$0xff]
    %v898 = vld [vmem:[%s879 + $0x90] sm:$0xff]
    %v899 = vld [vmem:[%s879 + $0x98] sm:$0xff]
    %s900 = scalar_lea.vmem %s2, 8
    %v901 = vld [vmem:[%s900] sm:$0x1]
    %v902 = vld [vmem:[%s900 + $0x1] sm:$0x1]
    %v903 = vld [vmem:[%s900 + $0x2] sm:$0x1]
    %v904 = vld [vmem:[%s900 + $0x3] sm:$0x1]
    %v905 = vld [vmem:[%s900 + $0x4] sm:$0x1]
    %v906 = vld [vmem:[%s900 + $0x5] sm:$0x1]
    %v907 = vld [vmem:[%s900 + $0x6] sm:$0x1]
    %v908 = vld [vmem:[%s900 + $0x7] sm:$0x1]
    %v909 = vlaneseq
    %v910 = vshrl.u32 %v909, 7
    %v911 = vsub.s32 0, %v910
    %v912 = vrot.slane %v901, %v911
    %v914 = vsel %vm209, %v877, 0
    %v917 = vsel %vm209, %v878, 0
    %919 = vmatprep.subr.mxu0 0.0
    %920 = vmatpush1.msra.mxu0 0.0
    %921 = vmatprep.subr.mxu0 0.0
    %922 = vmatpush1.msra.mxu0 0.0
    %923 = vmatprep.subr.mxu0 0.0
    %924 = vmatpush1.msra.mxu0 0.0
    %925 = vmatprep.subr.mxu0 0.0
    %926 = vmatpush1.msra.mxu0 0.0
    %927 = vmatprep.subr.mxu0 0.0
    %928 = vmatpush1.msra.mxu0 0.0
    %929 = vmatprep.subr.mxu0 0.0
    %930 = vmatpush1.msra.mxu0 0.0
    %931 = vmatprep.subr.mxu0 0.0
    %932 = vmatpush1.msra.mxu0 0.0
    %933 = vmatprep.subr.mxu0 0.0
    %934 = vmatpush1.msra.mxu0 0.0
    %935 = vmatprep.subr.mxu0 0.0
    %936 = vmatpush1.msra.mxu0 0.0
    %937 = vmatprep.subr.mxu0 0.0
    %938 = vmatpush1.msra.mxu0 0.0
    %939 = vmatprep.subr.mxu0 0.0
    %940 = vmatpush1.msra.mxu0 0.0
    %941 = vmatprep.subr.mxu0 0.0
    %942 = vmatpush1.msra.mxu0 0.0
    %943 = vmatprep.subr.mxu0 0.0
    %944 = vmatpush1.msra.mxu0 %v883
    %945 = vmatprep.subr.mxu0 0.0
    %946 = vmatpush1.msra.mxu0 %v882
    %947 = vmatprep.subr.mxu0 0.0
    %948 = vmatpush1.msra.mxu0 %v881
    %949 = vmatprep.subr.mxu0 0.0
    %950 = vmatpush1.msra.mxu0 %v880
    %951 = vmatprep.subr.mxu0 0.0
    %952 = vmatpush2.msra.mxu0 0.0
    %953 = vmatprep.subr.mxu0 0.0
    %954 = vmatpush2.msra.mxu0 0.0
    %955 = vmatprep.subr.mxu0 0.0
    %956 = vmatpush2.msra.mxu0 0.0
    %957 = vmatprep.subr.mxu0 0.0
    %958 = vmatpush2.msra.mxu0 0.0
    %959 = vmatprep.subr.mxu0 0.0
    %960 = vmatpush2.msra.mxu0 0.0
    %961 = vmatprep.subr.mxu0 0.0
    %962 = vmatpush2.msra.mxu0 0.0
    %963 = vmatprep.subr.mxu0 0.0
    %964 = vmatpush2.msra.mxu0 0.0
    %965 = vmatprep.subr.mxu0 0.0
    %966 = vmatpush2.msra.mxu0 0.0
    %967 = vmatprep.subr.mxu0 0.0
    %968 = vmatpush2.msra.mxu0 0.0
    %969 = vmatprep.subr.mxu0 0.0
    %970 = vmatpush2.msra.mxu0 0.0
    %971 = vmatprep.subr.mxu0 0.0
    %972 = vmatpush2.msra.mxu0 0.0
    %973 = vmatprep.subr.mxu0 0.0
    %974 = vmatpush2.msra.mxu0 0.0
    %975 = vmatprep.subr.mxu0 0.0
    %976 = vmatpush2.msra.mxu0 0.0
    %977 = vmatprep.subr.mxu0 0.0
    %978 = vmatpush2.msra.mxu0 0.0
    %979 = vmatprep.subr.mxu0 0.0
    %980 = vmatpush2.msra.mxu0 0.0
    %981 = vmatprep.subr.mxu0 0.0
    %982 = vmatpush2.msra.mxu0 0.0
    %983 = vmatprep.mubr.f32.mxu0 0.0
    %984 = vmatmul.mubr.f32.gmra.mxu0 %v914
    %v985 = vpop.f32.mrf.mxu0
    %v986 = vadd.f32 %v912, %v985
    %v987 = vpop.f32.mrf.mxu0
    %988 = vmatprep.mubr.f32.mxu0 0.0
    %989 = vmatmul.mubr.f32.gmra.mxu0 %v917
    %v990 = vpop.f32.mrf.mxu0
    %v991 = vadd.f32 %v912, %v990
    %v992 = vpop.f32.mrf.mxu0
    %993 = vdwg.mxu0
    %996 = vrot.lane.b32.xlu0 %v986, 96
    %v997 = vpop.permute.xlu0 %996
    %998 = vrot.lane.b32.xlu0 %v991, 96
    %v999 = vpop.permute.xlu0 %998
    %v1002 = vmul.f32 %v986, %v997
    %v1003 = vmul.f32 %v991, %v999
    %v1004 = vmul.f32 %v986, %v999
    %v1005 = vmul.f32 %v991, %v997
    %v1007 = vsel %vm209, %v1002, 0
    %v1010 = vsel %vm209, %v1003, 0
    %v1013 = vsel %vm209, %v1004, 0
    %v1016 = vsel %vm209, %v1005, 0
    %1018 = vmatprep.subr.mxu0 0.0
    %1019 = vmatpush1.msra.mxu0 0.0
    %1020 = vmatprep.subr.mxu0 0.0
    %1021 = vmatpush1.msra.mxu0 0.0
    %1022 = vmatprep.subr.mxu0 0.0
    %1023 = vmatpush1.msra.mxu0 0.0
    %1024 = vmatprep.subr.mxu0 0.0
    %1025 = vmatpush1.msra.mxu0 0.0
    %1026 = vmatprep.subr.mxu0 0.0
    %1027 = vmatpush1.msra.mxu0 0.0
    %1028 = vmatprep.subr.mxu0 0.0
    %1029 = vmatpush1.msra.mxu0 0.0
    %1030 = vmatprep.subr.mxu0 0.0
    %1031 = vmatpush1.msra.mxu0 0.0
    %1032 = vmatprep.subr.mxu0 0.0
    %1033 = vmatpush1.msra.mxu0 0.0
    %1034 = vmatprep.subr.mxu0 0.0
    %1035 = vmatpush1.msra.mxu0 0.0
    %1036 = vmatprep.subr.mxu0 0.0
    %1037 = vmatpush1.msra.mxu0 0.0
    %1038 = vmatprep.subr.mxu0 0.0
    %1039 = vmatpush1.msra.mxu0 0.0
    %1040 = vmatprep.subr.mxu0 0.0
    %1041 = vmatpush1.msra.mxu0 0.0
    %1042 = vmatprep.subr.mxu0 0.0
    %1043 = vmatpush1.msra.mxu0 %v80
    %1044 = vmatprep.subr.mxu0 0.0
    %1045 = vmatpush1.msra.mxu0 %v79
    %1046 = vmatprep.subr.mxu0 0.0
    %1047 = vmatpush1.msra.mxu0 %v78
    %1048 = vmatprep.subr.mxu0 0.0
    %1049 = vmatpush1.msra.mxu0 %v77
    %1050 = vmatprep.subr.mxu0 0.0
    %1051 = vmatpush2.msra.mxu0 0.0
    %1052 = vmatprep.subr.mxu0 0.0
    %1053 = vmatpush2.msra.mxu0 0.0
    %1054 = vmatprep.subr.mxu0 0.0
    %1055 = vmatpush2.msra.mxu0 0.0
    %1056 = vmatprep.subr.mxu0 0.0
    %1057 = vmatpush2.msra.mxu0 0.0
    %1058 = vmatprep.subr.mxu0 0.0
    %1059 = vmatpush2.msra.mxu0 0.0
    %1060 = vmatprep.subr.mxu0 0.0
    %1061 = vmatpush2.msra.mxu0 0.0
    %1062 = vmatprep.subr.mxu0 0.0
    %1063 = vmatpush2.msra.mxu0 0.0
    %1064 = vmatprep.subr.mxu0 0.0
    %1065 = vmatpush2.msra.mxu0 0.0
    %1066 = vmatprep.subr.mxu0 0.0
    %1067 = vmatpush2.msra.mxu0 0.0
    %1068 = vmatprep.subr.mxu0 0.0
    %1069 = vmatpush2.msra.mxu0 0.0
    %1070 = vmatprep.subr.mxu0 0.0
    %1071 = vmatpush2.msra.mxu0 0.0
    %1072 = vmatprep.subr.mxu0 0.0
    %1073 = vmatpush2.msra.mxu0 0.0
    %1074 = vmatprep.subr.mxu0 0.0
    %1075 = vmatpush2.msra.mxu0 0.0
    %1076 = vmatprep.subr.mxu0 0.0
    %1077 = vmatpush2.msra.mxu0 0.0
    %1078 = vmatprep.subr.mxu0 0.0
    %1079 = vmatpush2.msra.mxu0 0.0
    %1080 = vmatprep.subr.mxu0 0.0
    %1081 = vmatpush2.msra.mxu0 0.0
    %1082 = vmatprep.mubr.f32.mxu0 0.0
    %1083 = vmatmul.mubr.f32.gmra.mxu0 %v1007
    %v1084 = vpop.f32.mrf.mxu0
    %v1085 = vadd.f32 0.0, %v1084
    %v1086 = vpop.f32.mrf.mxu0
    %1087 = vmatprep.mubr.f32.mxu0 0.0
    %1088 = vmatmul.mubr.f32.gmra.mxu0 %v1010
    %v1089 = vpop.f32.mrf.mxu0
    %v1090 = vadd.f32 0.0, %v1089
    %v1091 = vpop.f32.mrf.mxu0
    %1092 = vmatprep.mubr.f32.mxu0 0.0
    %1093 = vmatmul.mubr.f32.gmra.mxu0 %v1013
    %v1094 = vpop.f32.mrf.mxu0
    %v1095 = vadd.f32 0.0, %v1094
    %v1096 = vpop.f32.mrf.mxu0
    %1097 = vmatprep.mubr.f32.mxu0 0.0
    %1098 = vmatmul.mubr.f32.gmra.mxu0 %v1016
    %v1099 = vpop.f32.mrf.mxu0
    %v1100 = vadd.f32 0.0, %v1099
    %v1101 = vpop.f32.mrf.mxu0
    %1102 = vdwg.mxu0
    %v1103 = vmul.f32 %v1085, 0.35355338
    %v1104 = vmul.f32 %v1090, 0.35355338
    %v1105 = vmul.f32 %v1095, 0.35355338
    %v1106 = vmul.f32 %v1100, 0.35355338
    %v1107 = vmax.f32 %v1103, %v1105
    %v1108 = vmax.f32 %v1104, %v1106
    %v1109 = vsub.f32 %v1103, %v1107
    %v1110 = vsub.f32 %v1104, %v1108
    %v1111 = vmul.f32 %v1109, 1.442695
    %v1112 = vpow.pop %v1111
    %v1113 = vmul.f32 %v1110, 1.442695
    %v1114 = vpow.pop %v1113
    %v1115 = vsub.f32 %v1105, %v1107
    %v1116 = vsub.f32 %v1106, %v1108
    %v1117 = vmul.f32 %v1115, 1.442695
    %v1118 = vpow.pop %v1117
    %v1119 = vmul.f32 %v1116, 1.442695
    %v1120 = vpow.pop %v1119
    %v1121 = vadd.f32 %v1112, %v1118
    %v1122 = vadd.f32 %v1114, %v1120
    %v1123 = vrcp.pop %v1121
    %v1124 = vrcp.pop %v1122
    %v1125 = vmul.f32 %v1112, %v1123
    %v1126 = vmul.f32 %v1114, %v1124
    %v1127 = vmul.f32 %v1118, %v1123
    %v1128 = vmul.f32 %v1120, %v1124
    %v1130 = vsel %vm426, %v1125, 0
    %v1133 = vsel %vm426, %v1126, 0
    %v1136 = vsel %vm426, %v1127, 0
    %v1139 = vsel %vm426, %v1128, 0
    %1141 = vmatprep.subr.mxu0 0.0
    %1142 = vmatpush1.msra.mxu0 0.0
    %1143 = vmatprep.subr.mxu0 0.0
    %1144 = vmatpush1.msra.mxu0 0.0
    %1145 = vmatprep.subr.mxu0 0.0
    %1146 = vmatpush1.msra.mxu0 0.0
    %1147 = vmatprep.subr.mxu0 0.0
    %1148 = vmatpush1.msra.mxu0 0.0
    %1149 = vmatprep.subr.mxu0 0.0
    %1150 = vmatpush1.msra.mxu0 0.0
    %1151 = vmatprep.subr.mxu0 0.0
    %1152 = vmatpush1.msra.mxu0 0.0
    %1153 = vmatprep.subr.mxu0 0.0
    %1154 = vmatpush1.msra.mxu0 0.0
    %1155 = vmatprep.subr.mxu0 0.0
    %1156 = vmatpush1.msra.mxu0 0.0
    %1157 = vmatprep.subr.mxu0 0.0
    %1158 = vmatpush1.msra.mxu0 0.0
    %1159 = vmatprep.subr.mxu0 0.0
    %1160 = vmatpush1.msra.mxu0 0.0
    %1161 = vmatprep.subr.mxu0 0.0
    %1162 = vmatpush1.msra.mxu0 0.0
    %1163 = vmatprep.subr.mxu0 0.0
    %1164 = vmatpush1.msra.mxu0 0.0
    %1165 = vmatprep.subr.mxu0 0.0
    %1166 = vmatpush1.msra.mxu0 0.0
    %1167 = vmatprep.subr.mxu0 0.0
    %1168 = vmatpush1.msra.mxu0 0.0
    %1169 = vmatprep.subr.mxu0 0.0
    %1170 = vmatpush1.msra.mxu0 0.0
    %1171 = vmatprep.subr.mxu0 0.0
    %1172 = vmatpush1.msra.mxu0 %v441
    %1173 = vmatprep.subr.mxu0 0.0
    %1174 = vmatpush2.msra.mxu0 0.0
    %1175 = vmatprep.subr.mxu0 0.0
    %1176 = vmatpush2.msra.mxu0 0.0
    %1177 = vmatprep.subr.mxu0 0.0
    %1178 = vmatpush2.msra.mxu0 0.0
    %1179 = vmatprep.subr.mxu0 0.0
    %1180 = vmatpush2.msra.mxu0 0.0
    %1181 = vmatprep.subr.mxu0 0.0
    %1182 = vmatpush2.msra.mxu0 0.0
    %1183 = vmatprep.subr.mxu0 0.0
    %1184 = vmatpush2.msra.mxu0 0.0
    %1185 = vmatprep.subr.mxu0 0.0
    %1186 = vmatpush2.msra.mxu0 0.0
    %1187 = vmatprep.subr.mxu0 0.0
    %1188 = vmatpush2.msra.mxu0 0.0
    %1189 = vmatprep.subr.mxu0 0.0
    %1190 = vmatpush2.msra.mxu0 0.0
    %1191 = vmatprep.subr.mxu0 0.0
    %1192 = vmatpush2.msra.mxu0 0.0
    %1193 = vmatprep.subr.mxu0 0.0
    %1194 = vmatpush2.msra.mxu0 0.0
    %1195 = vmatprep.subr.mxu0 0.0
    %1196 = vmatpush2.msra.mxu0 0.0
    %1197 = vmatprep.subr.mxu0 0.0
    %1198 = vmatpush2.msra.mxu0 0.0
    %1199 = vmatprep.subr.mxu0 0.0
    %1200 = vmatpush2.msra.mxu0 0.0
    %1201 = vmatprep.subr.mxu0 0.0
    %1202 = vmatpush2.msra.mxu0 0.0
    %1203 = vmatprep.subr.mxu0 0.0
    %1204 = vmatpush2.msra.mxu0 0.0
    %1205 = vmatprep.mubr.f32.mxu0 0.0
    %1206 = vmatmul.mubr.f32.gmra.mxu0 %v1130
    %v1207 = vpop.f32.mrf.mxu0
    %v1208 = vadd.f32 0.0, %v1207
    %v1209 = vpop.f32.mrf.mxu0
    %1210 = vmatprep.mubr.f32.mxu0 0.0
    %1211 = vmatmul.mubr.f32.gmra.mxu0 %v1133
    %v1212 = vpop.f32.mrf.mxu0
    %v1213 = vadd.f32 0.0, %v1212
    %v1214 = vpop.f32.mrf.mxu0
    %1215 = vmatprep.mubr.f32.mxu0 0.0
    %1216 = vmatmul.mubr.f32.gmra.mxu0 %v1136
    %v1217 = vpop.f32.mrf.mxu0
    %v1218 = vadd.f32 0.0, %v1217
    %v1219 = vpop.f32.mrf.mxu0
    %1220 = vmatprep.mubr.f32.mxu0 0.0
    %1221 = vmatmul.mubr.f32.gmra.mxu0 %v1139
    %v1222 = vpop.f32.mrf.mxu0
    %v1223 = vadd.f32 0.0, %v1222
    %v1224 = vpop.f32.mrf.mxu0
    %1225 = vdwg.mxu0
    %1226 = vrot.lane.b32.xlu0 %v986, 64
    %v1227 = vpop.permute.xlu0 %1226
    %1228 = vrot.lane.b32.xlu0 %v991, 64
    %v1229 = vpop.permute.xlu0 %1228
    %v1232 = vmul.f32 %v1208, %v1227
    %v1233 = vmul.f32 %v1213, %v1229
    %v1234 = vmul.f32 %v1218, %v1229
    %v1235 = vmul.f32 %v1223, %v1227
    %v1236 = vadd.f32 %v1232, %v1234
    %v1237 = vadd.f32 %v1233, %v1235
    %v1238 = vlaneseq
    %v1239 = vshrl.u32 %v1238, 7
    %v1240 = vsub.s32 0, %v1239
    %v1241 = vrot.slane %v902, %v1240
    %v1243 = vsel %vm209, %v1236, 0
    %v1246 = vsel %vm209, %v1237, 0
    %1248 = vmatprep.subr.mxu0 0.0
    %1249 = vmatpush1.msra.mxu0 0.0
    %1250 = vmatprep.subr.mxu0 0.0
    %1251 = vmatpush1.msra.mxu0 0.0
    %1252 = vmatprep.subr.mxu0 0.0
    %1253 = vmatpush1.msra.mxu0 0.0
    %1254 = vmatprep.subr.mxu0 0.0
    %1255 = vmatpush1.msra.mxu0 0.0
    %1256 = vmatprep.subr.mxu0 0.0
    %1257 = vmatpush1.msra.mxu0 0.0
    %1258 = vmatprep.subr.mxu0 0.0
    %1259 = vmatpush1.msra.mxu0 0.0
    %1260 = vmatprep.subr.mxu0 0.0
    %1261 = vmatpush1.msra.mxu0 0.0
    %1262 = vmatprep.subr.mxu0 0.0
    %1263 = vmatpush1.msra.mxu0 0.0
    %1264 = vmatprep.subr.mxu0 0.0
    %1265 = vmatpush1.msra.mxu0 0.0
    %1266 = vmatprep.subr.mxu0 0.0
    %1267 = vmatpush1.msra.mxu0 0.0
    %1268 = vmatprep.subr.mxu0 0.0
    %1269 = vmatpush1.msra.mxu0 0.0
    %1270 = vmatprep.subr.mxu0 0.0
    %1271 = vmatpush1.msra.mxu0 0.0
    %1272 = vmatprep.subr.mxu0 0.0
    %1273 = vmatpush1.msra.mxu0 %v887
    %1274 = vmatprep.subr.mxu0 0.0
    %1275 = vmatpush1.msra.mxu0 %v886
    %1276 = vmatprep.subr.mxu0 0.0
    %1277 = vmatpush1.msra.mxu0 %v885
    %1278 = vmatprep.subr.mxu0 0.0
    %1279 = vmatpush1.msra.mxu0 %v884
    %1280 = vmatprep.subr.mxu0 0.0
    %1281 = vmatpush2.msra.mxu0 0.0
    %1282 = vmatprep.subr.mxu0 0.0
    %1283 = vmatpush2.msra.mxu0 0.0
    %1284 = vmatprep.subr.mxu0 0.0
    %1285 = vmatpush2.msra.mxu0 0.0
    %1286 = vmatprep.subr.mxu0 0.0
    %1287 = vmatpush2.msra.mxu0 0.0
    %1288 = vmatprep.subr.mxu0 0.0
    %1289 = vmatpush2.msra.mxu0 0.0
    %1290 = vmatprep.subr.mxu0 0.0
    %1291 = vmatpush2.msra.mxu0 0.0
    %1292 = vmatprep.subr.mxu0 0.0
    %1293 = vmatpush2.msra.mxu0 0.0
    %1294 = vmatprep.subr.mxu0 0.0
    %1295 = vmatpush2.msra.mxu0 0.0
    %1296 = vmatprep.subr.mxu0 0.0
    %1297 = vmatpush2.msra.mxu0 0.0
    %1298 = vmatprep.subr.mxu0 0.0
    %1299 = vmatpush2.msra.mxu0 0.0
    %1300 = vmatprep.subr.mxu0 0.0
    %1301 = vmatpush2.msra.mxu0 0.0
    %1302 = vmatprep.subr.mxu0 0.0
    %1303 = vmatpush2.msra.mxu0 0.0
    %1304 = vmatprep.subr.mxu0 0.0
    %1305 = vmatpush2.msra.mxu0 0.0
    %1306 = vmatprep.subr.mxu0 0.0
    %1307 = vmatpush2.msra.mxu0 0.0
    %1308 = vmatprep.subr.mxu0 0.0
    %1309 = vmatpush2.msra.mxu0 0.0
    %1310 = vmatprep.subr.mxu0 0.0
    %1311 = vmatpush2.msra.mxu0 0.0
    %1312 = vmatprep.mubr.f32.mxu0 0.0
    %1313 = vmatmul.mubr.f32.gmra.mxu0 %v1243
    %v1314 = vpop.f32.mrf.mxu0
    %v1315 = vadd.f32 %v1241, %v1314
    %v1316 = vpop.f32.mrf.mxu0
    %1317 = vmatprep.mubr.f32.mxu0 0.0
    %1318 = vmatmul.mubr.f32.gmra.mxu0 %v1246
    %v1319 = vpop.f32.mrf.mxu0
    %v1320 = vadd.f32 %v1241, %v1319
    %v1321 = vpop.f32.mrf.mxu0
    %1322 = vdwg.mxu0
    %v1323 = vadd.f32 %v877, %v1315
    %v1324 = vadd.f32 %v878, %v1320
    %v1325 = vsel %vm209, %v1323, 0.0
    %1326 = vadd.xlane.f32.xlu0 %v1325
    %v1327 = vpop.xlane.xlu0 %1326
    %v1328 = vsel %vm209, %v1324, 0.0
    %1329 = vadd.xlane.f32.xlu0 %v1328
    %v1330 = vpop.xlane.xlu0 %1329
    %v1331 = vmul.f32 %v1327, %v633
    %v1332 = vmul.f32 %v1330, %v633
    %v1333 = vsub.f32 %v1323, %v1331
    %v1334 = vsub.f32 %v1324, %v1332
    %v1335 = vmul.f32 %v1333, %v1333
    %v1336 = vmul.f32 %v1334, %v1334
    %v1337 = vsel %vm209, %v1335, 0.0
    %1338 = vadd.xlane.f32.xlu0 %v1337
    %v1339 = vpop.xlane.xlu0 %1338
    %v1340 = vsel %vm209, %v1336, 0.0
    %1341 = vadd.xlane.f32.xlu0 %v1340
    %v1342 = vpop.xlane.xlu0 %1341
    %v1343 = vmul.f32 %v1339, %v633
    %v1344 = vmul.f32 %v1342, %v633
    %v1345 = vadd.f32 %v1343, 1e-05
    %v1346 = vadd.f32 %v1344, 1e-05
    %v1347 = vrsqrt.pop %v1345
    %v1348 = vrsqrt.pop %v1346
    %v1349 = vmul.f32 %v1333, %v1347
    %v1350 = vmul.f32 %v1334, %v1348
    %v1351 = vlaneseq
    %v1352 = vshrl.u32 %v1351, 7
    %v1353 = vsub.s32 0, %v1352
    %v1354 = vrot.slane %v903, %v1353
    %v1355 = vmul.f32 %v1349, %v1354
    %v1356 = vmul.f32 %v1350, %v1354
    %v1357 = vlaneseq
    %v1358 = vshrl.u32 %v1357, 7
    %v1359 = vsub.s32 0, %v1358
    %v1360 = vrot.slane %v904, %v1359
    %v1361 = vadd.f32 %v1355, %v1360
    %v1362 = vadd.f32 %v1356, %v1360
    %v1363 = vlaneseq
    %v1364 = vshrl.u32 %v1363, 7
    %v1365 = vsub.s32 0, %v1364
    %v1366 = vrot.slane %v905, %v1365
    %v1368 = vsel %vm209, %v1361, 0
    %v1371 = vsel %vm209, %v1362, 0
    %1373 = vmatprep.subr.mxu0 0.0
    %1374 = vmatpush1.msra.mxu0 0.0
    %1375 = vmatprep.subr.mxu0 0.0
    %1376 = vmatpush1.msra.mxu0 0.0
    %1377 = vmatprep.subr.mxu0 0.0
    %1378 = vmatpush1.msra.mxu0 0.0
    %1379 = vmatprep.subr.mxu0 0.0
    %1380 = vmatpush1.msra.mxu0 0.0
    %1381 = vmatprep.subr.mxu0 0.0
    %1382 = vmatpush1.msra.mxu0 0.0
    %1383 = vmatprep.subr.mxu0 0.0
    %1384 = vmatpush1.msra.mxu0 0.0
    %1385 = vmatprep.subr.mxu0 0.0
    %1386 = vmatpush1.msra.mxu0 0.0
    %1387 = vmatprep.subr.mxu0 0.0
    %1388 = vmatpush1.msra.mxu0 0.0
    %1389 = vmatprep.subr.mxu0 0.0
    %1390 = vmatpush1.msra.mxu0 0.0
    %1391 = vmatprep.subr.mxu0 0.0
    %1392 = vmatpush1.msra.mxu0 0.0
    %1393 = vmatprep.subr.mxu0 0.0
    %1394 = vmatpush1.msra.mxu0 0.0
    %1395 = vmatprep.subr.mxu0 0.0
    %1396 = vmatpush1.msra.mxu0 0.0
    %1397 = vmatprep.subr.mxu0 0.0
    %1398 = vmatpush1.msra.mxu0 %v891
    %1399 = vmatprep.subr.mxu0 0.0
    %1400 = vmatpush1.msra.mxu0 %v890
    %1401 = vmatprep.subr.mxu0 0.0
    %1402 = vmatpush1.msra.mxu0 %v889
    %1403 = vmatprep.subr.mxu0 0.0
    %1404 = vmatpush1.msra.mxu0 %v888
    %1405 = vmatprep.subr.mxu0 0.0
    %1406 = vmatpush2.msra.mxu0 0.0
    %1407 = vmatprep.subr.mxu0 0.0
    %1408 = vmatpush2.msra.mxu0 0.0
    %1409 = vmatprep.subr.mxu0 0.0
    %1410 = vmatpush2.msra.mxu0 0.0
    %1411 = vmatprep.subr.mxu0 0.0
    %1412 = vmatpush2.msra.mxu0 0.0
    %1413 = vmatprep.subr.mxu0 0.0
    %1414 = vmatpush2.msra.mxu0 0.0
    %1415 = vmatprep.subr.mxu0 0.0
    %1416 = vmatpush2.msra.mxu0 0.0
    %1417 = vmatprep.subr.mxu0 0.0
    %1418 = vmatpush2.msra.mxu0 0.0
    %1419 = vmatprep.subr.mxu0 0.0
    %1420 = vmatpush2.msra.mxu0 0.0
    %1421 = vmatprep.subr.mxu0 0.0
    %1422 = vmatpush2.msra.mxu0 0.0
    %1423 = vmatprep.subr.mxu0 0.0
    %1424 = vmatpush2.msra.mxu0 0.0
    %1425 = vmatprep.subr.mxu0 0.0
    %1426 = vmatpush2.msra.mxu0 0.0
    %1427 = vmatprep.subr.mxu0 0.0
    %1428 = vmatpush2.msra.mxu0 0.0
    %1429 = vmatprep.subr.mxu0 0.0
    %1430 = vmatpush2.msra.mxu0 0.0
    %1431 = vmatprep.subr.mxu0 0.0
    %1432 = vmatpush2.msra.mxu0 0.0
    %1433 = vmatprep.subr.mxu0 0.0
    %1434 = vmatpush2.msra.mxu0 0.0
    %1435 = vmatprep.subr.mxu0 0.0
    %1436 = vmatpush2.msra.mxu0 0.0
    %1437 = vmatprep.mubr.f32.mxu0 0.0
    %1438 = vmatmul.mubr.f32.gmra.mxu0 %v1368
    %v1439 = vpop.f32.mrf.mxu0
    %v1440 = vadd.f32 %v1366, %v1439
    %v1441 = vpop.f32.mrf.mxu0
    %1442 = vmatprep.mubr.f32.mxu0 0.0
    %1443 = vmatmul.mubr.f32.gmra.mxu0 %v1371
    %v1444 = vpop.f32.mrf.mxu0
    %v1445 = vadd.f32 %v1366, %v1444
    %v1446 = vpop.f32.mrf.mxu0
    %1447 = vdwg.mxu0
    %v1448 = vmax.f32 %v1440, 0.0
    %v1449 = vmax.f32 %v1445, 0.0
    %v1450 = vlaneseq
    %v1451 = vshrl.u32 %v1450, 7
    %v1452 = vsub.s32 0, %v1451
    %v1453 = vrot.slane %v906, %v1452
    %v1455 = vsel %vm757, %v1448, 0
    %v1458 = vsel %vm757, %v1449, 0
    %1460 = vmatprep.subr.mxu0 0.0
    %1461 = vmatpush1.msra.mxu0 0.0
    %1462 = vmatprep.subr.mxu0 0.0
    %1463 = vmatpush1.msra.mxu0 0.0
    %1464 = vmatprep.subr.mxu0 0.0
    %1465 = vmatpush1.msra.mxu0 0.0
    %1466 = vmatprep.subr.mxu0 0.0
    %1467 = vmatpush1.msra.mxu0 0.0
    %1468 = vmatprep.subr.mxu0 0.0
    %1469 = vmatpush1.msra.mxu0 0.0
    %1470 = vmatprep.subr.mxu0 0.0
    %1471 = vmatpush1.msra.mxu0 0.0
    %1472 = vmatprep.subr.mxu0 0.0
    %1473 = vmatpush1.msra.mxu0 0.0
    %1474 = vmatprep.subr.mxu0 0.0
    %1475 = vmatpush1.msra.mxu0 0.0
    %1476 = vmatprep.subr.mxu0 0.0
    %1477 = vmatpush1.msra.mxu0 %v899
    %1478 = vmatprep.subr.mxu0 0.0
    %1479 = vmatpush1.msra.mxu0 %v898
    %1480 = vmatprep.subr.mxu0 0.0
    %1481 = vmatpush1.msra.mxu0 %v897
    %1482 = vmatprep.subr.mxu0 0.0
    %1483 = vmatpush1.msra.mxu0 %v896
    %1484 = vmatprep.subr.mxu0 0.0
    %1485 = vmatpush1.msra.mxu0 %v895
    %1486 = vmatprep.subr.mxu0 0.0
    %1487 = vmatpush1.msra.mxu0 %v894
    %1488 = vmatprep.subr.mxu0 0.0
    %1489 = vmatpush1.msra.mxu0 %v893
    %1490 = vmatprep.subr.mxu0 0.0
    %1491 = vmatpush1.msra.mxu0 %v892
    %1492 = vmatprep.subr.mxu0 0.0
    %1493 = vmatpush2.msra.mxu0 0.0
    %1494 = vmatprep.subr.mxu0 0.0
    %1495 = vmatpush2.msra.mxu0 0.0
    %1496 = vmatprep.subr.mxu0 0.0
    %1497 = vmatpush2.msra.mxu0 0.0
    %1498 = vmatprep.subr.mxu0 0.0
    %1499 = vmatpush2.msra.mxu0 0.0
    %1500 = vmatprep.subr.mxu0 0.0
    %1501 = vmatpush2.msra.mxu0 0.0
    %1502 = vmatprep.subr.mxu0 0.0
    %1503 = vmatpush2.msra.mxu0 0.0
    %1504 = vmatprep.subr.mxu0 0.0
    %1505 = vmatpush2.msra.mxu0 0.0
    %1506 = vmatprep.subr.mxu0 0.0
    %1507 = vmatpush2.msra.mxu0 0.0
    %1508 = vmatprep.subr.mxu0 0.0
    %1509 = vmatpush2.msra.mxu0 0.0
    %1510 = vmatprep.subr.mxu0 0.0
    %1511 = vmatpush2.msra.mxu0 0.0
    %1512 = vmatprep.subr.mxu0 0.0
    %1513 = vmatpush2.msra.mxu0 0.0
    %1514 = vmatprep.subr.mxu0 0.0
    %1515 = vmatpush2.msra.mxu0 0.0
    %1516 = vmatprep.subr.mxu0 0.0
    %1517 = vmatpush2.msra.mxu0 0.0
    %1518 = vmatprep.subr.mxu0 0.0
    %1519 = vmatpush2.msra.mxu0 0.0
    %1520 = vmatprep.subr.mxu0 0.0
    %1521 = vmatpush2.msra.mxu0 0.0
    %1522 = vmatprep.subr.mxu0 0.0
    %1523 = vmatpush2.msra.mxu0 0.0
    %1524 = vmatprep.mubr.f32.mxu0 0.0
    %1525 = vmatmul.mubr.f32.gmra.mxu0 %v1455
    %v1526 = vpop.f32.mrf.mxu0
    %v1527 = vadd.f32 %v1453, %v1526
    %v1528 = vpop.f32.mrf.mxu0
    %1529 = vmatprep.mubr.f32.mxu0 0.0
    %1530 = vmatmul.mubr.f32.gmra.mxu0 %v1458
    %v1531 = vpop.f32.mrf.mxu0
    %v1532 = vadd.f32 %v1453, %v1531
    %v1533 = vpop.f32.mrf.mxu0
    %1534 = vdwg.mxu0
    %v1535 = vadd.f32 %v1361, %v1527
    %v1536 = vadd.f32 %v1362, %v1532
    %v1537 = vsel %vm209, %v1535, 0.0
    %1538 = vadd.xlane.f32.xlu0 %v1537
    %v1539 = vpop.xlane.xlu0 %1538
    %v1540 = vsel %vm209, %v1536, 0.0
    %1541 = vadd.xlane.f32.xlu0 %v1540
    %v1542 = vpop.xlane.xlu0 %1541
    %v1543 = vmul.f32 %v1539, %v633
    %v1544 = vmul.f32 %v1542, %v633
    %v1545 = vsub.f32 %v1535, %v1543
    %v1546 = vsub.f32 %v1536, %v1544
    %v1547 = vmul.f32 %v1545, %v1545
    %v1548 = vmul.f32 %v1546, %v1546
    %v1549 = vsel %vm209, %v1547, 0.0
    %1550 = vadd.xlane.f32.xlu0 %v1549
    %v1551 = vpop.xlane.xlu0 %1550
    %v1552 = vsel %vm209, %v1548, 0.0
    %1553 = vadd.xlane.f32.xlu0 %v1552
    %v1554 = vpop.xlane.xlu0 %1553
    %v1555 = vmul.f32 %v1551, %v633
    %v1556 = vmul.f32 %v1554, %v633
    %v1557 = vadd.f32 %v1555, 1e-05
    %v1558 = vadd.f32 %v1556, 1e-05
    %v1559 = vrsqrt.pop %v1557
    %v1560 = vrsqrt.pop %v1558
    %v1561 = vmul.f32 %v1545, %v1559
    %v1562 = vmul.f32 %v1546, %v1560
    %v1563 = vlaneseq
    %v1564 = vshrl.u32 %v1563, 7
    %v1565 = vsub.s32 0, %v1564
    %v1566 = vrot.slane %v907, %v1565
    %v1567 = vmul.f32 %v1561, %v1566
    %v1568 = vmul.f32 %v1562, %v1566
    %v1569 = vlaneseq
    %v1570 = vshrl.u32 %v1569, 7
    %v1571 = vsub.s32 0, %v1570
    %v1572 = vrot.slane %v908, %v1571
    %v1573 = vadd.f32 %v1567, %v1572
    %v1574 = vadd.f32 %v1568, %v1572
    %v1575 = vld [vmem:[#allocation4] sm:$0xff]
    %v1576 = vld [vmem:[#allocation4 + $0x8] sm:$0xff]
    %v1577 = vld [vmem:[#allocation4 + $0x10] sm:$0xff]
    %v1578 = vld [vmem:[#allocation4 + $0x18] sm:$0xff]
    %v1579 = vld [vmem:[#allocation4 + $0x20] sm:$0xff]
    %v1580 = vld [vmem:[#allocation4 + $0x28] sm:$0xff]
    %v1581 = vld [vmem:[#allocation4 + $0x30] sm:$0xff]
    %v1582 = vld [vmem:[#allocation4 + $0x38] sm:$0xff]
    %v1583 = vld [vmem:[#allocation4 + $0x40] sm:$0xff]
    %v1584 = vld [vmem:[#allocation4 + $0x48] sm:$0xff]
    %v1585 = vld [vmem:[#allocation4 + $0x50] sm:$0xff]
    %v1586 = vld [vmem:[#allocation4 + $0x58] sm:$0xff]
    %v1587 = vld [vmem:[#allocation4 + $0x60] sm:$0xff]
    %v1588 = vld [vmem:[#allocation4 + $0x68] sm:$0xff]
    %v1589 = vld [vmem:[#allocation4 + $0x70] sm:$0xff]
    %v1590 = vld [vmem:[#allocation4 + $0x78] sm:$0xff]
    %v1591 = vld [vmem:[#allocation4 + $0x80] sm:$0xff]
    %v1592 = vld [vmem:[#allocation4 + $0x88] sm:$0xff]
    %v1593 = vld [vmem:[#allocation4 + $0x90] sm:$0xff]
    %v1594 = vld [vmem:[#allocation4 + $0x98] sm:$0xff]
    %v1595 = vld [vmem:[#allocation4 + $0xa0] sm:$0xff]
    %v1596 = vld [vmem:[#allocation4 + $0xa8] sm:$0xff]
    %v1597 = vld [vmem:[#allocation4 + $0xb0] sm:$0xff]
    %v1598 = vld [vmem:[#allocation4 + $0xb8] sm:$0xff]
    %v1599 = vld [vmem:[#allocation4 + $0xc0] sm:$0xff]
    %v1600 = vld [vmem:[#allocation4 + $0xc8] sm:$0xff]
    %v1601 = vld [vmem:[#allocation4 + $0xd0] sm:$0xff]
    %v1602 = vld [vmem:[#allocation4 + $0xd8] sm:$0xff]
    %v1603 = vld [vmem:[#allocation4 + $0xe0] sm:$0xff]
    %v1604 = vld [vmem:[#allocation4 + $0xe8] sm:$0xff]
    %v1605 = vld [vmem:[#allocation4 + $0xf0] sm:$0xff]
    %v1606 = vld [vmem:[#allocation4 + $0xf8] sm:$0xff]
    %s1607 = scalar_lea.vmem [#allocation4], 256
    %v1608 = vld [vmem:[%s1607] ss:$8 sm:$0x3]
    %vm1609 = vcmask 130048
    %v1611 = vsel %vm1609, %v82, 0
    %v1614 = vsel %vm1609, %v83, 0
    %1616 = vmatprep.subr.mxu0 0.0
    %1617 = vmatpush1.msra.mxu0 0.0
    %1618 = vmatprep.subr.mxu0 0.0
    %1619 = vmatpush1.msra.mxu0 0.0
    %1620 = vmatprep.subr.mxu0 0.0
    %1621 = vmatpush1.msra.mxu0 0.0
    %1622 = vmatprep.subr.mxu0 0.0
    %1623 = vmatpush1.msra.mxu0 0.0
    %1624 = vmatprep.subr.mxu0 0.0
    %1625 = vmatpush1.msra.mxu0 0.0
    %1626 = vmatprep.subr.mxu0 0.0
    %1627 = vmatpush1.msra.mxu0 0.0
    %1628 = vmatprep.subr.mxu0 0.0
    %1629 = vmatpush1.msra.mxu0 0.0
    %1630 = vmatprep.subr.mxu0 0.0
    %1631 = vmatpush1.msra.mxu0 0.0
    %1632 = vmatprep.subr.mxu0 0.0
    %1633 = vmatpush1.msra.mxu0 0.0
    %1634 = vmatprep.subr.mxu0 0.0
    %1635 = vmatpush1.msra.mxu0 0.0
    %1636 = vmatprep.subr.mxu0 0.0
    %1637 = vmatpush1.msra.mxu0 0.0
    %1638 = vmatprep.subr.mxu0 0.0
    %1639 = vmatpush1.msra.mxu0 0.0
    %1640 = vmatprep.subr.mxu0 0.0
    %1641 = vmatpush1.msra.mxu0 0.0
    %1642 = vmatprep.subr.mxu0 0.0
    %1643 = vmatpush1.msra.mxu0 0.0
    %1644 = vmatprep.subr.mxu0 0.0
    %1645 = vmatpush1.msra.mxu0 %v1574
    %1646 = vmatprep.subr.mxu0 0.0
    %1647 = vmatpush1.msra.mxu0 %v1573
    %1648 = vmatprep.subr.mxu0 0.0
    %1649 = vmatpush2.msra.mxu0 0.0
    %1650 = vmatprep.subr.mxu0 0.0
    %1651 = vmatpush2.msra.mxu0 0.0
    %1652 = vmatprep.subr.mxu0 0.0
    %1653 = vmatpush2.msra.mxu0 0.0
    %1654 = vmatprep.subr.mxu0 0.0
    %1655 = vmatpush2.msra.mxu0 0.0
    %1656 = vmatprep.subr.mxu0 0.0
    %1657 = vmatpush2.msra.mxu0 0.0
    %1658 = vmatprep.subr.mxu0 0.0
    %1659 = vmatpush2.msra.mxu0 0.0
    %1660 = vmatprep.subr.mxu0 0.0
    %1661 = vmatpush2.msra.mxu0 0.0
    %1662 = vmatprep.subr.mxu0 0.0
    %1663 = vmatpush2.msra.mxu0 0.0
    %1664 = vmatprep.subr.mxu0 0.0
    %1665 = vmatpush2.msra.mxu0 0.0
    %1666 = vmatprep.subr.mxu0 0.0
    %1667 = vmatpush2.msra.mxu0 0.0
    %1668 = vmatprep.subr.mxu0 0.0
    %1669 = vmatpush2.msra.mxu0 0.0
    %1670 = vmatprep.subr.mxu0 0.0
    %1671 = vmatpush2.msra.mxu0 0.0
    %1672 = vmatprep.subr.mxu0 0.0
    %1673 = vmatpush2.msra.mxu0 0.0
    %1674 = vmatprep.subr.mxu0 0.0
    %1675 = vmatpush2.msra.mxu0 0.0
    %1676 = vmatprep.subr.mxu0 0.0
    %1677 = vmatpush2.msra.mxu0 0.0
    %1678 = vmatprep.subr.mxu0 0.0
    %1679 = vmatpush2.msra.mxu0 0.0
    %1680 = vmatprep.mubr.f32.mxu0 0.0
    %1681 = vmatmul.mubr.f32.gmra.mxu0 %v1611
    %v1682 = vpop.f32.mrf.mxu0
    %v1683 = vadd.f32 0.0, %v1682
    %v1684 = vpop.f32.mrf.mxu0
    %1685 = vmatprep.mubr.f32.mxu0 0.0
    %1686 = vmatmul.mubr.f32.gmra.mxu0 %v1614
    %v1687 = vpop.f32.mrf.mxu0
    %v1688 = vadd.f32 0.0, %v1687
    %v1689 = vpop.f32.mrf.mxu0
    %1690 = vdwg.mxu0
    %v1692 = vsel %vm1609, %v84, 0
    %v1695 = vsel %vm1609, %v85, 0
    %1697 = vmatprep.subr.mxu0 0.0
    %1698 = vmatpush1.msra.mxu0 0.0
    %1699 = vmatprep.subr.mxu0 0.0
    %1700 = vmatpush1.msra.mxu0 0.0
    %1701 = vmatprep.subr.mxu0 0.0
    %1702 = vmatpush1.msra.mxu0 0.0
    %1703 = vmatprep.subr.mxu0 0.0
    %1704 = vmatpush1.msra.mxu0 0.0
    %1705 = vmatprep.subr.mxu0 0.0
    %1706 = vmatpush1.msra.mxu0 0.0
    %1707 = vmatprep.subr.mxu0 0.0
    %1708 = vmatpush1.msra.mxu0 0.0
    %1709 = vmatprep.subr.mxu0 0.0
    %1710 = vmatpush1.msra.mxu0 0.0
    %1711 = vmatprep.subr.mxu0 0.0
    %1712 = vmatpush1.msra.mxu0 0.0
    %1713 = vmatprep.subr.mxu0 0.0
    %1714 = vmatpush1.msra.mxu0 0.0
    %1715 = vmatprep.subr.mxu0 0.0
    %1716 = vmatpush1.msra.mxu0 0.0
    %1717 = vmatprep.subr.mxu0 0.0
    %1718 = vmatpush1.msra.mxu0 0.0
    %1719 = vmatprep.subr.mxu0 0.0
    %1720 = vmatpush1.msra.mxu0 0.0
    %1721 = vmatprep.subr.mxu0 0.0
    %1722 = vmatpush1.msra.mxu0 0.0
    %1723 = vmatprep.subr.mxu0 0.0
    %1724 = vmatpush1.msra.mxu0 0.0
    %1725 = vmatprep.subr.mxu0 0.0
    %1726 = vmatpush1.msra.mxu0 %v1574
    %1727 = vmatprep.subr.mxu0 0.0
    %1728 = vmatpush1.msra.mxu0 %v1573
    %1729 = vmatprep.subr.mxu0 0.0
    %1730 = vmatpush2.msra.mxu0 0.0
    %1731 = vmatprep.subr.mxu0 0.0
    %1732 = vmatpush2.msra.mxu0 0.0
    %1733 = vmatprep.subr.mxu0 0.0
    %1734 = vmatpush2.msra.mxu0 0.0
    %1735 = vmatprep.subr.mxu0 0.0
    %1736 = vmatpush2.msra.mxu0 0.0
    %1737 = vmatprep.subr.mxu0 0.0
    %1738 = vmatpush2.msra.mxu0 0.0
    %1739 = vmatprep.subr.mxu0 0.0
    %1740 = vmatpush2.msra.mxu0 0.0
    %1741 = vmatprep.subr.mxu0 0.0
    %1742 = vmatpush2.msra.mxu0 0.0
    %1743 = vmatprep.subr.mxu0 0.0
    %1744 = vmatpush2.msra.mxu0 0.0
    %1745 = vmatprep.subr.mxu0 0.0
    %1746 = vmatpush2.msra.mxu0 0.0
    %1747 = vmatprep.subr.mxu0 0.0
    %1748 = vmatpush2.msra.mxu0 0.0
    %1749 = vmatprep.subr.mxu0 0.0
    %1750 = vmatpush2.msra.mxu0 0.0
    %1751 = vmatprep.subr.mxu0 0.0
    %1752 = vmatpush2.msra.mxu0 0.0
    %1753 = vmatprep.subr.mxu0 0.0
    %1754 = vmatpush2.msra.mxu0 0.0
    %1755 = vmatprep.subr.mxu0 0.0
    %1756 = vmatpush2.msra.mxu0 0.0
    %1757 = vmatprep.subr.mxu0 0.0
    %1758 = vmatpush2.msra.mxu0 0.0
    %1759 = vmatprep.subr.mxu0 0.0
    %1760 = vmatpush2.msra.mxu0 0.0
    %1761 = vmatprep.mubr.f32.mxu0 0.0
    %1762 = vmatmul.mubr.f32.gmra.mxu0 %v1692
    %v1763 = vpop.f32.mrf.mxu0
    %v1764 = vadd.f32 0.0, %v1763
    %v1765 = vpop.f32.mrf.mxu0
    %1766 = vmatprep.mubr.f32.mxu0 0.0
    %1767 = vmatmul.mubr.f32.gmra.mxu0 %v1695
    %v1768 = vpop.f32.mrf.mxu0
    %v1769 = vadd.f32 0.0, %v1768
    %v1770 = vpop.f32.mrf.mxu0
    %1771 = vdwg.mxu0
    %1774 = vrot.lane.b32.xlu0 %v1764, 32
    %v1775 = vpop.permute.xlu0 %1774
    %1776 = vrot.lane.b32.xlu0 %v1769, 32
    %v1777 = vpop.permute.xlu0 %1776
    %v1780 = vsel %vm209, %v1683, %v1775
    %v1781 = vsel %vm209, %v1688, %v1777
    %v1783 = vlaneseq
    %v1784 = vshrl.u32 %v1783, 7
    %v1785 = vsub.s32 0, %v1784
    %v1786 = vrot.slane %v1608, %v1785
    %v1787 = vlaneseq
    %v1788 = vshrl.u32 %v1787, 7
    %v1789 = vsub.s32 1, %v1788
    %v1790 = vrot.slane %v1608, %v1789
    %v1794 = vsel %vm757, %v1780, 0
    %v1797 = vsel %vm757, %v1781, 0
    %1799 = vmatprep.subr.mxu0 0.0
    %1800 = vmatpush1.msra.mxu0 0.0
    %1801 = vmatprep.subr.mxu0 0.0
    %1802 = vmatpush1.msra.mxu0 0.0
    %1803 = vmatprep.subr.mxu0 0.0
    %1804 = vmatpush1.msra.mxu0 0.0
    %1805 = vmatprep.subr.mxu0 0.0
    %1806 = vmatpush1.msra.mxu0 0.0
    %1807 = vmatprep.subr.mxu0 0.0
    %1808 = vmatpush1.msra.mxu0 0.0
    %1809 = vmatprep.subr.mxu0 0.0
    %1810 = vmatpush1.msra.mxu0 0.0
    %1811 = vmatprep.subr.mxu0 0.0
    %1812 = vmatpush1.msra.mxu0 0.0
    %1813 = vmatprep.subr.mxu0 0.0
    %1814 = vmatpush1.msra.mxu0 0.0
    %1815 = vmatprep.subr.mxu0 %v1590
    %1816 = vmatpush1.msra.mxu0 %v1589
    %1817 = vmatprep.subr.mxu0 %v1588
    %1818 = vmatpush1.msra.mxu0 %v1587
    %1819 = vmatprep.subr.mxu0 %v1586
    %1820 = vmatpush1.msra.mxu0 %v1585
    %1821 = vmatprep.subr.mxu0 %v1584
    %1822 = vmatpush1.msra.mxu0 %v1583
    %1823 = vmatprep.subr.mxu0 %v1582
    %1824 = vmatpush1.msra.mxu0 %v1581
    %1825 = vmatprep.subr.mxu0 %v1580
    %1826 = vmatpush1.msra.mxu0 %v1579
    %1827 = vmatprep.subr.mxu0 %v1578
    %1828 = vmatpush1.msra.mxu0 %v1577
    %1829 = vmatprep.subr.mxu0 %v1576
    %1830 = vmatpush1.msra.mxu0 %v1575
    %1831 = vmatprep.subr.mxu0 0.0
    %1832 = vmatpush2.msra.mxu0 0.0
    %1833 = vmatprep.subr.mxu0 0.0
    %1834 = vmatpush2.msra.mxu0 0.0
    %1835 = vmatprep.subr.mxu0 0.0
    %1836 = vmatpush2.msra.mxu0 0.0
    %1837 = vmatprep.subr.mxu0 0.0
    %1838 = vmatpush2.msra.mxu0 0.0
    %1839 = vmatprep.subr.mxu0 0.0
    %1840 = vmatpush2.msra.mxu0 0.0
    %1841 = vmatprep.subr.mxu0 0.0
    %1842 = vmatpush2.msra.mxu0 0.0
    %1843 = vmatprep.subr.mxu0 0.0
    %1844 = vmatpush2.msra.mxu0 0.0
    %1845 = vmatprep.subr.mxu0 0.0
    %1846 = vmatpush2.msra.mxu0 0.0
    %1847 = vmatprep.subr.mxu0 0.0
    %1848 = vmatpush2.msra.mxu0 0.0
    %1849 = vmatprep.subr.mxu0 0.0
    %1850 = vmatpush2.msra.mxu0 0.0
    %1851 = vmatprep.subr.mxu0 0.0
    %1852 = vmatpush2.msra.mxu0 0.0
    %1853 = vmatprep.subr.mxu0 0.0
    %1854 = vmatpush2.msra.mxu0 0.0
    %1855 = vmatprep.subr.mxu0 0.0
    %1856 = vmatpush2.msra.mxu0 0.0
    %1857 = vmatprep.subr.mxu0 0.0
    %1858 = vmatpush2.msra.mxu0 0.0
    %1859 = vmatprep.subr.mxu0 0.0
    %1860 = vmatpush2.msra.mxu0 0.0
    %1861 = vmatprep.subr.mxu0 0.0
    %1862 = vmatpush2.msra.mxu0 0.0
    %1863 = vmatprep.mubr.f32.mxu0 0.0
    %1864 = vmatmul.mubr.f32.gmra.mxu0 %v1794
    %v1865 = vpop.f32.mrf.mxu0
    %v1866 = vadd.f32 %v1786, %v1865
    %v1867 = vpop.f32.mrf.mxu0
    %v1868 = vadd.f32 %v1790, %v1867
    %1869 = vmatprep.mubr.f32.mxu0 0.0
    %1870 = vmatmul.mubr.f32.gmra.mxu0 %v1797
    %v1871 = vpop.f32.mrf.mxu0
    %v1872 = vadd.f32 %v1786, %v1871
    %v1873 = vpop.f32.mrf.mxu0
    %v1874 = vadd.f32 %v1790, %v1873
    %1875 = vdwg.mxu0
    %v1877 = vsel %vm757, 0.0, 0
    %1879 = vmatprep.subr.mxu0 0.0
    %1880 = vmatpush1.msra.mxu0 0.0
    %1881 = vmatprep.subr.mxu0 0.0
    %1882 = vmatpush1.msra.mxu0 0.0
    %1883 = vmatprep.subr.mxu0 0.0
    %1884 = vmatpush1.msra.mxu0 0.0
    %1885 = vmatprep.subr.mxu0 0.0
    %1886 = vmatpush1.msra.mxu0 0.0
    %1887 = vmatprep.subr.mxu0 0.0
    %1888 = vmatpush1.msra.mxu0 0.0
    %1889 = vmatprep.subr.mxu0 0.0
    %1890 = vmatpush1.msra.mxu0 0.0
    %1891 = vmatprep.subr.mxu0 0.0
    %1892 = vmatpush1.msra.mxu0 0.0
    %1893 = vmatprep.subr.mxu0 0.0
    %1894 = vmatpush1.msra.mxu0 0.0
    %1895 = vmatprep.subr.mxu0 %v1606
    %1896 = vmatpush1.msra.mxu0 %v1605
    %1897 = vmatprep.subr.mxu0 %v1604
    %1898 = vmatpush1.msra.mxu0 %v1603
    %1899 = vmatprep.subr.mxu0 %v1602
    %1900 = vmatpush1.msra.mxu0 %v1601
    %1901 = vmatprep.subr.mxu0 %v1600
    %1902 = vmatpush1.msra.mxu0 %v1599
    %1903 = vmatprep.subr.mxu0 %v1598
    %1904 = vmatpush1.msra.mxu0 %v1597
    %1905 = vmatprep.subr.mxu0 %v1596
    %1906 = vmatpush1.msra.mxu0 %v1595
    %1907 = vmatprep.subr.mxu0 %v1594
    %1908 = vmatpush1.msra.mxu0 %v1593
    %1909 = vmatprep.subr.mxu0 %v1592
    %1910 = vmatpush1.msra.mxu0 %v1591
    %1911 = vmatprep.subr.mxu0 0.0
    %1912 = vmatpush2.msra.mxu0 0.0
    %1913 = vmatprep.subr.mxu0 0.0
    %1914 = vmatpush2.msra.mxu0 0.0
    %1915 = vmatprep.subr.mxu0 0.0
    %1916 = vmatpush2.msra.mxu0 0.0
    %1917 = vmatprep.subr.mxu0 0.0
    %1918 = vmatpush2.msra.mxu0 0.0
    %1919 = vmatprep.subr.mxu0 0.0
    %1920 = vmatpush2.msra.mxu0 0.0
    %1921 = vmatprep.subr.mxu0 0.0
    %1922 = vmatpush2.msra.mxu0 0.0
    %1923 = vmatprep.subr.mxu0 0.0
    %1924 = vmatpush2.msra.mxu0 0.0
    %1925 = vmatprep.subr.mxu0 0.0
    %1926 = vmatpush2.msra.mxu0 0.0
    %1927 = vmatprep.subr.mxu0 0.0
    %1928 = vmatpush2.msra.mxu0 0.0
    %1929 = vmatprep.subr.mxu0 0.0
    %1930 = vmatpush2.msra.mxu0 0.0
    %1931 = vmatprep.subr.mxu0 0.0
    %1932 = vmatpush2.msra.mxu0 0.0
    %1933 = vmatprep.subr.mxu0 0.0
    %1934 = vmatpush2.msra.mxu0 0.0
    %1935 = vmatprep.subr.mxu0 0.0
    %1936 = vmatpush2.msra.mxu0 0.0
    %1937 = vmatprep.subr.mxu0 0.0
    %1938 = vmatpush2.msra.mxu0 0.0
    %1939 = vmatprep.subr.mxu0 0.0
    %1940 = vmatpush2.msra.mxu0 0.0
    %1941 = vmatprep.subr.mxu0 0.0
    %1942 = vmatpush2.msra.mxu0 0.0
    %1943 = vmatprep.mubr.f32.mxu0 0.0
    %1944 = vmatmul.mubr.f32.gmra.mxu0 %v1877
    %v1945 = vpop.f32.mrf.mxu0
    %v1946 = vadd.f32 0.0, %v1945
    %v1947 = vpop.f32.mrf.mxu0
    %v1948 = vadd.f32 0.0, %v1947
    %1949 = vdwg.mxu0
    %v1950 = vadd.f32 %v1866, %v1946
    %v1951 = vadd.f32 %v1868, %v1948
    %v1952 = vxor.u32 %v1950, 2147483648
    %v1953 = vxor.u32 %v1951, 2147483648
    %v1954 = vmul.f32 %v1952, 1.442695
    %v1955 = vpow.pop %v1954
    %v1956 = vmul.f32 %v1953, 1.442695
    %v1957 = vpow.pop %v1956
    %v1958 = vadd.f32 %v1955, 1.0
    %v1959 = vadd.f32 %v1957, 1.0
    %v1960 = vrcp.pop %v1958
    %v1961 = vmul.f32 1.0, %v1960
    %v1962 = vrcp.pop %v1959
    %v1963 = vmul.f32 1.0, %v1962
    %v1964 = vtanh.pop %v1951
    %v1965 = vmul.f32 %v1961, 0.0
    %1967 = vrot.lane.b32.xlu0 %v1964, 64
    %v1968 = vpop.permute.xlu0 %1967
    %v1970 = vmul.f32 %v1961, %v1968
    %1972 = vrot.lane.b32.xlu0 %v1970, 64
    %v1973 = vpop.permute.xlu0 %1972
    %v1975 = vadd.f32 %v1965, %v1973
    %v1976 = vtanh.pop %v1975
    %1978 = vrot.lane.b32.xlu0 %v1976, 64
    %v1979 = vpop.permute.xlu0 %1978
    %v1981 = vmul.f32 %v1963, %v1979
    %v1983 = vsel %vm757, %v1981, 0
    %1985 = vmatprep.subr.mxu0 0.0
    %1986 = vmatpush1.msra.mxu0 0.0
    %1987 = vmatprep.subr.mxu0 0.0
    %1988 = vmatpush1.msra.mxu0 0.0
    %1989 = vmatprep.subr.mxu0 0.0
    %1990 = vmatpush1.msra.mxu0 0.0
    %1991 = vmatprep.subr.mxu0 0.0
    %1992 = vmatpush1.msra.mxu0 0.0
    %1993 = vmatprep.subr.mxu0 0.0
    %1994 = vmatpush1.msra.mxu0 0.0
    %1995 = vmatprep.subr.mxu0 0.0
    %1996 = vmatpush1.msra.mxu0 0.0
    %1997 = vmatprep.subr.mxu0 0.0
    %1998 = vmatpush1.msra.mxu0 0.0
    %1999 = vmatprep.subr.mxu0 0.0
    %2000 = vmatpush1.msra.mxu0 0.0
    %2001 = vmatprep.subr.mxu0 %v1606
    %2002 = vmatpush1.msra.mxu0 %v1605
    %2003 = vmatprep.subr.mxu0 %v1604
    %2004 = vmatpush1.msra.mxu0 %v1603
    %2005 = vmatprep.subr.mxu0 %v1602
    %2006 = vmatpush1.msra.mxu0 %v1601
    %2007 = vmatprep.subr.mxu0 %v1600
    %2008 = vmatpush1.msra.mxu0 %v1599
    %2009 = vmatprep.subr.mxu0 %v1598
    %2010 = vmatpush1.msra.mxu0 %v1597
    %2011 = vmatprep.subr.mxu0 %v1596
    %2012 = vmatpush1.msra.mxu0 %v1595
    %2013 = vmatprep.subr.mxu0 %v1594
    %2014 = vmatpush1.msra.mxu0 %v1593
    %2015 = vmatprep.subr.mxu0 %v1592
    %2016 = vmatpush1.msra.mxu0 %v1591
    %2017 = vmatprep.subr.mxu0 0.0
    %2018 = vmatpush2.msra.mxu0 0.0
    %2019 = vmatprep.subr.mxu0 0.0
    %2020 = vmatpush2.msra.mxu0 0.0
    %2021 = vmatprep.subr.mxu0 0.0
    %2022 = vmatpush2.msra.mxu0 0.0
    %2023 = vmatprep.subr.mxu0 0.0
    %2024 = vmatpush2.msra.mxu0 0.0
    %2025 = vmatprep.subr.mxu0 0.0
    %2026 = vmatpush2.msra.mxu0 0.0
    %2027 = vmatprep.subr.mxu0 0.0
    %2028 = vmatpush2.msra.mxu0 0.0
    %2029 = vmatprep.subr.mxu0 0.0
    %2030 = vmatpush2.msra.mxu0 0.0
    %2031 = vmatprep.subr.mxu0 0.0
    %2032 = vmatpush2.msra.mxu0 0.0
    %2033 = vmatprep.subr.mxu0 0.0
    %2034 = vmatpush2.msra.mxu0 0.0
    %2035 = vmatprep.subr.mxu0 0.0
    %2036 = vmatpush2.msra.mxu0 0.0
    %2037 = vmatprep.subr.mxu0 0.0
    %2038 = vmatpush2.msra.mxu0 0.0
    %2039 = vmatprep.subr.mxu0 0.0
    %2040 = vmatpush2.msra.mxu0 0.0
    %2041 = vmatprep.subr.mxu0 0.0
    %2042 = vmatpush2.msra.mxu0 0.0
    %2043 = vmatprep.subr.mxu0 0.0
    %2044 = vmatpush2.msra.mxu0 0.0
    %2045 = vmatprep.subr.mxu0 0.0
    %2046 = vmatpush2.msra.mxu0 0.0
    %2047 = vmatprep.subr.mxu0 0.0
    %2048 = vmatpush2.msra.mxu0 0.0
    %2049 = vmatprep.mubr.f32.mxu0 0.0
    %2050 = vmatmul.mubr.f32.gmra.mxu0 %v1983
    %v2051 = vpop.f32.mrf.mxu0
    %v2052 = vadd.f32 0.0, %v2051
    %v2053 = vpop.f32.mrf.mxu0
    %v2054 = vadd.f32 0.0, %v2053
    %2055 = vdwg.mxu0
    %v2058 = vrot.slane %v2052, 6
    %v2059 = vrot.slane %v2054, 6
    %v2062 = vadd.f32 %v1866, %v2058
    %v2063 = vadd.f32 %v1868, %v2059
    %v2064 = vxor.u32 %v2062, 2147483648
    %v2065 = vxor.u32 %v2063, 2147483648
    %v2066 = vmul.f32 %v2064, 1.442695
    %v2067 = vpow.pop %v2066
    %v2068 = vmul.f32 %v2065, 1.442695
    %v2069 = vpow.pop %v2068
    %v2070 = vadd.f32 %v2067, 1.0
    %v2071 = vadd.f32 %v2069, 1.0
    %v2072 = vrcp.pop %v2070
    %v2073 = vmul.f32 1.0, %v2072
    %v2074 = vrcp.pop %v2071
    %v2075 = vmul.f32 1.0, %v2074
    %v2076 = vtanh.pop %v2063
    %v2078 = vrot.slane %v1975, 6
    %v2080 = vmul.f32 %v2073, %v2078
    %2082 = vrot.lane.b32.xlu0 %v2076, 64
    %v2083 = vpop.permute.xlu0 %2082
    %v2085 = vmul.f32 %v2073, %v2083
    %2087 = vrot.lane.b32.xlu0 %v2085, 64
    %v2088 = vpop.permute.xlu0 %2087
    %v2090 = vadd.f32 %v2080, %v2088
    %v2091 = vtanh.pop %v2090
    %2093 = vrot.lane.b32.xlu0 %v2091, 64
    %v2094 = vpop.permute.xlu0 %2093
    %v2096 = vmul.f32 %v2075, %v2094
    %v2098 = vrot.slane %v2096, 2
    %v2099 = vsel %vm757, %v2098, 0
    %2101 = vmatprep.subr.mxu0 0.0
    %2102 = vmatpush1.msra.mxu0 0.0
    %2103 = vmatprep.subr.mxu0 0.0
    %2104 = vmatpush1.msra.mxu0 0.0
    %2105 = vmatprep.subr.mxu0 0.0
    %2106 = vmatpush1.msra.mxu0 0.0
    %2107 = vmatprep.subr.mxu0 0.0
    %2108 = vmatpush1.msra.mxu0 0.0
    %2109 = vmatprep.subr.mxu0 0.0
    %2110 = vmatpush1.msra.mxu0 0.0
    %2111 = vmatprep.subr.mxu0 0.0
    %2112 = vmatpush1.msra.mxu0 0.0
    %2113 = vmatprep.subr.mxu0 0.0
    %2114 = vmatpush1.msra.mxu0 0.0
    %2115 = vmatprep.subr.mxu0 0.0
    %2116 = vmatpush1.msra.mxu0 0.0
    %2117 = vmatprep.subr.mxu0 %v1606
    %2118 = vmatpush1.msra.mxu0 %v1605
    %2119 = vmatprep.subr.mxu0 %v1604
    %2120 = vmatpush1.msra.mxu0 %v1603
    %2121 = vmatprep.subr.mxu0 %v1602
    %2122 = vmatpush1.msra.mxu0 %v1601
    %2123 = vmatprep.subr.mxu0 %v1600
    %2124 = vmatpush1.msra.mxu0 %v1599
    %2125 = vmatprep.subr.mxu0 %v1598
    %2126 = vmatpush1.msra.mxu0 %v1597
    %2127 = vmatprep.subr.mxu0 %v1596
    %2128 = vmatpush1.msra.mxu0 %v1595
    %2129 = vmatprep.subr.mxu0 %v1594
    %2130 = vmatpush1.msra.mxu0 %v1593
    %2131 = vmatprep.subr.mxu0 %v1592
    %2132 = vmatpush1.msra.mxu0 %v1591
    %2133 = vmatprep.subr.mxu0 0.0
    %2134 = vmatpush2.msra.mxu0 0.0
    %2135 = vmatprep.subr.mxu0 0.0
    %2136 = vmatpush2.msra.mxu0 0.0
    %2137 = vmatprep.subr.mxu0 0.0
    %2138 = vmatpush2.msra.mxu0 0.0
    %2139 = vmatprep.subr.mxu0 0.0
    %2140 = vmatpush2.msra.mxu0 0.0
    %2141 = vmatprep.subr.mxu0 0.0
    %2142 = vmatpush2.msra.mxu0 0.0
    %2143 = vmatprep.subr.mxu0 0.0
    %2144 = vmatpush2.msra.mxu0 0.0
    %2145 = vmatprep.subr.mxu0 0.0
    %2146 = vmatpush2.msra.mxu0 0.0
    %2147 = vmatprep.subr.mxu0 0.0
    %2148 = vmatpush2.msra.mxu0 0.0
    %2149 = vmatprep.subr.mxu0 0.0
    %2150 = vmatpush2.msra.mxu0 0.0
    %2151 = vmatprep.subr.mxu0 0.0
    %2152 = vmatpush2.msra.mxu0 0.0
    %2153 = vmatprep.subr.mxu0 0.0
    %2154 = vmatpush2.msra.mxu0 0.0
    %2155 = vmatprep.subr.mxu0 0.0
    %2156 = vmatpush2.msra.mxu0 0.0
    %2157 = vmatprep.subr.mxu0 0.0
    %2158 = vmatpush2.msra.mxu0 0.0
    %2159 = vmatprep.subr.mxu0 0.0
    %2160 = vmatpush2.msra.mxu0 0.0
    %2161 = vmatprep.subr.mxu0 0.0
    %2162 = vmatpush2.msra.mxu0 0.0
    %2163 = vmatprep.subr.mxu0 0.0
    %2164 = vmatpush2.msra.mxu0 0.0
    %2165 = vmatprep.mubr.f32.mxu0 0.0
    %2166 = vmatmul.mubr.f32.gmra.mxu0 %v2099
    %v2167 = vpop.f32.mrf.mxu0
    %v2168 = vadd.f32 0.0, %v2167
    %v2169 = vpop.f32.mrf.mxu0
    %v2170 = vadd.f32 0.0, %v2169
    %2171 = vdwg.mxu0
    %v2174 = vrot.slane %v2168, 4
    %v2175 = vrot.slane %v2170, 4
    %v2178 = vadd.f32 %v1866, %v2174
    %v2179 = vadd.f32 %v1868, %v2175
    %v2180 = vxor.u32 %v2178, 2147483648
    %v2181 = vxor.u32 %v2179, 2147483648
    %v2182 = vmul.f32 %v2180, 1.442695
    %v2183 = vpow.pop %v2182
    %v2184 = vmul.f32 %v2181, 1.442695
    %v2185 = vpow.pop %v2184
    %v2186 = vadd.f32 %v2183, 1.0
    %v2187 = vadd.f32 %v2185, 1.0
    %v2188 = vrcp.pop %v2186
    %v2189 = vmul.f32 1.0, %v2188
    %v2190 = vrcp.pop %v2187
    %v2191 = vmul.f32 1.0, %v2190
    %v2192 = vtanh.pop %v2179
    %v2194 = vrot.slane %v2090, 6
    %v2196 = vmul.f32 %v2189, %v2194
    %2198 = vrot.lane.b32.xlu0 %v2192, 64
    %v2199 = vpop.permute.xlu0 %2198
    %v2201 = vmul.f32 %v2189, %v2199
    %2203 = vrot.lane.b32.xlu0 %v2201, 64
    %v2204 = vpop.permute.xlu0 %2203
    %v2206 = vadd.f32 %v2196, %v2204
    %v2207 = vtanh.pop %v2206
    %2209 = vrot.lane.b32.xlu0 %v2207, 64
    %v2210 = vpop.permute.xlu0 %2209
    %v2212 = vmul.f32 %v2191, %v2210
    %v2214 = vrot.slane %v2212, 4
    %v2215 = vsel %vm757, %v2214, 0
    %2217 = vmatprep.subr.mxu0 0.0
    %2218 = vmatpush1.msra.mxu0 0.0
    %2219 = vmatprep.subr.mxu0 0.0
    %2220 = vmatpush1.msra.mxu0 0.0
    %2221 = vmatprep.subr.mxu0 0.0
    %2222 = vmatpush1.msra.mxu0 0.0
    %2223 = vmatprep.subr.mxu0 0.0
    %2224 = vmatpush1.msra.mxu0 0.0
    %2225 = vmatprep.subr.mxu0 0.0
    %2226 = vmatpush1.msra.mxu0 0.0
    %2227 = vmatprep.subr.mxu0 0.0
    %2228 = vmatpush1.msra.mxu0 0.0
    %2229 = vmatprep.subr.mxu0 0.0
    %2230 = vmatpush1.msra.mxu0 0.0
    %2231 = vmatprep.subr.mxu0 0.0
    %2232 = vmatpush1.msra.mxu0 0.0
    %2233 = vmatprep.subr.mxu0 %v1606
    %2234 = vmatpush1.msra.mxu0 %v1605
    %2235 = vmatprep.subr.mxu0 %v1604
    %2236 = vmatpush1.msra.mxu0 %v1603
    %2237 = vmatprep.subr.mxu0 %v1602
    %2238 = vmatpush1.msra.mxu0 %v1601
    %2239 = vmatprep.subr.mxu0 %v1600
    %2240 = vmatpush1.msra.mxu0 %v1599
    %2241 = vmatprep.subr.mxu0 %v1598
    %2242 = vmatpush1.msra.mxu0 %v1597
    %2243 = vmatprep.subr.mxu0 %v1596
    %2244 = vmatpush1.msra.mxu0 %v1595
    %2245 = vmatprep.subr.mxu0 %v1594
    %2246 = vmatpush1.msra.mxu0 %v1593
    %2247 = vmatprep.subr.mxu0 %v1592
    %2248 = vmatpush1.msra.mxu0 %v1591
    %2249 = vmatprep.subr.mxu0 0.0
    %2250 = vmatpush2.msra.mxu0 0.0
    %2251 = vmatprep.subr.mxu0 0.0
    %2252 = vmatpush2.msra.mxu0 0.0
    %2253 = vmatprep.subr.mxu0 0.0
    %2254 = vmatpush2.msra.mxu0 0.0
    %2255 = vmatprep.subr.mxu0 0.0
    %2256 = vmatpush2.msra.mxu0 0.0
    %2257 = vmatprep.subr.mxu0 0.0
    %2258 = vmatpush2.msra.mxu0 0.0
    %2259 = vmatprep.subr.mxu0 0.0
    %2260 = vmatpush2.msra.mxu0 0.0
    %2261 = vmatprep.subr.mxu0 0.0
    %2262 = vmatpush2.msra.mxu0 0.0
    %2263 = vmatprep.subr.mxu0 0.0
    %2264 = vmatpush2.msra.mxu0 0.0
    %2265 = vmatprep.subr.mxu0 0.0
    %2266 = vmatpush2.msra.mxu0 0.0
    %2267 = vmatprep.subr.mxu0 0.0
    %2268 = vmatpush2.msra.mxu0 0.0
    %2269 = vmatprep.subr.mxu0 0.0
    %2270 = vmatpush2.msra.mxu0 0.0
    %2271 = vmatprep.subr.mxu0 0.0
    %2272 = vmatpush2.msra.mxu0 0.0
    %2273 = vmatprep.subr.mxu0 0.0
    %2274 = vmatpush2.msra.mxu0 0.0
    %2275 = vmatprep.subr.mxu0 0.0
    %2276 = vmatpush2.msra.mxu0 0.0
    %2277 = vmatprep.subr.mxu0 0.0
    %2278 = vmatpush2.msra.mxu0 0.0
    %2279 = vmatprep.subr.mxu0 0.0
    %2280 = vmatpush2.msra.mxu0 0.0
    %2281 = vmatprep.mubr.f32.mxu0 0.0
    %2282 = vmatmul.mubr.f32.gmra.mxu0 %v2215
    %v2283 = vpop.f32.mrf.mxu0
    %v2284 = vadd.f32 0.0, %v2283
    %v2285 = vpop.f32.mrf.mxu0
    %v2286 = vadd.f32 0.0, %v2285
    %2287 = vdwg.mxu0
    %v2290 = vrot.slane %v2284, 2
    %v2291 = vrot.slane %v2286, 2
    %v2294 = vadd.f32 %v1866, %v2290
    %v2295 = vadd.f32 %v1868, %v2291
    %v2296 = vxor.u32 %v2294, 2147483648
    %v2297 = vxor.u32 %v2295, 2147483648
    %v2298 = vmul.f32 %v2296, 1.442695
    %v2299 = vpow.pop %v2298
    %v2300 = vmul.f32 %v2297, 1.442695
    %v2301 = vpow.pop %v2300
    %v2302 = vadd.f32 %v2299, 1.0
    %v2303 = vadd.f32 %v2301, 1.0
    %v2304 = vrcp.pop %v2302
    %v2305 = vmul.f32 1.0, %v2304
    %v2306 = vrcp.pop %v2303
    %v2307 = vmul.f32 1.0, %v2306
    %v2308 = vtanh.pop %v2295
    %v2310 = vrot.slane %v2206, 6
    %v2312 = vmul.f32 %v2305, %v2310
    %2314 = vrot.lane.b32.xlu0 %v2308, 64
    %v2315 = vpop.permute.xlu0 %2314
    %v2317 = vmul.f32 %v2305, %v2315
    %2319 = vrot.lane.b32.xlu0 %v2317, 64
    %v2320 = vpop.permute.xlu0 %2319
    %v2322 = vadd.f32 %v2312, %v2320
    %v2323 = vtanh.pop %v2322
    %2325 = vrot.lane.b32.xlu0 %v2323, 64
    %v2326 = vpop.permute.xlu0 %2325
    %v2328 = vmul.f32 %v2307, %v2326
    %v2330 = vrot.slane %v2328, 6
    %v2331 = vsel %vm757, %v2330, 0
    %2333 = vmatprep.subr.mxu0 0.0
    %2334 = vmatpush1.msra.mxu0 0.0
    %2335 = vmatprep.subr.mxu0 0.0
    %2336 = vmatpush1.msra.mxu0 0.0
    %2337 = vmatprep.subr.mxu0 0.0
    %2338 = vmatpush1.msra.mxu0 0.0
    %2339 = vmatprep.subr.mxu0 0.0
    %2340 = vmatpush1.msra.mxu0 0.0
    %2341 = vmatprep.subr.mxu0 0.0
    %2342 = vmatpush1.msra.mxu0 0.0
    %2343 = vmatprep.subr.mxu0 0.0
    %2344 = vmatpush1.msra.mxu0 0.0
    %2345 = vmatprep.subr.mxu0 0.0
    %2346 = vmatpush1.msra.mxu0 0.0
    %2347 = vmatprep.subr.mxu0 0.0
    %2348 = vmatpush1.msra.mxu0 0.0
    %2349 = vmatprep.subr.mxu0 %v1606
    %2350 = vmatpush1.msra.mxu0 %v1605
    %2351 = vmatprep.subr.mxu0 %v1604
    %2352 = vmatpush1.msra.mxu0 %v1603
    %2353 = vmatprep.subr.mxu0 %v1602
    %2354 = vmatpush1.msra.mxu0 %v1601
    %2355 = vmatprep.subr.mxu0 %v1600
    %2356 = vmatpush1.msra.mxu0 %v1599
    %2357 = vmatprep.subr.mxu0 %v1598
    %2358 = vmatpush1.msra.mxu0 %v1597
    %2359 = vmatprep.subr.mxu0 %v1596
    %2360 = vmatpush1.msra.mxu0 %v1595
    %2361 = vmatprep.subr.mxu0 %v1594
    %2362 = vmatpush1.msra.mxu0 %v1593
    %2363 = vmatprep.subr.mxu0 %v1592
    %2364 = vmatpush1.msra.mxu0 %v1591
    %2365 = vmatprep.subr.mxu0 0.0
    %2366 = vmatpush2.msra.mxu0 0.0
    %2367 = vmatprep.subr.mxu0 0.0
    %2368 = vmatpush2.msra.mxu0 0.0
    %2369 = vmatprep.subr.mxu0 0.0
    %2370 = vmatpush2.msra.mxu0 0.0
    %2371 = vmatprep.subr.mxu0 0.0
    %2372 = vmatpush2.msra.mxu0 0.0
    %2373 = vmatprep.subr.mxu0 0.0
    %2374 = vmatpush2.msra.mxu0 0.0
    %2375 = vmatprep.subr.mxu0 0.0
    %2376 = vmatpush2.msra.mxu0 0.0
    %2377 = vmatprep.subr.mxu0 0.0
    %2378 = vmatpush2.msra.mxu0 0.0
    %2379 = vmatprep.subr.mxu0 0.0
    %2380 = vmatpush2.msra.mxu0 0.0
    %2381 = vmatprep.subr.mxu0 0.0
    %2382 = vmatpush2.msra.mxu0 0.0
    %2383 = vmatprep.subr.mxu0 0.0
    %2384 = vmatpush2.msra.mxu0 0.0
    %2385 = vmatprep.subr.mxu0 0.0
    %2386 = vmatpush2.msra.mxu0 0.0
    %2387 = vmatprep.subr.mxu0 0.0
    %2388 = vmatpush2.msra.mxu0 0.0
    %2389 = vmatprep.subr.mxu0 0.0
    %2390 = vmatpush2.msra.mxu0 0.0
    %2391 = vmatprep.subr.mxu0 0.0
    %2392 = vmatpush2.msra.mxu0 0.0
    %2393 = vmatprep.subr.mxu0 0.0
    %2394 = vmatpush2.msra.mxu0 0.0
    %2395 = vmatprep.subr.mxu0 0.0
    %2396 = vmatpush2.msra.mxu0 0.0
    %2397 = vmatprep.mubr.f32.mxu0 0.0
    %2398 = vmatmul.mubr.f32.gmra.mxu0 %v2331
    %v2399 = vpop.f32.mrf.mxu0
    %v2400 = vadd.f32 0.0, %v2399
    %v2401 = vpop.f32.mrf.mxu0
    %v2402 = vadd.f32 0.0, %v2401
    %2403 = vdwg.mxu0
    %v2404 = vadd.f32 %v1872, %v2400
    %v2405 = vadd.f32 %v1874, %v2402
    %v2406 = vxor.u32 %v2404, 2147483648
    %v2407 = vxor.u32 %v2405, 2147483648
    %v2408 = vmul.f32 %v2406, 1.442695
    %v2409 = vpow.pop %v2408
    %v2410 = vmul.f32 %v2407, 1.442695
    %v2411 = vpow.pop %v2410
    %v2412 = vadd.f32 %v2409, 1.0
    %v2413 = vadd.f32 %v2411, 1.0
    %v2414 = vrcp.pop %v2412
    %v2415 = vmul.f32 1.0, %v2414
    %v2416 = vrcp.pop %v2413
    %v2417 = vmul.f32 1.0, %v2416
    %v2418 = vtanh.pop %v2405
    %v2420 = vrot.slane %v2322, 6
    %v2422 = vmul.f32 %v2415, %v2420
    %2424 = vrot.lane.b32.xlu0 %v2418, 64
    %v2425 = vpop.permute.xlu0 %2424
    %v2427 = vmul.f32 %v2415, %v2425
    %2429 = vrot.lane.b32.xlu0 %v2427, 64
    %v2430 = vpop.permute.xlu0 %2429
    %v2432 = vadd.f32 %v2422, %v2430
    %v2433 = vtanh.pop %v2432
    %2435 = vrot.lane.b32.xlu0 %v2433, 64
    %v2436 = vpop.permute.xlu0 %2435
    %v2438 = vmul.f32 %v2417, %v2436
    %v2440 = vsel %vm757, %v2438, 0
    %2442 = vmatprep.subr.mxu0 0.0
    %2443 = vmatpush1.msra.mxu0 0.0
    %2444 = vmatprep.subr.mxu0 0.0
    %2445 = vmatpush1.msra.mxu0 0.0
    %2446 = vmatprep.subr.mxu0 0.0
    %2447 = vmatpush1.msra.mxu0 0.0
    %2448 = vmatprep.subr.mxu0 0.0
    %2449 = vmatpush1.msra.mxu0 0.0
    %2450 = vmatprep.subr.mxu0 0.0
    %2451 = vmatpush1.msra.mxu0 0.0
    %2452 = vmatprep.subr.mxu0 0.0
    %2453 = vmatpush1.msra.mxu0 0.0
    %2454 = vmatprep.subr.mxu0 0.0
    %2455 = vmatpush1.msra.mxu0 0.0
    %2456 = vmatprep.subr.mxu0 0.0
    %2457 = vmatpush1.msra.mxu0 0.0
    %2458 = vmatprep.subr.mxu0 %v1606
    %2459 = vmatpush1.msra.mxu0 %v1605
    %2460 = vmatprep.subr.mxu0 %v1604
    %2461 = vmatpush1.msra.mxu0 %v1603
    %2462 = vmatprep.subr.mxu0 %v1602
    %2463 = vmatpush1.msra.mxu0 %v1601
    %2464 = vmatprep.subr.mxu0 %v1600
    %2465 = vmatpush1.msra.mxu0 %v1599
    %2466 = vmatprep.subr.mxu0 %v1598
    %2467 = vmatpush1.msra.mxu0 %v1597
    %2468 = vmatprep.subr.mxu0 %v1596
    %2469 = vmatpush1.msra.mxu0 %v1595
    %2470 = vmatprep.subr.mxu0 %v1594
    %2471 = vmatpush1.msra.mxu0 %v1593
    %2472 = vmatprep.subr.mxu0 %v1592
    %2473 = vmatpush1.msra.mxu0 %v1591
    %2474 = vmatprep.subr.mxu0 0.0
    %2475 = vmatpush2.msra.mxu0 0.0
    %2476 = vmatprep.subr.mxu0 0.0
    %2477 = vmatpush2.msra.mxu0 0.0
    %2478 = vmatprep.subr.mxu0 0.0
    %2479 = vmatpush2.msra.mxu0 0.0
    %2480 = vmatprep.subr.mxu0 0.0
    %2481 = vmatpush2.msra.mxu0 0.0
    %2482 = vmatprep.subr.mxu0 0.0
    %2483 = vmatpush2.msra.mxu0 0.0
    %2484 = vmatprep.subr.mxu0 0.0
    %2485 = vmatpush2.msra.mxu0 0.0
    %2486 = vmatprep.subr.mxu0 0.0
    %2487 = vmatpush2.msra.mxu0 0.0
    %2488 = vmatprep.subr.mxu0 0.0
    %2489 = vmatpush2.msra.mxu0 0.0
    %2490 = vmatprep.subr.mxu0 0.0
    %2491 = vmatpush2.msra.mxu0 0.0
    %2492 = vmatprep.subr.mxu0 0.0
    %2493 = vmatpush2.msra.mxu0 0.0
    %2494 = vmatprep.subr.mxu0 0.0
    %2495 = vmatpush2.msra.mxu0 0.0
    %2496 = vmatprep.subr.mxu0 0.0
    %2497 = vmatpush2.msra.mxu0 0.0
    %2498 = vmatprep.subr.mxu0 0.0
    %2499 = vmatpush2.msra.mxu0 0.0
    %2500 = vmatprep.subr.mxu0 0.0
    %2501 = vmatpush2.msra.mxu0 0.0
    %2502 = vmatprep.subr.mxu0 0.0
    %2503 = vmatpush2.msra.mxu0 0.0
    %2504 = vmatprep.subr.mxu0 0.0
    %2505 = vmatpush2.msra.mxu0 0.0
    %2506 = vmatprep.mubr.f32.mxu0 0.0
    %2507 = vmatmul.mubr.f32.gmra.mxu0 %v2440
    %v2508 = vpop.f32.mrf.mxu0
    %v2509 = vadd.f32 0.0, %v2508
    %v2510 = vpop.f32.mrf.mxu0
    %v2511 = vadd.f32 0.0, %v2510
    %2512 = vdwg.mxu0
    %v2515 = vrot.slane %v2509, 6
    %v2516 = vrot.slane %v2511, 6
    %v2519 = vadd.f32 %v1872, %v2515
    %v2520 = vadd.f32 %v1874, %v2516
    %v2521 = vxor.u32 %v2519, 2147483648
    %v2522 = vxor.u32 %v2520, 2147483648
    %v2523 = vmul.f32 %v2521, 1.442695
    %v2524 = vpow.pop %v2523
    %v2525 = vmul.f32 %v2522, 1.442695
    %v2526 = vpow.pop %v2525
    %v2527 = vadd.f32 %v2524, 1.0
    %v2528 = vadd.f32 %v2526, 1.0
    %v2529 = vrcp.pop %v2527
    %v2530 = vmul.f32 1.0, %v2529
    %v2531 = vrcp.pop %v2528
    %v2532 = vmul.f32 1.0, %v2531
    %v2533 = vtanh.pop %v2520
    %v2535 = vrot.slane %v2432, 6
    %v2537 = vmul.f32 %v2530, %v2535
    %2539 = vrot.lane.b32.xlu0 %v2533, 64
    %v2540 = vpop.permute.xlu0 %2539
    %v2542 = vmul.f32 %v2530, %v2540
    %2544 = vrot.lane.b32.xlu0 %v2542, 64
    %v2545 = vpop.permute.xlu0 %2544
    %v2547 = vadd.f32 %v2537, %v2545
    %v2548 = vtanh.pop %v2547
    %2550 = vrot.lane.b32.xlu0 %v2548, 64
    %v2551 = vpop.permute.xlu0 %2550
    %v2553 = vmul.f32 %v2532, %v2551
    %v2555 = vrot.slane %v2553, 2
    %v2556 = vsel %vm757, %v2555, 0
    %2558 = vmatprep.subr.mxu0 0.0
    %2559 = vmatpush1.msra.mxu0 0.0
    %2560 = vmatprep.subr.mxu0 0.0
    %2561 = vmatpush1.msra.mxu0 0.0
    %2562 = vmatprep.subr.mxu0 0.0
    %2563 = vmatpush1.msra.mxu0 0.0
    %2564 = vmatprep.subr.mxu0 0.0
    %2565 = vmatpush1.msra.mxu0 0.0
    %2566 = vmatprep.subr.mxu0 0.0
    %2567 = vmatpush1.msra.mxu0 0.0
    %2568 = vmatprep.subr.mxu0 0.0
    %2569 = vmatpush1.msra.mxu0 0.0
    %2570 = vmatprep.subr.mxu0 0.0
    %2571 = vmatpush1.msra.mxu0 0.0
    %2572 = vmatprep.subr.mxu0 0.0
    %2573 = vmatpush1.msra.mxu0 0.0
    %2574 = vmatprep.subr.mxu0 %v1606
    %2575 = vmatpush1.msra.mxu0 %v1605
    %2576 = vmatprep.subr.mxu0 %v1604
    %2577 = vmatpush1.msra.mxu0 %v1603
    %2578 = vmatprep.subr.mxu0 %v1602
    %2579 = vmatpush1.msra.mxu0 %v1601
    %2580 = vmatprep.subr.mxu0 %v1600
    %2581 = vmatpush1.msra.mxu0 %v1599
    %2582 = vmatprep.subr.mxu0 %v1598
    %2583 = vmatpush1.msra.mxu0 %v1597
    %2584 = vmatprep.subr.mxu0 %v1596
    %2585 = vmatpush1.msra.mxu0 %v1595
    %2586 = vmatprep.subr.mxu0 %v1594
    %2587 = vmatpush1.msra.mxu0 %v1593
    %2588 = vmatprep.subr.mxu0 %v1592
    %2589 = vmatpush1.msra.mxu0 %v1591
    %2590 = vmatprep.subr.mxu0 0.0
    %2591 = vmatpush2.msra.mxu0 0.0
    %2592 = vmatprep.subr.mxu0 0.0
    %2593 = vmatpush2.msra.mxu0 0.0
    %2594 = vmatprep.subr.mxu0 0.0
    %2595 = vmatpush2.msra.mxu0 0.0
    %2596 = vmatprep.subr.mxu0 0.0
    %2597 = vmatpush2.msra.mxu0 0.0
    %2598 = vmatprep.subr.mxu0 0.0
    %2599 = vmatpush2.msra.mxu0 0.0
    %2600 = vmatprep.subr.mxu0 0.0
    %2601 = vmatpush2.msra.mxu0 0.0
    %2602 = vmatprep.subr.mxu0 0.0
    %2603 = vmatpush2.msra.mxu0 0.0
    %2604 = vmatprep.subr.mxu0 0.0
    %2605 = vmatpush2.msra.mxu0 0.0
    %2606 = vmatprep.subr.mxu0 0.0
    %2607 = vmatpush2.msra.mxu0 0.0
    %2608 = vmatprep.subr.mxu0 0.0
    %2609 = vmatpush2.msra.mxu0 0.0
    %2610 = vmatprep.subr.mxu0 0.0
    %2611 = vmatpush2.msra.mxu0 0.0
    %2612 = vmatprep.subr.mxu0 0.0
    %2613 = vmatpush2.msra.mxu0 0.0
    %2614 = vmatprep.subr.mxu0 0.0
    %2615 = vmatpush2.msra.mxu0 0.0
    %2616 = vmatprep.subr.mxu0 0.0
    %2617 = vmatpush2.msra.mxu0 0.0
    %2618 = vmatprep.subr.mxu0 0.0
    %2619 = vmatpush2.msra.mxu0 0.0
    %2620 = vmatprep.subr.mxu0 0.0
    %2621 = vmatpush2.msra.mxu0 0.0
    %2622 = vmatprep.mubr.f32.mxu0 0.0
    %2623 = vmatmul.mubr.f32.gmra.mxu0 %v2556
    %v2624 = vpop.f32.mrf.mxu0
    %v2625 = vadd.f32 0.0, %v2624
    %v2626 = vpop.f32.mrf.mxu0
    %v2627 = vadd.f32 0.0, %v2626
    %2628 = vdwg.mxu0
    %v2631 = vrot.slane %v2625, 4
    %v2632 = vrot.slane %v2627, 4
    %v2635 = vadd.f32 %v1872, %v2631
    %v2636 = vadd.f32 %v1874, %v2632
    %v2637 = vxor.u32 %v2635, 2147483648
    %v2638 = vxor.u32 %v2636, 2147483648
    %v2639 = vmul.f32 %v2637, 1.442695
    %v2640 = vpow.pop %v2639
    %v2641 = vmul.f32 %v2638, 1.442695
    %v2642 = vpow.pop %v2641
    %v2643 = vadd.f32 %v2640, 1.0
    %v2644 = vadd.f32 %v2642, 1.0
    %v2645 = vrcp.pop %v2643
    %v2646 = vmul.f32 1.0, %v2645
    %v2647 = vrcp.pop %v2644
    %v2648 = vmul.f32 1.0, %v2647
    %v2649 = vtanh.pop %v2636
    %v2651 = vrot.slane %v2547, 6
    %v2653 = vmul.f32 %v2646, %v2651
    %2655 = vrot.lane.b32.xlu0 %v2649, 64
    %v2656 = vpop.permute.xlu0 %2655
    %v2658 = vmul.f32 %v2646, %v2656
    %2660 = vrot.lane.b32.xlu0 %v2658, 64
    %v2661 = vpop.permute.xlu0 %2660
    %v2663 = vadd.f32 %v2653, %v2661
    %v2664 = vtanh.pop %v2663
    %2666 = vrot.lane.b32.xlu0 %v2664, 64
    %v2667 = vpop.permute.xlu0 %2666
    %v2669 = vmul.f32 %v2648, %v2667
    %v2671 = vrot.slane %v2669, 4
    %v2672 = vsel %vm757, %v2671, 0
    %2674 = vmatprep.subr.mxu0 0.0
    %2675 = vmatpush1.msra.mxu0 0.0
    %2676 = vmatprep.subr.mxu0 0.0
    %2677 = vmatpush1.msra.mxu0 0.0
    %2678 = vmatprep.subr.mxu0 0.0
    %2679 = vmatpush1.msra.mxu0 0.0
    %2680 = vmatprep.subr.mxu0 0.0
    %2681 = vmatpush1.msra.mxu0 0.0
    %2682 = vmatprep.subr.mxu0 0.0
    %2683 = vmatpush1.msra.mxu0 0.0
    %2684 = vmatprep.subr.mxu0 0.0
    %2685 = vmatpush1.msra.mxu0 0.0
    %2686 = vmatprep.subr.mxu0 0.0
    %2687 = vmatpush1.msra.mxu0 0.0
    %2688 = vmatprep.subr.mxu0 0.0
    %2689 = vmatpush1.msra.mxu0 0.0
    %2690 = vmatprep.subr.mxu0 %v1606
    %2691 = vmatpush1.msra.mxu0 %v1605
    %2692 = vmatprep.subr.mxu0 %v1604
    %2693 = vmatpush1.msra.mxu0 %v1603
    %2694 = vmatprep.subr.mxu0 %v1602
    %2695 = vmatpush1.msra.mxu0 %v1601
    %2696 = vmatprep.subr.mxu0 %v1600
    %2697 = vmatpush1.msra.mxu0 %v1599
    %2698 = vmatprep.subr.mxu0 %v1598
    %2699 = vmatpush1.msra.mxu0 %v1597
    %2700 = vmatprep.subr.mxu0 %v1596
    %2701 = vmatpush1.msra.mxu0 %v1595
    %2702 = vmatprep.subr.mxu0 %v1594
    %2703 = vmatpush1.msra.mxu0 %v1593
    %2704 = vmatprep.subr.mxu0 %v1592
    %2705 = vmatpush1.msra.mxu0 %v1591
    %2706 = vmatprep.subr.mxu0 0.0
    %2707 = vmatpush2.msra.mxu0 0.0
    %2708 = vmatprep.subr.mxu0 0.0
    %2709 = vmatpush2.msra.mxu0 0.0
    %2710 = vmatprep.subr.mxu0 0.0
    %2711 = vmatpush2.msra.mxu0 0.0
    %2712 = vmatprep.subr.mxu0 0.0
    %2713 = vmatpush2.msra.mxu0 0.0
    %2714 = vmatprep.subr.mxu0 0.0
    %2715 = vmatpush2.msra.mxu0 0.0
    %2716 = vmatprep.subr.mxu0 0.0
    %2717 = vmatpush2.msra.mxu0 0.0
    %2718 = vmatprep.subr.mxu0 0.0
    %2719 = vmatpush2.msra.mxu0 0.0
    %2720 = vmatprep.subr.mxu0 0.0
    %2721 = vmatpush2.msra.mxu0 0.0
    %2722 = vmatprep.subr.mxu0 0.0
    %2723 = vmatpush2.msra.mxu0 0.0
    %2724 = vmatprep.subr.mxu0 0.0
    %2725 = vmatpush2.msra.mxu0 0.0
    %2726 = vmatprep.subr.mxu0 0.0
    %2727 = vmatpush2.msra.mxu0 0.0
    %2728 = vmatprep.subr.mxu0 0.0
    %2729 = vmatpush2.msra.mxu0 0.0
    %2730 = vmatprep.subr.mxu0 0.0
    %2731 = vmatpush2.msra.mxu0 0.0
    %2732 = vmatprep.subr.mxu0 0.0
    %2733 = vmatpush2.msra.mxu0 0.0
    %2734 = vmatprep.subr.mxu0 0.0
    %2735 = vmatpush2.msra.mxu0 0.0
    %2736 = vmatprep.subr.mxu0 0.0
    %2737 = vmatpush2.msra.mxu0 0.0
    %2738 = vmatprep.mubr.f32.mxu0 0.0
    %2739 = vmatmul.mubr.f32.gmra.mxu0 %v2672
    %v2740 = vpop.f32.mrf.mxu0
    %v2741 = vadd.f32 0.0, %v2740
    %v2742 = vpop.f32.mrf.mxu0
    %v2743 = vadd.f32 0.0, %v2742
    %2744 = vdwg.mxu0
    %v2747 = vrot.slane %v2741, 2
    %v2748 = vrot.slane %v2743, 2
    %v2751 = vadd.f32 %v1872, %v2747
    %v2752 = vadd.f32 %v1874, %v2748
    %v2753 = vxor.u32 %v2751, 2147483648
    %v2754 = vxor.u32 %v2752, 2147483648
    %v2755 = vmul.f32 %v2753, 1.442695
    %v2756 = vpow.pop %v2755
    %v2757 = vmul.f32 %v2754, 1.442695
    %v2758 = vpow.pop %v2757
    %v2759 = vadd.f32 %v2756, 1.0
    %v2760 = vadd.f32 %v2758, 1.0
    %v2761 = vrcp.pop %v2759
    %v2762 = vmul.f32 1.0, %v2761
    %v2763 = vrcp.pop %v2760
    %v2764 = vmul.f32 1.0, %v2763
    %v2765 = vtanh.pop %v2752
    %v2767 = vrot.slane %v2663, 6
    %v2769 = vmul.f32 %v2762, %v2767
    %2771 = vrot.lane.b32.xlu0 %v2765, 64
    %v2772 = vpop.permute.xlu0 %2771
    %v2774 = vmul.f32 %v2762, %v2772
    %2776 = vrot.lane.b32.xlu0 %v2774, 64
    %v2777 = vpop.permute.xlu0 %2776
    %v2779 = vadd.f32 %v2769, %v2777
    %v2780 = vtanh.pop %v2779
    %2782 = vrot.lane.b32.xlu0 %v2780, 64
    %v2783 = vpop.permute.xlu0 %2782
    %v2785 = vmul.f32 %v2764, %v2783
    %v2786 = vld [vmem:[#allocation6 + $0x80] sm:$0xff]
    %v2787 = vld [vmem:[#allocation6 + $0x88] sm:$0xff]
    %v2788 = vld [vmem:[#allocation6 + $0x90] sm:$0xff]
    %v2789 = vld [vmem:[#allocation6 + $0x98] sm:$0xff]
    %v2790 = vld [vmem:[#allocation6 + $0xa0] sm:$0xff]
    %v2791 = vld [vmem:[#allocation6 + $0xa8] sm:$0xff]
    %v2792 = vld [vmem:[#allocation6 + $0xb0] sm:$0xff]
    %v2793 = vld [vmem:[#allocation6 + $0xb8] sm:$0xff]
    %v2794 = vld [vmem:[#allocation6 + $0xc0] sm:$0x1]
    %v2796 = vrot.slane %v2785, 6
    %vm2798 = vcmask 1041408
    %v2799 = vsel %vm2798, %v2796, 0.0
    %v2800 = vlaneseq
    %v2801 = vshrl.u32 %v2800, 7
    %v2802 = vsub.s32 0, %v2801
    %v2803 = vrot.slane %v2794, %v2802
    %v2805 = vsel %vm757, %v2799, 0
    %2807 = vmatprep.subr.mxu0 0.0
    %2808 = vmatpush1.msra.mxu0 0.0
    %2809 = vmatprep.subr.mxu0 0.0
    %2810 = vmatpush1.msra.mxu0 0.0
    %2811 = vmatprep.subr.mxu0 0.0
    %2812 = vmatpush1.msra.mxu0 0.0
    %2813 = vmatprep.subr.mxu0 0.0
    %2814 = vmatpush1.msra.mxu0 0.0
    %2815 = vmatprep.subr.mxu0 0.0
    %2816 = vmatpush1.msra.mxu0 0.0
    %2817 = vmatprep.subr.mxu0 0.0
    %2818 = vmatpush1.msra.mxu0 0.0
    %2819 = vmatprep.subr.mxu0 0.0
    %2820 = vmatpush1.msra.mxu0 0.0
    %2821 = vmatprep.subr.mxu0 0.0
    %2822 = vmatpush1.msra.mxu0 0.0
    %2823 = vmatprep.subr.mxu0 0.0
    %2824 = vmatpush1.msra.mxu0 %v2793
    %2825 = vmatprep.subr.mxu0 0.0
    %2826 = vmatpush1.msra.mxu0 %v2792
    %2827 = vmatprep.subr.mxu0 0.0
    %2828 = vmatpush1.msra.mxu0 %v2791
    %2829 = vmatprep.subr.mxu0 0.0
    %2830 = vmatpush1.msra.mxu0 %v2790
    %2831 = vmatprep.subr.mxu0 0.0
    %2832 = vmatpush1.msra.mxu0 %v2789
    %2833 = vmatprep.subr.mxu0 0.0
    %2834 = vmatpush1.msra.mxu0 %v2788
    %2835 = vmatprep.subr.mxu0 0.0
    %2836 = vmatpush1.msra.mxu0 %v2787
    %2837 = vmatprep.subr.mxu0 0.0
    %2838 = vmatpush1.msra.mxu0 %v2786
    %2839 = vmatprep.subr.mxu0 0.0
    %2840 = vmatpush2.msra.mxu0 0.0
    %2841 = vmatprep.subr.mxu0 0.0
    %2842 = vmatpush2.msra.mxu0 0.0
    %2843 = vmatprep.subr.mxu0 0.0
    %2844 = vmatpush2.msra.mxu0 0.0
    %2845 = vmatprep.subr.mxu0 0.0
    %2846 = vmatpush2.msra.mxu0 0.0
    %2847 = vmatprep.subr.mxu0 0.0
    %2848 = vmatpush2.msra.mxu0 0.0
    %2849 = vmatprep.subr.mxu0 0.0
    %2850 = vmatpush2.msra.mxu0 0.0
    %2851 = vmatprep.subr.mxu0 0.0
    %2852 = vmatpush2.msra.mxu0 0.0
    %2853 = vmatprep.subr.mxu0 0.0
    %2854 = vmatpush2.msra.mxu0 0.0
    %2855 = vmatprep.subr.mxu0 0.0
    %2856 = vmatpush2.msra.mxu0 0.0
    %2857 = vmatprep.subr.mxu0 0.0
    %2858 = vmatpush2.msra.mxu0 0.0
    %2859 = vmatprep.subr.mxu0 0.0
    %2860 = vmatpush2.msra.mxu0 0.0
    %2861 = vmatprep.subr.mxu0 0.0
    %2862 = vmatpush2.msra.mxu0 0.0
    %2863 = vmatprep.subr.mxu0 0.0
    %2864 = vmatpush2.msra.mxu0 0.0
    %2865 = vmatprep.subr.mxu0 0.0
    %2866 = vmatpush2.msra.mxu0 0.0
    %2867 = vmatprep.subr.mxu0 0.0
    %2868 = vmatpush2.msra.mxu0 0.0
    %2869 = vmatprep.subr.mxu0 0.0
    %2870 = vmatpush2.msra.mxu0 0.0
    %2871 = vmatprep.mubr.f32.mxu0 0.0
    %2872 = vmatmul.mubr.f32.gmra.mxu0 %v2805
    %v2873 = vpop.f32.mrf.mxu0
    %v2874 = vadd.f32 %v2803, %v2873
    %v2875 = vpop.f32.mrf.mxu0
    %2876 = vdwg.mxu0
    %2877 = vst [vmem:[%s5] sm:$0xff] %v2874
    // Predicated region
    $region34: #{transformer_forward.1} parent=1 // pred_check
      _
    $region35: #{transformer_forward.1} parent=1 // pred_check_branch
      %2879 = sbr.rel (0) target = $region37
    $region36: #{transformer_forward.1} parent=1 // pred_region
      _
    $region37: #{transformer_forward.1} parent=1 // pred_fallthru
      _
    // Predicated region
    $region38: #{transformer_forward.1} parent=1 // pred_check
      _
    $region39: #{transformer_forward.1} parent=1 // pred_check_branch
      %2881 = sbr.rel (0) target = $region41
    $region40: #{transformer_forward.1} parent=1 // pred_region
      _
    $region41: #{transformer_forward.1} parent=1 // pred_fallthru
      _
    %2882 = vsyncpa [#allocation3], 1
    %2883 = vsyncpa [#allocation5], 1

</llo_original>
